<compile_context>
chip_gen: v6e
topology: v6e:2x2x1
jax: 0.10.0
libtpu: 0.0.40
codegen_flags: <defaults>
</compile_context>

<pallas_src>
import functools

import jax
import jax.numpy as jnp
import numpy as np
from jax.experimental import pallas as pl
from jax.experimental.pallas import tpu as pltpu

AGENT_DIM = 5
ENV_DIM = 8
OPP_DIM = 5
INT_DIM = 4
NUM_HEADS = 4
IN_SLOT = AGENT_DIM + ENV_DIM          # == OPP_DIM + ENV_DIM == 13
NEG_INF = -1e30                        # additive key-padding mask (exp -> exactly 0)


def _round_up(x, m):
    return ((x + m - 1) // m) * m


def _derive_dims(hidden_size, num_opp):
    H = hidden_size
    S = num_opp + 1
    nh = NUM_HEADS
    assert H % nh == 0, "hidden_size must be divisible by num_heads"
    E2 = H + INT_DIM
    assert E2 % nh == 0, "hidden_size + intention_dim must be divisible by num_heads"
    d1 = H // nh
    d2 = E2 // nh
    hd2p = _round_up(d2, 8)            # padded per-head width for attention 2
    E2p = nh * hd2p                    # padded per-token K/V width for attention 2

    def _stride(per_key):
        # lane stride between softmax-group members; prefer a full 128-lane row
        if 128 % S == 0 and (128 // S) >= per_key:
            return 128 // S
        return per_key

    gs1 = _stride(S * nh)              # att-1 score lane = j*gs1 + i*nh + h
    gs2 = _stride(nh)                  # att-2 score lane = j*gs2 + h
    return dict(H=H, S=S, nh=nh, d1=d1, E2=E2, d2=d2, hd2p=hd2p, E2p=E2p,
                gs1=gs1, gs2=gs2, sc1=S * gs1, sc2=S * gs2,
                R1=S * S * H, R2=S * E2p, out_w=_round_up(H + 1, 128))


# --------------------------------------------------------------------------
# Fused forward kernel (all activations (rows, lanes); batch = MXU M dim)
# --------------------------------------------------------------------------
def _fused_forward_kernel(
    x_ref, int_ref, mask_ref,
    w_enc1, b_enc1, w_enc2, b_enc2,
    w_qkv, b_qkv, seg1, pexp1, w_o1, b_o1, mexp1,
    w_q2, b_q2, w_kv2s, w_kv2i, b_kv2, seg2, pexp2, mexp2,
    w_ac1, b_ac1, w_ac2, b_ac2, w_out, b_out,
    out_ref,
    *, S, gs1, gs2, R1, R2,
):
    f32 = jnp.float32

    def mm(a, b):
        return jnp.dot(a, b, preferred_element_type=f32)

    def grouped_softmax(s, stride):
        # softmax over the S keys of each group; group members sit at lane
        # stride `stride`, so the reduction is S-1 cyclic lane rolls (XLU slot).
        m = s
        for t in range(1, S):
            m = jnp.maximum(m, pltpu.roll(s, t * stride, axis=1))
        p = jnp.exp(s - m)
        den = p
        for t in range(1, S):
            den = den + pltpu.roll(p, t * stride, axis=1)
        # approx reciprocal (EUP slot): probabilities sum to 1 +/- ~2^-12.
        return p * pl.reciprocal(den, approx=True)

    # ---- agent/opponent encoders: fused block-diagonal per-slot MLPs --------
    hid = jnp.tanh(mm(x_ref[...], w_enc1[...]) + b_enc1[...])
    tokens = jnp.tanh(mm(hid, w_enc2[...]) + b_enc2[...])            # (rows, S*H)

    # key-padding mask expanded to the two score-lane layouts via 0/1 matmuls
    mask = mask_ref[...]                                             # (rows, S)
    mask1 = mm(mask, mexp1[...])                                     # (rows, sc1)
    mask2 = mm(mask, mexp2[...])                                     # (rows, sc2)

    # ---- attention 1: self-attention over the S tokens ----------------------
    qkv = mm(tokens, w_qkv[...]) + b_qkv[...]                        # (rows, 3*R1)
    qrep = qkv[:, :R1]                 # q_i replicated over key slots j (scaled)
    krep = qkv[:, R1:2 * R1]           # k_j replicated over query slots i
    vrep = qkv[:, 2 * R1:]             # v_j replicated over query slots i
    s1 = mm(qrep * krep, seg1[...]) + mask1                          # (rows, sc1)
    p1 = grouped_softmax(s1, gs1)
    ctx1 = mm(p1, pexp1[...]) * vrep                                 # (rows, R1)
    social = mm(ctx1, w_o1[...]) + b_o1[...] + tokens                # (rows, S*H)

    # ---- attention 2: agent query vs (social + intention) keys --------------
    q2 = mm(tokens, w_q2[...]) + b_q2[...]                           # (rows, R2)
    kv2 = mm(social, w_kv2s[...]) + mm(int_ref[...], w_kv2i[...]) + b_kv2[...]
    k2 = kv2[:, :R2]
    v2 = kv2[:, R2:]
    s2 = mm(q2 * k2, seg2[...]) + mask2                              # (rows, sc2)
    p2 = grouped_softmax(s2, gs2)
    ctx2 = mm(p2, pexp2[...]) * v2                                   # (rows, R2)

    # ---- heads: attn-2 out_proj folded into fused actor/critic layer 1,
    # block-diagonal layer 2, critic_linear folded into a lane-dense out slab.
    h1 = jnp.tanh(mm(ctx2, w_ac1[...]) + b_ac1[...])                 # (rows, 2H)
    h2 = jnp.tanh(mm(h1, w_ac2[...]) + b_ac2[...])                   # (rows, 2H)
    out_ref[...] = mm(h2, w_out[...]) + b_out[...]                   # (rows, out_w)


# --------------------------------------------------------------------------
# Raw (torch-layout) synthetic parameters, and their packed/replicated forms
# --------------------------------------------------------------------------
def _lin(key, din, dout):
    kw, kb = jax.random.split(key)
    w = jax.random.normal(kw, (din, dout), jnp.float32) / np.sqrt(din)
    # The PyTorch init_ zeroes biases; random here so the self-check exercises
    # every packed bias term as well.
    b = 0.1 * jax.random.normal(kb, (dout,), jnp.float32)
    return w, b


def init_raw_params(key, hidden_size):
    H = hidden_size
    E2 = H + INT_DIM
    keys = iter(jax.random.split(key, 32))
    p = {}
    p["a_w1"], p["a_b1"] = _lin(next(keys), IN_SLOT, H)
    p["a_w2"], p["a_b2"] = _lin(next(keys), H, H)
    p["o_w1"], p["o_b1"] = _lin(next(keys), IN_SLOT, H)
    p["o_w2"], p["o_b2"] = _lin(next(keys), H, H)
    for name, E in (("at1", H), ("at2", E2)):
        p[name + "_wq"], p[name + "_bq"] = _lin(next(keys), E, E)
        p[name + "_wk"], p[name + "_bk"] = _lin(next(keys), E, E)
        p[name + "_wv"], p[name + "_bv"] = _lin(next(keys), E, E)
        p[name + "_wo"], p[name + "_bo"] = _lin(next(keys), E, E)
    p["act_w1"], p["act_b1"] = _lin(next(keys), E2, H)
    p["act_w2"], p["act_b2"] = _lin(next(keys), H, H)
    p["cri_w1"], p["cri_b1"] = _lin(next(keys), E2, H)
    p["cri_w2"], p["cri_b2"] = _lin(next(keys), H, H)
    p["cl_w"], p["cl_b"] = _lin(next(keys), H, 1)
    return p


PACK_ORDER = (
    "w_enc1", "b_enc1", "w_enc2", "b_enc2",
    "w_qkv", "b_qkv", "seg1", "pexp1", "w_o1", "b_o1", "mexp1",
    "w_q2", "b_q2", "w_kv2s", "w_kv2i", "b_kv2", "seg2", "pexp2", "mexp2",
    "w_ac1", "b_ac1", "w_ac2", "b_ac2", "w_out", "b_out",
)


def pack_params(raw, hidden_size, num_opp):
    dims = _derive_dims(hidden_size, num_opp)
    H, S, nh, d1 = dims["H"], dims["S"], dims["nh"], dims["d1"]
    E2, d2, hd2p, E2p = dims["E2"], dims["d2"], dims["hd2p"], dims["E2p"]
    gs1, gs2, R1, R2 = dims["gs1"], dims["gs2"], dims["R1"], dims["R2"]
    sc1, sc2, out_w = dims["sc1"], dims["sc2"], dims["out_w"]
    r = {k: np.asarray(v, np.float32) for k, v in raw.items()}

    def row(b):
        return np.asarray(b, np.float32).reshape(1, -1)

    # ---- encoders: block-diagonal over token slots (slot 0 = agent) ----------
    w_enc1 = np.zeros((S * IN_SLOT, S * H), np.float32)
    b_enc1 = np.zeros((1, S * H), np.float32)
    w_enc2 = np.zeros((S * H, S * H), np.float32)
    b_enc2 = np.zeros((1, S * H), np.float32)
    for t in range(S):
        if t == 0:
            w1, b1, w2, b2 = r["a_w1"], r["a_b1"], r["a_w2"], r["a_b2"]
        else:
            w1, b1, w2, b2 = r["o_w1"], r["o_b1"], r["o_w2"], r["o_b2"]
        w_enc1[t * IN_SLOT:(t + 1) * IN_SLOT, t * H:(t + 1) * H] = w1
        b_enc1[0, t * H:(t + 1) * H] = b1
        w_enc2[t * H:(t + 1) * H, t * H:(t + 1) * H] = w2
        b_enc2[0, t * H:(t + 1) * H] = b2

    # ---- attention 1: replicated QKV (scale folded into Q), segment matrices -
    scale1 = 1.0 / np.sqrt(d1)
    wq1, wk1, wv1 = r["at1_wq"] * scale1, r["at1_wk"], r["at1_wv"]
    bq1, bk1, bv1 = r["at1_bq"] * scale1, r["at1_bk"], r["at1_bv"]
    w_qkv = np.zeros((S * H, 3 * R1), np.float32)
    b_qkv = np.zeros((1, 3 * R1), np.float32)
    for i in range(S):
        for j in range(S):
            pr = i * S + j
            w_qkv[i * H:(i + 1) * H, pr * H:(pr + 1) * H] = wq1
            w_qkv[j * H:(j + 1) * H, R1 + pr * H:R1 + (pr + 1) * H] = wk1
            w_qkv[j * H:(j + 1) * H, 2 * R1 + pr * H:2 * R1 + (pr + 1) * H] = wv1
            b_qkv[0, pr * H:(pr + 1) * H] = bq1
            b_qkv[0, R1 + pr * H:R1 + (pr + 1) * H] = bk1
            b_qkv[0, 2 * R1 + pr * H:2 * R1 + (pr + 1) * H] = bv1

    seg1 = np.zeros((R1, sc1), np.float32)
    pexp1 = np.zeros((sc1, R1), np.float32)
    for i in range(S):
        for j in range(S):
            pr = i * S + j
            for h in range(nh):
                col = j * gs1 + i * nh + h
                seg1[pr * H + h * d1:pr * H + (h + 1) * d1, col] = 1.0
                pexp1[col, pr * H + h * d1:pr * H + (h + 1) * d1] = 1.0

    w_o1 = np.zeros((R1, S * H), np.float32)
    for i in range(S):
        for j in range(S):
            pr = i * S + j
            w_o1[pr * H:(pr + 1) * H, i * H:(i + 1) * H] = r["at1_wo"]
    b_o1 = np.tile(row(r["at1_bo"]), (1, S))

    mexp1 = np.zeros((S, sc1), np.float32)
    for j in range(S):
        mexp1[j, j * gs1:j * gs1 + S * nh] = 1.0

    # ---- attention 2: padded per-head layout, Q from agent token only --------
    scale2 = 1.0 / np.sqrt(d2)
    p2pad = np.zeros((E2, E2p), np.float32)          # real dim -> padded head dim
    for h in range(nh):
        for e in range(d2):
            p2pad[h * d2 + e, h * hd2p + e] = 1.0

    wq2p = (r["at2_wq"][:H, :] * scale2) @ p2pad
    bq2p = (row(r["at2_bq"]) * scale2) @ p2pad
    wk2sp = r["at2_wk"][:H, :] @ p2pad
    wk2ip = r["at2_wk"][H:, :] @ p2pad
    wv2sp = r["at2_wv"][:H, :] @ p2pad
    wv2ip = r["at2_wv"][H:, :] @ p2pad
    bk2p = row(r["at2_bk"]) @ p2pad
    bv2p = row(r["at2_bv"]) @ p2pad

    w_q2 = np.zeros((S * H, R2), np.float32)
    b_q2 = np.zeros((1, R2), np.float32)
    w_kv2s = np.zeros((S * H, 2 * R2), np.float32)
    w_kv2i = np.zeros((S * INT_DIM, 2 * R2), np.float32)
    b_kv2 = np.zeros((1, 2 * R2), np.float32)
    for j in range(S):
        w_q2[0:H, j * E2p:(j + 1) * E2p] = wq2p
        b_q2[0, j * E2p:(j + 1) * E2p] = bq2p
        w_kv2s[j * H:(j + 1) * H, j * E2p:(j + 1) * E2p] = wk2sp
        w_kv2s[j * H:(j + 1) * H, R2 + j * E2p:R2 + (j + 1) * E2p] = wv2sp
        w_kv2i[j * INT_DIM:(j + 1) * INT_DIM, j * E2p:(j + 1) * E2p] = wk2ip
        w_kv2i[j * INT_DIM:(j + 1) * INT_DIM, R2 + j * E2p:R2 + (j + 1) * E2p] = wv2ip
        b_kv2[0, j * E2p:(j + 1) * E2p] = bk2p
        b_kv2[0, R2 + j * E2p:R2 + (j + 1) * E2p] = bv2p

    seg2 = np.zeros((R2, sc2), np.float32)
    pexp2 = np.zeros((sc2, R2), np.float32)
    mexp2 = np.zeros((S, sc2), np.float32)
    for j in range(S):
        mexp2[j, j * gs2:j * gs2 + nh] = 1.0
        for h in range(nh):
            col = j * gs2 + h
            seg2[j * E2p + h * hd2p:j * E2p + h * hd2p + d2, col] = 1.0
            pexp2[col, j * E2p + h * hd2p:j * E2p + (h + 1) * hd2p] = 1.0

    # attn-2 out_proj folded into the fused actor/critic first layer
    wo2_rep = np.zeros((R2, E2), np.float32)
    for j in range(S):
        for h in range(nh):
            wo2_rep[j * E2p + h * hd2p:j * E2p + h * hd2p + d2, :] = \
                r["at2_wo"][h * d2:(h + 1) * d2, :]
    wac1_cat = np.concatenate([r["act_w1"], r["cri_w1"]], axis=1)        # (E2, 2H)
    bac1_cat = np.concatenate([row(r["act_b1"]), row(r["cri_b1"])], axis=1)
    w_ac1 = wo2_rep @ wac1_cat                                           # (R2, 2H)
    b_ac1 = row(r["at2_bo"]) @ wac1_cat + bac1_cat                       # (1, 2H)

    w_ac2 = np.zeros((2 * H, 2 * H), np.float32)
    w_ac2[:H, :H] = r["act_w2"]
    w_ac2[H:, H:] = r["cri_w2"]
    b_ac2 = np.concatenate([row(r["act_b2"]), row(r["cri_b2"])], axis=1)

    # lane-dense output slab: actor lanes [0,H), value lane H (critic_linear)
    w_out = np.zeros((2 * H, out_w), np.float32)
    w_out[:H, :H] = np.eye(H, dtype=np.float32)
    w_out[H:, H] = r["cl_w"][:, 0]
    b_out = np.zeros((1, out_w), np.float32)
    b_out[0, H] = r["cl_b"][0]

    packed_np = dict(
        w_enc1=w_enc1, b_enc1=b_enc1, w_enc2=w_enc2, b_enc2=b_enc2,
        w_qkv=w_qkv, b_qkv=b_qkv, seg1=seg1, pexp1=pexp1, w_o1=w_o1, b_o1=b_o1,
        mexp1=mexp1, w_q2=w_q2, b_q2=b_q2, w_kv2s=w_kv2s, w_kv2i=w_kv2i,
        b_kv2=b_kv2, seg2=seg2, pexp2=pexp2, mexp2=mexp2,
        w_ac1=w_ac1, b_ac1=b_ac1, w_ac2=w_ac2, b_ac2=b_ac2,
        w_out=w_out, b_out=b_out)
    packed = {k: jnp.asarray(v) for k, v in packed_np.items()}
    return packed, dims


# --------------------------------------------------------------------------
# Forward pass: thin JAX glue (lane-major input assembly) + one pallas_call
# --------------------------------------------------------------------------
def mhead_attn_forward(packed, dims, inputs, rnn_hxs, masks, *, block_rows=256):
    del masks  # recurrent=False -> env-reset masks unused; rnn_hxs passed through
    # TODO(synk): recurrent GRU path (NNBase._forward_gru) and the
    # num_opponents == 0 branch are not implemented (never taken with defaults).
    H, S, out_w = dims["H"], dims["S"], dims["out_w"]
    no = S - 1
    B = inputs.shape[0]

    bt = _round_up(min(block_rows, _round_up(B, 8)), 8)     # batch row block
    b_pad = _round_up(B, bt)
    x = jnp.pad(inputs.astype(jnp.float32), ((0, b_pad - B), (0, 0)))

    agent_env = x[:, :IN_SLOT]
    env = x[:, AGENT_DIM:AGENT_DIM + ENV_DIM]
    opp = x[:, IN_SLOT:].reshape(b_pad, no, OPP_DIM + INT_DIM + 1)

    slot_feats = [agent_env] + [
        jnp.concatenate([opp[:, j, :OPP_DIM], env], axis=-1) for j in range(no)]
    x_in = jnp.concatenate(slot_feats, axis=-1)                      # (Bp, S*13)
    all_int = jnp.concatenate(
        [jnp.zeros((b_pad, INT_DIM), jnp.float32)]
        + [opp[:, j, OPP_DIM:OPP_DIM + INT_DIM] for j in range(no)], axis=-1)
    active = jnp.concatenate(
        [jnp.ones((b_pad, 1), jnp.float32), opp[:, :, -1]], axis=-1)  # (Bp, S)
    mask_bias = jnp.where((1.0 - active) != 0.0,
                          jnp.float32(NEG_INF), jnp.float32(0.0))

    data = (x_in, all_int, mask_bias)
    weights = tuple(packed[k] for k in PACK_ORDER)

    data_specs = [pl.BlockSpec((bt, a.shape[1]), lambda i: (i, 0)) for a in data]
    weight_specs = [pl.BlockSpec(w.shape, lambda i: (0, 0)) for w in weights]

    kernel = functools.partial(
        _fused_forward_kernel,
        S=S, gs1=dims["gs1"], gs2=dims["gs2"], R1=dims["R1"], R2=dims["R2"])

    out = pl.pallas_call(
        kernel,
        grid=(b_pad // bt,),
        in_specs=data_specs + weight_specs,
        out_specs=pl.BlockSpec((bt, out_w), lambda i: (i, 0)),
        out_shape=jax.ShapeDtypeStruct((b_pad, out_w), jnp.float32),
        compiler_params=pltpu.CompilerParams(
            dimension_semantics=("parallel",),
            vmem_limit_bytes=48 * 1024 * 1024),
    )(*data, *weights)

    hidden_actor = out[:B, :H]
    value = out[:B, H:H + 1]
    return value, hidden_actor, rnn_hxs


# --------------------------------------------------------------------------
# Pure-JAX reference (mirrors the PyTorch forward) for the self-check
# --------------------------------------------------------------------------
def reference_forward(raw, inputs, hidden_size, num_opp):
    H, nh = hidden_size, NUM_HEADS
    B = inputs.shape[0]
    x = inputs.astype(jnp.float32)

    def mlp(z, w1, b1, w2, b2):
        return jnp.tanh(jnp.tanh(z @ w1 + b1) @ w2 + b2)

    agent_env = x[:, :IN_SLOT]
    env = x[:, AGENT_DIM:AGENT_DIM + ENV_DIM]
    opp = x[:, IN_SLOT:].reshape(B, num_opp, OPP_DIM + INT_DIM + 1)
    agent_enc = mlp(agent_env, raw["a_w1"], raw["a_b1"], raw["a_w2"], raw["a_b2"])
    opp_in = jnp.concatenate(
        [opp[:, :, :OPP_DIM],
         jnp.broadcast_to(env[:, None, :], (B, num_opp, ENV_DIM))], axis=-1)
    opp_enc = mlp(opp_in, raw["o_w1"], raw["o_b1"], raw["o_w2"], raw["o_b2"])
    tokens = jnp.concatenate([agent_enc[:, None, :], opp_enc], axis=1)

    active = jnp.concatenate([jnp.ones((B, 1), jnp.float32), opp[:, :, -1]], axis=-1)
    mask_bias = jnp.where((1.0 - active) != 0.0, NEG_INF, 0.0)

    def mha(q, k, v, prefix):
        E = q.shape[-1]
        dh = E // nh
        lq, lk = q.shape[1], k.shape[1]
        qq = (q @ raw[prefix + "_wq"] + raw[prefix + "_bq"]) / jnp.sqrt(jnp.float32(dh))
        kk = k @ raw[prefix + "_wk"] + raw[prefix + "_bk"]
        vv = v @ raw[prefix + "_wv"] + raw[prefix + "_bv"]
        qq = qq.reshape(B, lq, nh, dh)
        kk = kk.reshape(B, lk, nh, dh)
        vv = vv.reshape(B, lk, nh, dh)
        s = jnp.einsum("bqhd,bkhd->bhqk", qq, kk) + mask_bias[:, None, None, :]
        p = jax.nn.softmax(s, axis=-1)
        o = jnp.einsum("bhqk,bkhd->bqhd", p, vv).reshape(B, lq, E)
        return o @ raw[prefix + "_wo"] + raw[prefix + "_bo"]

    social = mha(tokens, tokens, tokens, "at1") + tokens
    all_int = jnp.concatenate(
        [jnp.zeros((B, 1, INT_DIM), jnp.float32),
         opp[:, :, OPP_DIM:OPP_DIM + INT_DIM]], axis=1)
    si = jnp.concatenate([social, all_int], axis=-1)
    q2 = jnp.concatenate([agent_enc, jnp.zeros((B, INT_DIM), jnp.float32)],
                         axis=-1)[:, None, :]
    x2 = mha(q2, si, si, "at2")[:, 0]

    hidden_actor = mlp(x2, raw["act_w1"], raw["act_b1"], raw["act_w2"], raw["act_b2"])
    hidden_critic = mlp(x2, raw["cri_w1"], raw["cri_b1"], raw["cri_w2"], raw["cri_b2"])
    value = hidden_critic @ raw["cl_w"] + raw["cl_b"]
    return value, hidden_actor


# --------------------------------------------------------------------------
if __name__ == "__main__":
    hidden_size = 32          # H and H+4 both divisible by num_heads=4
    num_opp = 3
    num_inputs = AGENT_DIM + ENV_DIM + num_opp * (OPP_DIM + INT_DIM + 1)  # 43
    batch = 4

    key = jax.random.PRNGKey(0)
    k_in, k_act, k_par = jax.random.split(key, 3)

    inputs = jax.random.normal(k_in, (batch, num_inputs), jnp.float32)
    # make the per-opponent "active" flag an exact 0/1 value
    active = (jax.random.uniform(k_act, (batch, num_opp)) > 0.3).astype(jnp.float32)
    flag_idx = (AGENT_DIM + ENV_DIM
                + jnp.arange(num_opp) * (OPP_DIM + INT_DIM + 1)
                + (OPP_DIM + INT_DIM))
    inputs = inputs.at[:, flag_idx].set(active)

    raw = init_raw_params(k_par, hidden_size)
    packed, dims = pack_params(raw, hidden_size, num_opp)

    rnn_hxs = jnp.zeros((batch, 1), jnp.float32)   # not recurrent -> size 1
    masks = jnp.ones((batch, 1), jnp.float32)

    fwd = jax.jit(functools.partial(mhead_attn_forward, packed, dims))
    value, hidden_actor, rnn_hxs_out = fwd(inputs, rnn_hxs, masks)
    jax.block_until_ready((value, hidden_actor, rnn_hxs_out))

    assert value.shape == (batch, 1)
    assert hidden_actor.shape == (batch, hidden_size)
    assert rnn_hxs_out.shape == rnn_hxs.shape

    # self-check vs a pure-JAX reference (loose tol: approx-reciprocal softmax)
    with jax.default_matmul_precision("highest"):
        ref_value, ref_actor = reference_forward(raw, inputs, hidden_size, num_opp)
        ref_value, ref_actor = jax.block_until_ready((ref_value, ref_actor))
    assert bool(jnp.allclose(value, ref_value, atol=1e-2, rtol=1e-2))
    assert bool(jnp.allclose(hidden_actor, ref_actor, atol=1e-2, rtol=1e-2))

    print("KERNEL_OK")
</pallas_src>

<mosaic_0001>
module attributes {stable_mosaic.version = 11 : i64} {
  func.func @_fused_forward_kernel(%arg0: i32, %arg1: memref<8x52xf32, #tpu.memory_space<vmem>>, %arg2: memref<8x16xf32, #tpu.memory_space<vmem>>, %arg3: memref<8x4xf32, #tpu.memory_space<vmem>>, %arg4: memref<52x128xf32, #tpu.memory_space<vmem>>, %arg5: memref<1x128xf32, #tpu.memory_space<vmem>>, %arg6: memref<128x128xf32, #tpu.memory_space<vmem>>, %arg7: memref<1x128xf32, #tpu.memory_space<vmem>>, %arg8: memref<128x1536xf32, #tpu.memory_space<vmem>>, %arg9: memref<1x1536xf32, #tpu.memory_space<vmem>>, %arg10: memref<512x128xf32, #tpu.memory_space<vmem>>, %arg11: memref<128x512xf32, #tpu.memory_space<vmem>>, %arg12: memref<512x128xf32, #tpu.memory_space<vmem>>, %arg13: memref<1x128xf32, #tpu.memory_space<vmem>>, %arg14: memref<4x128xf32, #tpu.memory_space<vmem>>, %arg15: memref<128x256xf32, #tpu.memory_space<vmem>>, %arg16: memref<1x256xf32, #tpu.memory_space<vmem>>, %arg17: memref<128x512xf32, #tpu.memory_space<vmem>>, %arg18: memref<16x512xf32, #tpu.memory_space<vmem>>, %arg19: memref<1x512xf32, #tpu.memory_space<vmem>>, %arg20: memref<256x128xf32, #tpu.memory_space<vmem>>, %arg21: memref<128x256xf32, #tpu.memory_space<vmem>>, %arg22: memref<4x128xf32, #tpu.memory_space<vmem>>, %arg23: memref<256x64xf32, #tpu.memory_space<vmem>>, %arg24: memref<1x64xf32, #tpu.memory_space<vmem>>, %arg25: memref<64x64xf32, #tpu.memory_space<vmem>>, %arg26: memref<1x64xf32, #tpu.memory_space<vmem>>, %arg27: memref<64x128xf32, #tpu.memory_space<vmem>>, %arg28: memref<1x128xf32, #tpu.memory_space<vmem>>, %arg29: memref<8x128xf32, #tpu.memory_space<vmem>>) attributes {dimension_semantics = [#tpu.dimension_semantics<parallel>], iteration_bounds = array<i64: 1>, scalar_prefetch = 0 : i64, scratch_operands = 0 : i64, tpu.core_type = #tpu.core_type<tc>, window_params = [{transform_indices = @transform_0, window_bounds = array<i64: 8, 52>}, {transform_indices = @transform_1, window_bounds = array<i64: 8, 16>}, {transform_indices = @transform_2, window_bounds = array<i64: 8, 4>}, {pipeline_mode = #tpu.pipeline_mode<synchronous>, transform_indices = @transform_3, window_bounds = array<i64: 52, 128>}, {pipeline_mode = #tpu.pipeline_mode<synchronous>, transform_indices = @transform_4, window_bounds = array<i64: 1, 128>}, {pipeline_mode = #tpu.pipeline_mode<synchronous>, transform_indices = @transform_5, window_bounds = array<i64: 128, 128>}, {pipeline_mode = #tpu.pipeline_mode<synchronous>, transform_indices = @transform_6, window_bounds = array<i64: 1, 128>}, {pipeline_mode = #tpu.pipeline_mode<synchronous>, transform_indices = @transform_7, window_bounds = array<i64: 128, 1536>}, {pipeline_mode = #tpu.pipeline_mode<synchronous>, transform_indices = @transform_8, window_bounds = array<i64: 1, 1536>}, {pipeline_mode = #tpu.pipeline_mode<synchronous>, transform_indices = @transform_9, window_bounds = array<i64: 512, 128>}, {pipeline_mode = #tpu.pipeline_mode<synchronous>, transform_indices = @transform_10, window_bounds = array<i64: 128, 512>}, {pipeline_mode = #tpu.pipeline_mode<synchronous>, transform_indices = @transform_11, window_bounds = array<i64: 512, 128>}, {pipeline_mode = #tpu.pipeline_mode<synchronous>, transform_indices = @transform_12, window_bounds = array<i64: 1, 128>}, {pipeline_mode = #tpu.pipeline_mode<synchronous>, transform_indices = @transform_13, window_bounds = array<i64: 4, 128>}, {pipeline_mode = #tpu.pipeline_mode<synchronous>, transform_indices = @transform_14, window_bounds = array<i64: 128, 256>}, {pipeline_mode = #tpu.pipeline_mode<synchronous>, transform_indices = @transform_15, window_bounds = array<i64: 1, 256>}, {pipeline_mode = #tpu.pipeline_mode<synchronous>, transform_indices = @transform_16, window_bounds = array<i64: 128, 512>}, {pipeline_mode = #tpu.pipeline_mode<synchronous>, transform_indices = @transform_17, window_bounds = array<i64: 16, 512>}, {pipeline_mode = #tpu.pipeline_mode<synchronous>, transform_indices = @transform_18, window_bounds = array<i64: 1, 512>}, {pipeline_mode = #tpu.pipeline_mode<synchronous>, transform_indices = @transform_19, window_bounds = array<i64: 256, 128>}, {pipeline_mode = #tpu.pipeline_mode<synchronous>, transform_indices = @transform_20, window_bounds = array<i64: 128, 256>}, {pipeline_mode = #tpu.pipeline_mode<synchronous>, transform_indices = @transform_21, window_bounds = array<i64: 4, 128>}, {pipeline_mode = #tpu.pipeline_mode<synchronous>, transform_indices = @transform_22, window_bounds = array<i64: 256, 64>}, {pipeline_mode = #tpu.pipeline_mode<synchronous>, transform_indices = @transform_23, window_bounds = array<i64: 1, 64>}, {pipeline_mode = #tpu.pipeline_mode<synchronous>, transform_indices = @transform_24, window_bounds = array<i64: 64, 64>}, {pipeline_mode = #tpu.pipeline_mode<synchronous>, transform_indices = @transform_25, window_bounds = array<i64: 1, 64>}, {pipeline_mode = #tpu.pipeline_mode<synchronous>, transform_indices = @transform_26, window_bounds = array<i64: 64, 128>}, {pipeline_mode = #tpu.pipeline_mode<synchronous>, transform_indices = @transform_27, window_bounds = array<i64: 1, 128>}, {transform_indices = @transform_28, window_bounds = array<i64: 8, 128>}]} {
    %c0 = arith.constant 0 : index
    %c0_0 = arith.constant 0 : index
    %0 = vector.load %arg1[%c0, %c0_0] : memref<8x52xf32, #tpu.memory_space<vmem>>, vector<8x52xf32>
    %c0_1 = arith.constant 0 : index
    %c0_2 = arith.constant 0 : index
    %1 = vector.load %arg4[%c0_1, %c0_2] : memref<52x128xf32, #tpu.memory_space<vmem>>, vector<52x128xf32>
    %cst = arith.constant dense<0.000000e+00> : vector<8x128xf32>
    %2 = tpu.matmul %0, %1, %cst {dimension_numbers = #tpu.dot_dimension_numbers<[1], [0], [0], [1], [0, 0, 1, 1], [], []>} : vector<8x52xf32>, vector<52x128xf32>, vector<8x128xf32> -> vector<8x128xf32>
    %c0_3 = arith.constant 0 : index
    %c0_4 = arith.constant 0 : index
    %3 = vector.load %arg5[%c0_3, %c0_4] : memref<1x128xf32, #tpu.memory_space<vmem>>, vector<1x128xf32>
    %4 = vector.broadcast %3 : vector<1x128xf32> to vector<8x128xf32>
    %5 = arith.addf %2, %4 : vector<8x128xf32>
    %6 = math.tanh %5 : vector<8x128xf32>
    %c0_5 = arith.constant 0 : index
    %c0_6 = arith.constant 0 : index
    %7 = vector.load %arg6[%c0_5, %c0_6] : memref<128x128xf32, #tpu.memory_space<vmem>>, vector<128x128xf32>
    %cst_7 = arith.constant dense<0.000000e+00> : vector<8x128xf32>
    %8 = tpu.matmul %6, %7, %cst_7 {dimension_numbers = #tpu.dot_dimension_numbers<[1], [0], [0], [1], [0, 0, 1, 1], [], []>} : vector<8x128xf32>, vector<128x128xf32>, vector<8x128xf32> -> vector<8x128xf32>
    %c0_8 = arith.constant 0 : index
    %c0_9 = arith.constant 0 : index
    %9 = vector.load %arg7[%c0_8, %c0_9] : memref<1x128xf32, #tpu.memory_space<vmem>>, vector<1x128xf32>
    %10 = vector.broadcast %9 : vector<1x128xf32> to vector<8x128xf32>
    %11 = arith.addf %8, %10 : vector<8x128xf32>
    %12 = math.tanh %11 : vector<8x128xf32>
    %c0_10 = arith.constant 0 : index
    %c0_11 = arith.constant 0 : index
    %13 = vector.load %arg3[%c0_10, %c0_11] : memref<8x4xf32, #tpu.memory_space<vmem>>, vector<8x4xf32>
    %c0_12 = arith.constant 0 : index
    %c0_13 = arith.constant 0 : index
    %14 = vector.load %arg14[%c0_12, %c0_13] : memref<4x128xf32, #tpu.memory_space<vmem>>, vector<4x128xf32>
    %cst_14 = arith.constant dense<0.000000e+00> : vector<8x128xf32>
    %15 = tpu.matmul %13, %14, %cst_14 {dimension_numbers = #tpu.dot_dimension_numbers<[1], [0], [0], [1], [0, 0, 1, 1], [], []>} : vector<8x4xf32>, vector<4x128xf32>, vector<8x128xf32> -> vector<8x128xf32>
    %c0_15 = arith.constant 0 : index
    %c0_16 = arith.constant 0 : index
    %16 = vector.load %arg22[%c0_15, %c0_16] : memref<4x128xf32, #tpu.memory_space<vmem>>, vector<4x128xf32>
    %cst_17 = arith.constant dense<0.000000e+00> : vector<8x128xf32>
    %17 = tpu.matmul %13, %16, %cst_17 {dimension_numbers = #tpu.dot_dimension_numbers<[1], [0], [0], [1], [0, 0, 1, 1], [], []>} : vector<8x4xf32>, vector<4x128xf32>, vector<8x128xf32> -> vector<8x128xf32>
    %c0_18 = arith.constant 0 : index
    %c0_19 = arith.constant 0 : index
    %18 = vector.load %arg8[%c0_18, %c0_19] : memref<128x1536xf32, #tpu.memory_space<vmem>>, vector<128x1536xf32>
    %cst_20 = arith.constant dense<0.000000e+00> : vector<8x1536xf32>
    %19 = tpu.matmul %12, %18, %cst_20 {dimension_numbers = #tpu.dot_dimension_numbers<[1], [0], [0], [1], [0, 0, 1, 1], [], []>} : vector<8x128xf32>, vector<128x1536xf32>, vector<8x1536xf32> -> vector<8x1536xf32>
    %c0_21 = arith.constant 0 : index
    %c0_22 = arith.constant 0 : index
    %20 = vector.load %arg9[%c0_21, %c0_22] : memref<1x1536xf32, #tpu.memory_space<vmem>>, vector<1x1536xf32>
    %21 = vector.broadcast %20 : vector<1x1536xf32> to vector<8x1536xf32>
    %22 = arith.addf %19, %21 : vector<8x1536xf32>
    %23 = vector.extract_strided_slice %22 {offsets = [0, 0], sizes = [8, 512], strides = [1, 1]} : vector<8x1536xf32> to vector<8x512xf32>
    %24 = vector.extract_strided_slice %22 {offsets = [0, 512], sizes = [8, 512], strides = [1, 1]} : vector<8x1536xf32> to vector<8x512xf32>
    %25 = vector.extract_strided_slice %22 {offsets = [0, 1024], sizes = [8, 512], strides = [1, 1]} : vector<8x1536xf32> to vector<8x512xf32>
    %26 = arith.mulf %23, %24 : vector<8x512xf32>
    %c0_23 = arith.constant 0 : index
    %c0_24 = arith.constant 0 : index
    %27 = vector.load %arg10[%c0_23, %c0_24] : memref<512x128xf32, #tpu.memory_space<vmem>>, vector<512x128xf32>
    %cst_25 = arith.constant dense<0.000000e+00> : vector<8x128xf32>
    %28 = tpu.matmul %26, %27, %cst_25 {dimension_numbers = #tpu.dot_dimension_numbers<[1], [0], [0], [1], [0, 0, 1, 1], [], []>} : vector<8x512xf32>, vector<512x128xf32>, vector<8x128xf32> -> vector<8x128xf32>
    %29 = arith.addf %28, %15 : vector<8x128xf32>
    %c32_i32 = arith.constant 32 : i32
    %30 = tpu.dynamic_rotate %29 by %c32_i32 dim 1 : vector<8x128xf32>, i32 -> vector<8x128xf32>
    %31 = arith.maximumf %29, %30 : vector<8x128xf32>
    %c64_i32 = arith.constant 64 : i32
    %32 = tpu.dynamic_rotate %29 by %c64_i32 dim 1 : vector<8x128xf32>, i32 -> vector<8x128xf32>
    %33 = arith.maximumf %31, %32 : vector<8x128xf32>
    %c96_i32 = arith.constant 96 : i32
    %34 = tpu.dynamic_rotate %29 by %c96_i32 dim 1 : vector<8x128xf32>, i32 -> vector<8x128xf32>
    %35 = arith.maximumf %33, %34 : vector<8x128xf32>
    %36 = arith.subf %29, %35 : vector<8x128xf32>
    %37 = math.exp %36 : vector<8x128xf32>
    %c32_i32_26 = arith.constant 32 : i32
    %38 = tpu.dynamic_rotate %37 by %c32_i32_26 dim 1 : vector<8x128xf32>, i32 -> vector<8x128xf32>
    %39 = arith.addf %37, %38 : vector<8x128xf32>
    %c64_i32_27 = arith.constant 64 : i32
    %40 = tpu.dynamic_rotate %37 by %c64_i32_27 dim 1 : vector<8x128xf32>, i32 -> vector<8x128xf32>
    %41 = arith.addf %39, %40 : vector<8x128xf32>
    %c96_i32_28 = arith.constant 96 : i32
    %42 = tpu.dynamic_rotate %37 by %c96_i32_28 dim 1 : vector<8x128xf32>, i32 -> vector<8x128xf32>
    %43 = arith.addf %41, %42 : vector<8x128xf32>
    %44 = tpu.reciprocal %43 {approx = true} : vector<8x128xf32> -> vector<8x128xf32>
    %45 = arith.mulf %37, %44 : vector<8x128xf32>
    %c0_29 = arith.constant 0 : index
    %c0_30 = arith.constant 0 : index
    %46 = vector.load %arg11[%c0_29, %c0_30] : memref<128x512xf32, #tpu.memory_space<vmem>>, vector<128x512xf32>
    %cst_31 = arith.constant dense<0.000000e+00> : vector<8x512xf32>
    %47 = tpu.matmul %45, %46, %cst_31 {dimension_numbers = #tpu.dot_dimension_numbers<[1], [0], [0], [1], [0, 0, 1, 1], [], []>} : vector<8x128xf32>, vector<128x512xf32>, vector<8x512xf32> -> vector<8x512xf32>
    %48 = arith.mulf %47, %25 : vector<8x512xf32>
    %c0_32 = arith.constant 0 : index
    %c0_33 = arith.constant 0 : index
    %49 = vector.load %arg12[%c0_32, %c0_33] : memref<512x128xf32, #tpu.memory_space<vmem>>, vector<512x128xf32>
    %cst_34 = arith.constant dense<0.000000e+00> : vector<8x128xf32>
    %50 = tpu.matmul %48, %49, %cst_34 {dimension_numbers = #tpu.dot_dimension_numbers<[1], [0], [0], [1], [0, 0, 1, 1], [], []>} : vector<8x512xf32>, vector<512x128xf32>, vector<8x128xf32> -> vector<8x128xf32>
    %c0_35 = arith.constant 0 : index
    %c0_36 = arith.constant 0 : index
    %51 = vector.load %arg13[%c0_35, %c0_36] : memref<1x128xf32, #tpu.memory_space<vmem>>, vector<1x128xf32>
    %52 = vector.broadcast %51 : vector<1x128xf32> to vector<8x128xf32>
    %53 = arith.addf %50, %52 : vector<8x128xf32>
    %54 = arith.addf %53, %12 : vector<8x128xf32>
    %c0_37 = arith.constant 0 : index
    %c0_38 = arith.constant 0 : index
    %55 = vector.load %arg15[%c0_37, %c0_38] : memref<128x256xf32, #tpu.memory_space<vmem>>, vector<128x256xf32>
    %cst_39 = arith.constant dense<0.000000e+00> : vector<8x256xf32>
    %56 = tpu.matmul %12, %55, %cst_39 {dimension_numbers = #tpu.dot_dimension_numbers<[1], [0], [0], [1], [0, 0, 1, 1], [], []>} : vector<8x128xf32>, vector<128x256xf32>, vector<8x256xf32> -> vector<8x256xf32>
    %c0_40 = arith.constant 0 : index
    %c0_41 = arith.constant 0 : index
    %57 = vector.load %arg16[%c0_40, %c0_41] : memref<1x256xf32, #tpu.memory_space<vmem>>, vector<1x256xf32>
    %58 = vector.broadcast %57 : vector<1x256xf32> to vector<8x256xf32>
    %59 = arith.addf %56, %58 : vector<8x256xf32>
    %c0_42 = arith.constant 0 : index
    %c0_43 = arith.constant 0 : index
    %60 = vector.load %arg17[%c0_42, %c0_43] : memref<128x512xf32, #tpu.memory_space<vmem>>, vector<128x512xf32>
    %cst_44 = arith.constant dense<0.000000e+00> : vector<8x512xf32>
    %61 = tpu.matmul %54, %60, %cst_44 {dimension_numbers = #tpu.dot_dimension_numbers<[1], [0], [0], [1], [0, 0, 1, 1], [], []>} : vector<8x128xf32>, vector<128x512xf32>, vector<8x512xf32> -> vector<8x512xf32>
    %c0_45 = arith.constant 0 : index
    %c0_46 = arith.constant 0 : index
    %62 = vector.load %arg2[%c0_45, %c0_46] : memref<8x16xf32, #tpu.memory_space<vmem>>, vector<8x16xf32>
    %c0_47 = arith.constant 0 : index
    %c0_48 = arith.constant 0 : index
    %63 = vector.load %arg18[%c0_47, %c0_48] : memref<16x512xf32, #tpu.memory_space<vmem>>, vector<16x512xf32>
    %cst_49 = arith.constant dense<0.000000e+00> : vector<8x512xf32>
    %64 = tpu.matmul %62, %63, %cst_49 {dimension_numbers = #tpu.dot_dimension_numbers<[1], [0], [0], [1], [0, 0, 1, 1], [], []>} : vector<8x16xf32>, vector<16x512xf32>, vector<8x512xf32> -> vector<8x512xf32>
    %65 = arith.addf %61, %64 : vector<8x512xf32>
    %c0_50 = arith.constant 0 : index
    %c0_51 = arith.constant 0 : index
    %66 = vector.load %arg19[%c0_50, %c0_51] : memref<1x512xf32, #tpu.memory_space<vmem>>, vector<1x512xf32>
    %67 = vector.broadcast %66 : vector<1x512xf32> to vector<8x512xf32>
    %68 = arith.addf %65, %67 : vector<8x512xf32>
    %69 = vector.extract_strided_slice %68 {offsets = [0, 0], sizes = [8, 256], strides = [1, 1]} : vector<8x512xf32> to vector<8x256xf32>
    %70 = vector.extract_strided_slice %68 {offsets = [0, 256], sizes = [8, 256], strides = [1, 1]} : vector<8x512xf32> to vector<8x256xf32>
    %71 = arith.mulf %59, %69 : vector<8x256xf32>
    %c0_52 = arith.constant 0 : index
    %c0_53 = arith.constant 0 : index
    %72 = vector.load %arg20[%c0_52, %c0_53] : memref<256x128xf32, #tpu.memory_space<vmem>>, vector<256x128xf32>
    %cst_54 = arith.constant dense<0.000000e+00> : vector<8x128xf32>
    %73 = tpu.matmul %71, %72, %cst_54 {dimension_numbers = #tpu.dot_dimension_numbers<[1], [0], [0], [1], [0, 0, 1, 1], [], []>} : vector<8x256xf32>, vector<256x128xf32>, vector<8x128xf32> -> vector<8x128xf32>
    %74 = arith.addf %73, %17 : vector<8x128xf32>
    %c32_i32_55 = arith.constant 32 : i32
    %75 = tpu.dynamic_rotate %74 by %c32_i32_55 dim 1 : vector<8x128xf32>, i32 -> vector<8x128xf32>
    %76 = arith.maximumf %74, %75 : vector<8x128xf32>
    %c64_i32_56 = arith.constant 64 : i32
    %77 = tpu.dynamic_rotate %74 by %c64_i32_56 dim 1 : vector<8x128xf32>, i32 -> vector<8x128xf32>
    %78 = arith.maximumf %76, %77 : vector<8x128xf32>
    %c96_i32_57 = arith.constant 96 : i32
    %79 = tpu.dynamic_rotate %74 by %c96_i32_57 dim 1 : vector<8x128xf32>, i32 -> vector<8x128xf32>
    %80 = arith.maximumf %78, %79 : vector<8x128xf32>
    %81 = arith.subf %74, %80 : vector<8x128xf32>
    %82 = math.exp %81 : vector<8x128xf32>
    %c32_i32_58 = arith.constant 32 : i32
    %83 = tpu.dynamic_rotate %82 by %c32_i32_58 dim 1 : vector<8x128xf32>, i32 -> vector<8x128xf32>
    %84 = arith.addf %82, %83 : vector<8x128xf32>
    %c64_i32_59 = arith.constant 64 : i32
    %85 = tpu.dynamic_rotate %82 by %c64_i32_59 dim 1 : vector<8x128xf32>, i32 -> vector<8x128xf32>
    %86 = arith.addf %84, %85 : vector<8x128xf32>
    %c96_i32_60 = arith.constant 96 : i32
    %87 = tpu.dynamic_rotate %82 by %c96_i32_60 dim 1 : vector<8x128xf32>, i32 -> vector<8x128xf32>
    %88 = arith.addf %86, %87 : vector<8x128xf32>
    %89 = tpu.reciprocal %88 {approx = true} : vector<8x128xf32> -> vector<8x128xf32>
    %90 = arith.mulf %82, %89 : vector<8x128xf32>
    %c0_61 = arith.constant 0 : index
    %c0_62 = arith.constant 0 : index
    %91 = vector.load %arg21[%c0_61, %c0_62] : memref<128x256xf32, #tpu.memory_space<vmem>>, vector<128x256xf32>
    %cst_63 = arith.constant dense<0.000000e+00> : vector<8x256xf32>
    %92 = tpu.matmul %90, %91, %cst_63 {dimension_numbers = #tpu.dot_dimension_numbers<[1], [0], [0], [1], [0, 0, 1, 1], [], []>} : vector<8x128xf32>, vector<128x256xf32>, vector<8x256xf32> -> vector<8x256xf32>
    %93 = arith.mulf %92, %70 : vector<8x256xf32>
    %c0_64 = arith.constant 0 : index
    %c0_65 = arith.constant 0 : index
    %94 = vector.load %arg23[%c0_64, %c0_65] : memref<256x64xf32, #tpu.memory_space<vmem>>, vector<256x64xf32>
    %cst_66 = arith.constant dense<0.000000e+00> : vector<8x64xf32>
    %95 = tpu.matmul %93, %94, %cst_66 {dimension_numbers = #tpu.dot_dimension_numbers<[1], [0], [0], [1], [0, 0, 1, 1], [], []>} : vector<8x256xf32>, vector<256x64xf32>, vector<8x64xf32> -> vector<8x64xf32>
    %c0_67 = arith.constant 0 : index
    %c0_68 = arith.constant 0 : index
    %96 = vector.load %arg24[%c0_67, %c0_68] : memref<1x64xf32, #tpu.memory_space<vmem>>, vector<1x64xf32>
    %97 = vector.broadcast %96 : vector<1x64xf32> to vector<8x64xf32>
    %98 = arith.addf %95, %97 : vector<8x64xf32>
    %99 = math.tanh %98 : vector<8x64xf32>
    %c0_69 = arith.constant 0 : index
    %c0_70 = arith.constant 0 : index
    %100 = vector.load %arg25[%c0_69, %c0_70] : memref<64x64xf32, #tpu.memory_space<vmem>>, vector<64x64xf32>
    %cst_71 = arith.constant dense<0.000000e+00> : vector<8x64xf32>
    %101 = tpu.matmul %99, %100, %cst_71 {dimension_numbers = #tpu.dot_dimension_numbers<[1], [0], [0], [1], [0, 0, 1, 1], [], []>} : vector<8x64xf32>, vector<64x64xf32>, vector<8x64xf32> -> vector<8x64xf32>
    %c0_72 = arith.constant 0 : index
    %c0_73 = arith.constant 0 : index
    %102 = vector.load %arg26[%c0_72, %c0_73] : memref<1x64xf32, #tpu.memory_space<vmem>>, vector<1x64xf32>
    %103 = vector.broadcast %102 : vector<1x64xf32> to vector<8x64xf32>
    %104 = arith.addf %101, %103 : vector<8x64xf32>
    %105 = math.tanh %104 : vector<8x64xf32>
    %c0_74 = arith.constant 0 : index
    %c0_75 = arith.constant 0 : index
    %106 = vector.load %arg27[%c0_74, %c0_75] : memref<64x128xf32, #tpu.memory_space<vmem>>, vector<64x128xf32>
    %cst_76 = arith.constant dense<0.000000e+00> : vector<8x128xf32>
    %107 = tpu.matmul %105, %106, %cst_76 {dimension_numbers = #tpu.dot_dimension_numbers<[1], [0], [0], [1], [0, 0, 1, 1], [], []>} : vector<8x64xf32>, vector<64x128xf32>, vector<8x128xf32> -> vector<8x128xf32>
    %c0_77 = arith.constant 0 : index
    %c0_78 = arith.constant 0 : index
    %108 = vector.load %arg28[%c0_77, %c0_78] : memref<1x128xf32, #tpu.memory_space<vmem>>, vector<1x128xf32>
    %109 = vector.broadcast %108 : vector<1x128xf32> to vector<8x128xf32>
    %110 = arith.addf %107, %109 : vector<8x128xf32>
    %c0_79 = arith.constant 0 : index
    %c0_80 = arith.constant 0 : index
    %111 = vector.load %arg29[%c0_79, %c0_80] : memref<8x128xf32, #tpu.memory_space<vmem>>, vector<8x128xf32>
    tpu.vector_store %arg29[%c0_79, %c0_80], %110 {strides = array<i32>} : memref<8x128xf32, #tpu.memory_space<vmem>>, vector<8x128xf32>,
    return
  }
  func.func @transform_0(%arg0: i32) -> (i32, i32) {
    %c0_i32 = arith.constant 0 : i32
    %c0_i32_0 = arith.constant 0 : i32
    return %arg0, %c0_i32 : i32, i32
  }
  func.func @transform_1(%arg0: i32) -> (i32, i32) {
    %c0_i32 = arith.constant 0 : i32
    %c0_i32_0 = arith.constant 0 : i32
    return %arg0, %c0_i32 : i32, i32
  }
  func.func @transform_2(%arg0: i32) -> (i32, i32) {
    %c0_i32 = arith.constant 0 : i32
    %c0_i32_0 = arith.constant 0 : i32
    return %arg0, %c0_i32 : i32, i32
  }
  func.func @transform_3(%arg0: i32) -> (i32, i32) {
    %c0_i32 = arith.constant 0 : i32
    %c0_i32_0 = arith.constant 0 : i32
    %c0_i32_1 = arith.constant 0 : i32
    return %c0_i32, %c0_i32_0 : i32, i32
  }
  func.func @transform_4(%arg0: i32) -> (i32, i32) {
    %c0_i32 = arith.constant 0 : i32
    %c0_i32_0 = arith.constant 0 : i32
    %c0_i32_1 = arith.constant 0 : i32
    return %c0_i32, %c0_i32_0 : i32, i32
  }
  func.func @transform_5(%arg0: i32) -> (i32, i32) {
    %c0_i32 = arith.constant 0 : i32
    %c0_i32_0 = arith.constant 0 : i32
    %c0_i32_1 = arith.constant 0 : i32
    return %c0_i32, %c0_i32_0 : i32, i32
  }
  func.func @transform_6(%arg0: i32) -> (i32, i32) {
    %c0_i32 = arith.constant 0 : i32
    %c0_i32_0 = arith.constant 0 : i32
    %c0_i32_1 = arith.constant 0 : i32
    return %c0_i32, %c0_i32_0 : i32, i32
  }
  func.func @transform_7(%arg0: i32) -> (i32, i32) {
    %c0_i32 = arith.constant 0 : i32
    %c0_i32_0 = arith.constant 0 : i32
    %c0_i32_1 = arith.constant 0 : i32
    return %c0_i32, %c0_i32_0 : i32, i32
  }
  func.func @transform_8(%arg0: i32) -> (i32, i32) {
    %c0_i32 = arith.constant 0 : i32
    %c0_i32_0 = arith.constant 0 : i32
    %c0_i32_1 = arith.constant 0 : i32
    return %c0_i32, %c0_i32_0 : i32, i32
  }
  func.func @transform_9(%arg0: i32) -> (i32, i32) {
    %c0_i32 = arith.constant 0 : i32
    %c0_i32_0 = arith.constant 0 : i32
    %c0_i32_1 = arith.constant 0 : i32
    return %c0_i32, %c0_i32_0 : i32, i32
  }
  func.func @transform_10(%arg0: i32) -> (i32, i32) {
    %c0_i32 = arith.constant 0 : i32
    %c0_i32_0 = arith.constant 0 : i32
    %c0_i32_1 = arith.constant 0 : i32
    return %c0_i32, %c0_i32_0 : i32, i32
  }
  func.func @transform_11(%arg0: i32) -> (i32, i32) {
    %c0_i32 = arith.constant 0 : i32
    %c0_i32_0 = arith.constant 0 : i32
    %c0_i32_1 = arith.constant 0 : i32
    return %c0_i32, %c0_i32_0 : i32, i32
  }
  func.func @transform_12(%arg0: i32) -> (i32, i32) {
    %c0_i32 = arith.constant 0 : i32
    %c0_i32_0 = arith.constant 0 : i32
    %c0_i32_1 = arith.constant 0 : i32
    return %c0_i32, %c0_i32_0 : i32, i32
  }
  func.func @transform_13(%arg0: i32) -> (i32, i32) {
    %c0_i32 = arith.constant 0 : i32
    %c0_i32_0 = arith.constant 0 : i32
    %c0_i32_1 = arith.constant 0 : i32
    return %c0_i32, %c0_i32_0 : i32, i32
  }
  func.func @transform_14(%arg0: i32) -> (i32, i32) {
    %c0_i32 = arith.constant 0 : i32
    %c0_i32_0 = arith.constant 0 : i32
    %c0_i32_1 = arith.constant 0 : i32
    return %c0_i32, %c0_i32_0 : i32, i32
  }
  func.func @transform_15(%arg0: i32) -> (i32, i32) {
    %c0_i32 = arith.constant 0 : i32
    %c0_i32_0 = arith.constant 0 : i32
    %c0_i32_1 = arith.constant 0 : i32
    return %c0_i32, %c0_i32_0 : i32, i32
  }
  func.func @transform_16(%arg0: i32) -> (i32, i32) {
    %c0_i32 = arith.constant 0 : i32
    %c0_i32_0 = arith.constant 0 : i32
    %c0_i32_1 = arith.constant 0 : i32
    return %c0_i32, %c0_i32_0 : i32, i32
  }
  func.func @transform_17(%arg0: i32) -> (i32, i32) {
    %c0_i32 = arith.constant 0 : i32
    %c0_i32_0 = arith.constant 0 : i32
    %c0_i32_1 = arith.constant 0 : i32
    return %c0_i32, %c0_i32_0 : i32, i32
  }
  func.func @transform_18(%arg0: i32) -> (i32, i32) {
    %c0_i32 = arith.constant 0 : i32
    %c0_i32_0 = arith.constant 0 : i32
    %c0_i32_1 = arith.constant 0 : i32
    return %c0_i32, %c0_i32_0 : i32, i32
  }
  func.func @transform_19(%arg0: i32) -> (i32, i32) {
    %c0_i32 = arith.constant 0 : i32
    %c0_i32_0 = arith.constant 0 : i32
    %c0_i32_1 = arith.constant 0 : i32
    return %c0_i32, %c0_i32_0 : i32, i32
  }
  func.func @transform_20(%arg0: i32) -> (i32, i32) {
    %c0_i32 = arith.constant 0 : i32
    %c0_i32_0 = arith.constant 0 : i32
    %c0_i32_1 = arith.constant 0 : i32
    return %c0_i32, %c0_i32_0 : i32, i32
  }
  func.func @transform_21(%arg0: i32) -> (i32, i32) {
    %c0_i32 = arith.constant 0 : i32
    %c0_i32_0 = arith.constant 0 : i32
    %c0_i32_1 = arith.constant 0 : i32
    return %c0_i32, %c0_i32_0 : i32, i32
  }
  func.func @transform_22(%arg0: i32) -> (i32, i32) {
    %c0_i32 = arith.constant 0 : i32
    %c0_i32_0 = arith.constant 0 : i32
    %c0_i32_1 = arith.constant 0 : i32
    return %c0_i32, %c0_i32_0 : i32, i32
  }
  func.func @transform_23(%arg0: i32) -> (i32, i32) {
    %c0_i32 = arith.constant 0 : i32
    %c0_i32_0 = arith.constant 0 : i32
    %c0_i32_1 = arith.constant 0 : i32
    return %c0_i32, %c0_i32_0 : i32, i32
  }
  func.func @transform_24(%arg0: i32) -> (i32, i32) {
    %c0_i32 = arith.constant 0 : i32
    %c0_i32_0 = arith.constant 0 : i32
    %c0_i32_1 = arith.constant 0 : i32
    return %c0_i32, %c0_i32_0 : i32, i32
  }
  func.func @transform_25(%arg0: i32) -> (i32, i32) {
    %c0_i32 = arith.constant 0 : i32
    %c0_i32_0 = arith.constant 0 : i32
    %c0_i32_1 = arith.constant 0 : i32
    return %c0_i32, %c0_i32_0 : i32, i32
  }
  func.func @transform_26(%arg0: i32) -> (i32, i32) {
    %c0_i32 = arith.constant 0 : i32
    %c0_i32_0 = arith.constant 0 : i32
    %c0_i32_1 = arith.constant 0 : i32
    return %c0_i32, %c0_i32_0 : i32, i32
  }
  func.func @transform_27(%arg0: i32) -> (i32, i32) {
    %c0_i32 = arith.constant 0 : i32
    %c0_i32_0 = arith.constant 0 : i32
    %c0_i32_1 = arith.constant 0 : i32
    return %c0_i32, %c0_i32_0 : i32, i32
  }
  func.func @transform_28(%arg0: i32) -> (i32, i32) {
    %c0_i32 = arith.constant 0 : i32
    %c0_i32_0 = arith.constant 0 : i32
    return %arg0, %c0_i32 : i32, i32
  }
}

</mosaic_0001>

<llo_original>
// kernel: mhead_attn_forward.1
$region0: #{mhead_attn_forward.1}
  #allocation0 [shape = 'u32[]', space=smem, size = 0x4, offset = 0x4, fixed_abs, tag = 'smem constant byte address 0x4 - core index']
  #allocation1 [shape = 'u32[144,128]{1,0:T(1,128)}', space=vmem, size = 0x12000, scoped, tag = 'internal scratch']
  %s0 = inlined_call_operand.vmem [shape: f32[8,52], index: 0, kind: input, shape index: {}]
  %s1 = inlined_call_operand.vmem [shape: f32[8,16], index: 1, kind: input, shape index: {}]
  %s2 = inlined_call_operand.vmem [shape: f32[8,4], index: 2, kind: input, shape index: {}]
  %s3 = inlined_call_operand.hbm [shape: f32[52,128], index: 3, kind: input, shape index: {}]
  %s4 = inlined_call_operand.vmem [shape: f32[1,128], index: 4, kind: input, shape index: {}]
  %s5 = inlined_call_operand.vmem [shape: f32[128,128], index: 5, kind: input, shape index: {}]
  %s6 = inlined_call_operand.vmem [shape: f32[1,128], index: 6, kind: input, shape index: {}]
  %s7 = inlined_call_operand.hbm [shape: f32[128,1536], index: 7, kind: input, shape index: {}]
  %s8 = inlined_call_operand.vmem [shape: f32[1,1536], index: 8, kind: input, shape index: {}]
  %s9 = inlined_call_operand.hbm [shape: f32[512,128], index: 9, kind: input, shape index: {}]
  %s10 = inlined_call_operand.hbm [shape: f32[128,512], index: 10, kind: input, shape index: {}]
  %s11 = inlined_call_operand.hbm [shape: f32[512,128], index: 11, kind: input, shape index: {}]
  %s12 = inlined_call_operand.hbm [shape: f32[1,128], index: 12, kind: input, shape index: {}]
  %s13 = inlined_call_operand.vmem [shape: f32[4,128], index: 13, kind: input, shape index: {}]
  %s14 = inlined_call_operand.vmem [shape: f32[128,256], index: 14, kind: input, shape index: {}]
  %s15 = inlined_call_operand.hbm [shape: f32[1,256], index: 15, kind: input, shape index: {}]
  %s16 = inlined_call_operand.hbm [shape: f32[128,512], index: 16, kind: input, shape index: {}]
  %s17 = inlined_call_operand.vmem [shape: f32[16,512], index: 17, kind: input, shape index: {}]
  %s18 = inlined_call_operand.hbm [shape: f32[1,512], index: 18, kind: input, shape index: {}]
  %s19 = inlined_call_operand.hbm [shape: f32[256,128], index: 19, kind: input, shape index: {}]
  %s20 = inlined_call_operand.hbm [shape: f32[128,256], index: 20, kind: input, shape index: {}]
  %s21 = inlined_call_operand.hbm [shape: f32[4,128], index: 21, kind: input, shape index: {}]
  %s22 = inlined_call_operand.hbm [shape: f32[256,64], index: 22, kind: input, shape index: {}]
  %s23 = inlined_call_operand.hbm [shape: f32[1,64], index: 23, kind: input, shape index: {}]
  %s24 = inlined_call_operand.hbm [shape: f32[64,64], index: 24, kind: input, shape index: {}]
  %s25 = inlined_call_operand.hbm [shape: f32[1,64], index: 25, kind: input, shape index: {}]
  %s26 = inlined_call_operand.hbm [shape: f32[64,128], index: 26, kind: input, shape index: {}]
  %s27 = inlined_call_operand.hbm [shape: f32[1,128], index: 27, kind: input, shape index: {}]
  %s28 = inlined_call_operand.vmem [shape: f32[8,128], index: 28, kind: output, shape index: {}]
  %s29 = sld [smem:[#allocation0]]
  $region194: #{mhead_attn_forward.1} parent=0
    _
  %s31 = ssub.s32 1, %s29
  %s32 = scalar_select 0, %s31, %s29
  $region1: #{mhead_attn_forward.1} parent=0
    #allocation2 [shape = 'u8[28672]{0}', space=vmem, size = 0x7000, scoped, tag = 'input window, operand 3, single buffered']
    #allocation3 [shape = 's32[1]{0}', space=sflag, size = 0x4, scoped, tag = 'scoped memory for mhead_attn_forward.1']
    #allocation4 [shape = 'u8[786432]{0}', space=vmem, size = 0xc0000, scoped, tag = 'input window, operand 7, single buffered']
    #allocation5 [shape = 's32[1]{0}', space=sflag, size = 0x4, scoped, tag = 'scoped memory for mhead_attn_forward.1']
    #allocation6 [shape = 'u8[262144]{0}', space=vmem, size = 0x40000, scoped, tag = 'input window, operand 9, single buffered']
    #allocation7 [shape = 'u8[262144]{0}', space=vmem, size = 0x40000, scoped, tag = 'input window, operand 10, single buffered']
    #allocation8 [shape = 's32[1]{0}', space=sflag, size = 0x4, scoped, tag = 'scoped memory for mhead_attn_forward.1']
    #allocation9 [shape = 'u8[262144]{0}', space=vmem, size = 0x40000, scoped, tag = 'input window, operand 11, single buffered']
    #allocation10 [shape = 'u8[512]{0}', space=vmem, size = 0x400, scoped, tag = 'input window, operand 12, single buffered']
    #allocation11 [shape = 's32[1]{0}', space=sflag, size = 0x4, scoped, tag = 'scoped memory for mhead_attn_forward.1']
    #allocation12 [shape = 'u8[1024]{0}', space=vmem, size = 0x400, scoped, tag = 'input window, operand 15, single buffered']
    #allocation13 [shape = 'u8[262144]{0}', space=vmem, size = 0x40000, scoped, tag = 'input window, operand 16, single buffered']
    #allocation14 [shape = 's32[1]{0}', space=sflag, size = 0x4, scoped, tag = 'scoped memory for mhead_attn_forward.1']
    #allocation15 [shape = 'u8[2048]{0}', space=vmem, size = 0x800, scoped, tag = 'input window, operand 18, single buffered']
    #allocation16 [shape = 'u8[131072]{0}', space=vmem, size = 0x20000, scoped, tag = 'input window, operand 19, single buffered']
    #allocation17 [shape = 's32[1]{0}', space=sflag, size = 0x4, scoped, tag = 'scoped memory for mhead_attn_forward.1']
    #allocation18 [shape = 'u8[131072]{0}', space=vmem, size = 0x20000, scoped, tag = 'input window, operand 20, single buffered']
    #allocation19 [shape = 'u8[2048]{0}', space=vmem, size = 0x800, scoped, tag = 'input window, operand 21, single buffered']
    #allocation20 [shape = 's32[1]{0}', space=sflag, size = 0x4, scoped, tag = 'scoped memory for mhead_attn_forward.1']
    #allocation21 [shape = 'u8[131072]{0}', space=vmem, size = 0x20000, scoped, tag = 'input window, operand 22, single buffered']
    #allocation22 [shape = 'u8[512]{0}', space=vmem, size = 0x400, scoped, tag = 'input window, operand 23, single buffered']
    #allocation23 [shape = 's32[1]{0}', space=sflag, size = 0x4, scoped, tag = 'scoped memory for mhead_attn_forward.1']
    #allocation24 [shape = 'u8[32768]{0}', space=vmem, size = 0x8000, scoped, tag = 'input window, operand 24, single buffered']
    #allocation25 [shape = 'u8[512]{0}', space=vmem, size = 0x400, scoped, tag = 'input window, operand 25, single buffered']
    #allocation26 [shape = 's32[1]{0}', space=sflag, size = 0x4, scoped, tag = 'scoped memory for mhead_attn_forward.1']
    #allocation27 [shape = 'u8[32768]{0}', space=vmem, size = 0x8000, scoped, tag = 'input window, operand 26, single buffered']
    #allocation28 [shape = 'u8[512]{0}', space=vmem, size = 0x400, scoped, tag = 'input window, operand 27, single buffered']
    #allocation29 [shape = 's32[1]{0}', space=sflag, size = 0x4, scoped, tag = 'scoped memory for mhead_attn_forward.1']
    %33 = vsyncpa [#allocation3], 0
    %34 = vsyncpa [#allocation5], 0
    %35 = vsyncpa [#allocation8], 0
    %36 = vsyncpa [#allocation11], 0
    %37 = vsyncpa [#allocation14], 0
    %38 = vsyncpa [#allocation17], 0
    %39 = vsyncpa [#allocation20], 0
    %40 = vsyncpa [#allocation23], 0
    %41 = vsyncpa [#allocation26], 0
    %42 = vsyncpa [#allocation29], 0
    // Predicated region
    $region2: #{mhead_attn_forward.1} parent=1 // pred_check
      _
    $region3: #{mhead_attn_forward.1} parent=1 // pred_check_branch
      %44 = sbr.rel (0) target = $region5
    $region4: #{mhead_attn_forward.1} parent=1 // pred_region
      _
    $region5: #{mhead_attn_forward.1} parent=1 // pred_fallthru
      _
    // Predicated region
    $region6: #{mhead_attn_forward.1} parent=1 // pred_check
      _
    $region7: #{mhead_attn_forward.1} parent=1 // pred_check_branch
      %46 = sbr.rel (0) target = $region9
    $region8: #{mhead_attn_forward.1} parent=1 // pred_region
      _
    $region9: #{mhead_attn_forward.1} parent=1 // pred_fallthru
      _
    // Predicated region
    $region10: #{mhead_attn_forward.1} parent=1 // pred_check
      _
    $region11: #{mhead_attn_forward.1} parent=1 // pred_check_branch
      %48 = sbr.rel (0) target = $region13
    $region12: #{mhead_attn_forward.1} parent=1 // pred_region
      _
    $region13: #{mhead_attn_forward.1} parent=1 // pred_fallthru
      _
    // Predicated region
    $region14: #{mhead_attn_forward.1} parent=1 // pred_check
      _
    $region15: #{mhead_attn_forward.1} parent=1 // pred_check_branch
      %50 = sbr.rel (0) target = $region17
    $region16: #{mhead_attn_forward.1} parent=1 // pred_region
      %s52 = ssub.s32 896, 896
      %53 = vsyncadd [#allocation3], %s52
      %s54 = sshll.u32 [#allocation2], 4
      %s55 = int_to_ptr.vmem [resolvable:$true] %s54
      %60 = dma.hbm_to_vmem [thread:$0]  %s3, 896, %s55, [#allocation3], 128, 128, 8
    $region17: #{mhead_attn_forward.1} parent=1 // pred_fallthru
      _
    // Predicated region
    $region18: #{mhead_attn_forward.1} parent=1 // pred_check
      _
    $region19: #{mhead_attn_forward.1} parent=1 // pred_check_branch
      %62 = sbr.rel (0) target = $region21
    $region20: #{mhead_attn_forward.1} parent=1 // pred_region
      _
    $region21: #{mhead_attn_forward.1} parent=1 // pred_fallthru
      _
    // Predicated region
    $region22: #{mhead_attn_forward.1} parent=1 // pred_check
      _
    $region23: #{mhead_attn_forward.1} parent=1 // pred_check_branch
      %64 = sbr.rel (0) target = $region25
    $region24: #{mhead_attn_forward.1} parent=1 // pred_region
      _
    $region25: #{mhead_attn_forward.1} parent=1 // pred_fallthru
      _
    // Predicated region
    $region26: #{mhead_attn_forward.1} parent=1 // pred_check
      _
    $region27: #{mhead_attn_forward.1} parent=1 // pred_check_branch
      %66 = sbr.rel (0) target = $region29
    $region28: #{mhead_attn_forward.1} parent=1 // pred_region
      _
    $region29: #{mhead_attn_forward.1} parent=1 // pred_fallthru
      _
    // Predicated region
    $region30: #{mhead_attn_forward.1} parent=1 // pred_check
      _
    $region31: #{mhead_attn_forward.1} parent=1 // pred_check_branch
      %68 = sbr.rel (0) target = $region33
    $region32: #{mhead_attn_forward.1} parent=1 // pred_region
      %s70 = ssub.s32 24576, 24576
      %71 = vsyncadd [#allocation5], %s70
      %s72 = sshll.u32 [#allocation4], 4
      %s73 = int_to_ptr.vmem [resolvable:$true] %s72
      %78 = dma.hbm_to_vmem [thread:$0]  %s7, 24576, %s73, [#allocation5], 1536, 1536, 96
    $region33: #{mhead_attn_forward.1} parent=1 // pred_fallthru
      _
    // Predicated region
    $region34: #{mhead_attn_forward.1} parent=1 // pred_check
      _
    $region35: #{mhead_attn_forward.1} parent=1 // pred_check_branch
      %80 = sbr.rel (0) target = $region37
    $region36: #{mhead_attn_forward.1} parent=1 // pred_region
      _
    $region37: #{mhead_attn_forward.1} parent=1 // pred_fallthru
      _
    // Predicated region
    $region38: #{mhead_attn_forward.1} parent=1 // pred_check
      _
    $region39: #{mhead_attn_forward.1} parent=1 // pred_check_branch
      %82 = sbr.rel (0) target = $region41
    $region40: #{mhead_attn_forward.1} parent=1 // pred_region
      %s84 = ssub.s32 8192, 8192
      %85 = vsyncadd [#allocation5], %s84
      %s86 = sshll.u32 [#allocation6], 4
      %s87 = int_to_ptr.vmem [resolvable:$true] %s86
      %92 = dma.hbm_to_vmem [thread:$0]  %s9, 8192, %s87, [#allocation5], 128, 128, 8
    $region41: #{mhead_attn_forward.1} parent=1 // pred_fallthru
      _
    // Predicated region
    $region42: #{mhead_attn_forward.1} parent=1 // pred_check
      _
    $region43: #{mhead_attn_forward.1} parent=1 // pred_check_branch
      %94 = sbr.rel (0) target = $region45
    $region44: #{mhead_attn_forward.1} parent=1 // pred_region
      %s96 = ssub.s32 8192, 8192
      %97 = vsyncadd [#allocation8], %s96
      %s98 = sshll.u32 [#allocation7], 4
      %s99 = int_to_ptr.vmem [resolvable:$true] %s98
      %104 = dma.hbm_to_vmem [thread:$0]  %s10, 8192, %s99, [#allocation8], 512, 512, 32
    $region45: #{mhead_attn_forward.1} parent=1 // pred_fallthru
      _
    // Predicated region
    $region46: #{mhead_attn_forward.1} parent=1 // pred_check
      _
    $region47: #{mhead_attn_forward.1} parent=1 // pred_check_branch
      %106 = sbr.rel (0) target = $region49
    $region48: #{mhead_attn_forward.1} parent=1 // pred_region
      %s108 = ssub.s32 8192, 8192
      %109 = vsyncadd [#allocation8], %s108
      %s110 = sshll.u32 [#allocation9], 4
      %s111 = int_to_ptr.vmem [resolvable:$true] %s110
      %116 = dma.hbm_to_vmem [thread:$0]  %s11, 8192, %s111, [#allocation8], 128, 128, 8
    $region49: #{mhead_attn_forward.1} parent=1 // pred_fallthru
      _
    // Predicated region
    $region50: #{mhead_attn_forward.1} parent=1 // pred_check
      _
    $region51: #{mhead_attn_forward.1} parent=1 // pred_check_branch
      %118 = sbr.rel (0) target = $region53
    $region52: #{mhead_attn_forward.1} parent=1 // pred_region
      %s120 = ssub.s32 16, 16
      %121 = vsyncadd [#allocation11], %s120
      %s123 = sshll.u32 [#allocation10], 4
      %s124 = int_to_ptr.vmem [resolvable:$true] %s123
      %126 = dma.hbm_to_vmem [thread:$0]  %s12, 16, %s124, [#allocation11]
    $region53: #{mhead_attn_forward.1} parent=1 // pred_fallthru
      _
    // Predicated region
    $region54: #{mhead_attn_forward.1} parent=1 // pred_check
      _
    $region55: #{mhead_attn_forward.1} parent=1 // pred_check_branch
      %128 = sbr.rel (0) target = $region57
    $region56: #{mhead_attn_forward.1} parent=1 // pred_region
      _
    $region57: #{mhead_attn_forward.1} parent=1 // pred_fallthru
      _
    // Predicated region
    $region58: #{mhead_attn_forward.1} parent=1 // pred_check
      _
    $region59: #{mhead_attn_forward.1} parent=1 // pred_check_branch
      %130 = sbr.rel (0) target = $region61
    $region60: #{mhead_attn_forward.1} parent=1 // pred_region
      _
    $region61: #{mhead_attn_forward.1} parent=1 // pred_fallthru
      _
    // Predicated region
    $region62: #{mhead_attn_forward.1} parent=1 // pred_check
      _
    $region63: #{mhead_attn_forward.1} parent=1 // pred_check_branch
      %132 = sbr.rel (0) target = $region65
    $region64: #{mhead_attn_forward.1} parent=1 // pred_region
      %s134 = ssub.s32 32, 32
      %135 = vsyncadd [#allocation11], %s134
      %s137 = sshll.u32 [#allocation12], 4
      %s138 = int_to_ptr.vmem [resolvable:$true] %s137
      %140 = dma.hbm_to_vmem [thread:$0]  %s15, 32, %s138, [#allocation11]
    $region65: #{mhead_attn_forward.1} parent=1 // pred_fallthru
      _
    // Predicated region
    $region66: #{mhead_attn_forward.1} parent=1 // pred_check
      _
    $region67: #{mhead_attn_forward.1} parent=1 // pred_check_branch
      %142 = sbr.rel (0) target = $region69
    $region68: #{mhead_attn_forward.1} parent=1 // pred_region
      %s144 = ssub.s32 8192, 8192
      %145 = vsyncadd [#allocation14], %s144
      %s146 = sshll.u32 [#allocation13], 4
      %s147 = int_to_ptr.vmem [resolvable:$true] %s146
      %152 = dma.hbm_to_vmem [thread:$0]  %s16, 8192, %s147, [#allocation14], 512, 512, 32
    $region69: #{mhead_attn_forward.1} parent=1 // pred_fallthru
      _
    // Predicated region
    $region70: #{mhead_attn_forward.1} parent=1 // pred_check
      _
    $region71: #{mhead_attn_forward.1} parent=1 // pred_check_branch
      %154 = sbr.rel (0) target = $region73
    $region72: #{mhead_attn_forward.1} parent=1 // pred_region
      _
    $region73: #{mhead_attn_forward.1} parent=1 // pred_fallthru
      _
    // Predicated region
    $region74: #{mhead_attn_forward.1} parent=1 // pred_check
      _
    $region75: #{mhead_attn_forward.1} parent=1 // pred_check_branch
      %156 = sbr.rel (0) target = $region77
    $region76: #{mhead_attn_forward.1} parent=1 // pred_region
      %s158 = ssub.s32 64, 64
      %159 = vsyncadd [#allocation14], %s158
      %s161 = sshll.u32 [#allocation15], 4
      %s162 = int_to_ptr.vmem [resolvable:$true] %s161
      %164 = dma.hbm_to_vmem [thread:$0]  %s18, 64, %s162, [#allocation14]
    $region77: #{mhead_attn_forward.1} parent=1 // pred_fallthru
      _
    // Predicated region
    $region78: #{mhead_attn_forward.1} parent=1 // pred_check
      _
    $region79: #{mhead_attn_forward.1} parent=1 // pred_check_branch
      %166 = sbr.rel (0) target = $region81
    $region80: #{mhead_attn_forward.1} parent=1 // pred_region
      %s168 = ssub.s32 4096, 4096
      %169 = vsyncadd [#allocation17], %s168
      %s170 = sshll.u32 [#allocation16], 4
      %s171 = int_to_ptr.vmem [resolvable:$true] %s170
      %176 = dma.hbm_to_vmem [thread:$0]  %s19, 4096, %s171, [#allocation17], 128, 128, 8
    $region81: #{mhead_attn_forward.1} parent=1 // pred_fallthru
      _
    // Predicated region
    $region82: #{mhead_attn_forward.1} parent=1 // pred_check
      _
    $region83: #{mhead_attn_forward.1} parent=1 // pred_check_branch
      %178 = sbr.rel (0) target = $region85
    $region84: #{mhead_attn_forward.1} parent=1 // pred_region
      %s180 = ssub.s32 4096, 4096
      %181 = vsyncadd [#allocation17], %s180
      %s182 = sshll.u32 [#allocation18], 4
      %s183 = int_to_ptr.vmem [resolvable:$true] %s182
      %188 = dma.hbm_to_vmem [thread:$0]  %s20, 4096, %s183, [#allocation17], 256, 256, 16
    $region85: #{mhead_attn_forward.1} parent=1 // pred_fallthru
      _
    // Predicated region
    $region86: #{mhead_attn_forward.1} parent=1 // pred_check
      _
    $region87: #{mhead_attn_forward.1} parent=1 // pred_check_branch
      %190 = sbr.rel (0) target = $region89
    $region88: #{mhead_attn_forward.1} parent=1 // pred_region
      %s192 = ssub.s32 64, 64
      %193 = vsyncadd [#allocation20], %s192
      %s195 = sshll.u32 [#allocation19], 4
      %s196 = int_to_ptr.vmem [resolvable:$true] %s195
      %198 = dma.hbm_to_vmem [thread:$0]  %s21, 64, %s196, [#allocation20]
    $region89: #{mhead_attn_forward.1} parent=1 // pred_fallthru
      _
    // Predicated region
    $region90: #{mhead_attn_forward.1} parent=1 // pred_check
      _
    $region91: #{mhead_attn_forward.1} parent=1 // pred_check_branch
      %200 = sbr.rel (0) target = $region93
    $region92: #{mhead_attn_forward.1} parent=1 // pred_region
      %s202 = ssub.s32 4096, 4096
      %203 = vsyncadd [#allocation20], %s202
      %s204 = sshll.u32 [#allocation21], 4
      %s205 = int_to_ptr.vmem [resolvable:$true] %s204
      %210 = dma.hbm_to_vmem [thread:$0]  %s22, 4096, %s205, [#allocation20], 128, 128, 8
    $region93: #{mhead_attn_forward.1} parent=1 // pred_fallthru
      _
    // Predicated region
    $region94: #{mhead_attn_forward.1} parent=1 // pred_check
      _
    $region95: #{mhead_attn_forward.1} parent=1 // pred_check_branch
      %212 = sbr.rel (0) target = $region97
    $region96: #{mhead_attn_forward.1} parent=1 // pred_region
      %s214 = ssub.s32 16, 16
      %215 = vsyncadd [#allocation23], %s214
      %s217 = sshll.u32 [#allocation22], 4
      %s218 = int_to_ptr.vmem [resolvable:$true] %s217
      %220 = dma.hbm_to_vmem [thread:$0]  %s23, 16, %s218, [#allocation23]
    $region97: #{mhead_attn_forward.1} parent=1 // pred_fallthru
      _
    // Predicated region
    $region98: #{mhead_attn_forward.1} parent=1 // pred_check
      _
    $region99: #{mhead_attn_forward.1} parent=1 // pred_check_branch
      %222 = sbr.rel (0) target = $region101
    $region100: #{mhead_attn_forward.1} parent=1 // pred_region
      %s224 = ssub.s32 1024, 1024
      %225 = vsyncadd [#allocation23], %s224
      %s226 = sshll.u32 [#allocation24], 4
      %s227 = int_to_ptr.vmem [resolvable:$true] %s226
      %232 = dma.hbm_to_vmem [thread:$0]  %s24, 1024, %s227, [#allocation23], 128, 128, 8
    $region101: #{mhead_attn_forward.1} parent=1 // pred_fallthru
      _
    // Predicated region
    $region102: #{mhead_attn_forward.1} parent=1 // pred_check
      _
    $region103: #{mhead_attn_forward.1} parent=1 // pred_check_branch
      %234 = sbr.rel (0) target = $region105
    $region104: #{mhead_attn_forward.1} parent=1 // pred_region
      %s236 = ssub.s32 16, 16
      %237 = vsyncadd [#allocation26], %s236
      %s239 = sshll.u32 [#allocation25], 4
      %s240 = int_to_ptr.vmem [resolvable:$true] %s239
      %242 = dma.hbm_to_vmem [thread:$0]  %s25, 16, %s240, [#allocation26]
    $region105: #{mhead_attn_forward.1} parent=1 // pred_fallthru
      _
    // Predicated region
    $region106: #{mhead_attn_forward.1} parent=1 // pred_check
      _
    $region107: #{mhead_attn_forward.1} parent=1 // pred_check_branch
      %244 = sbr.rel (0) target = $region109
    $region108: #{mhead_attn_forward.1} parent=1 // pred_region
      %s246 = ssub.s32 1024, 1024
      %247 = vsyncadd [#allocation26], %s246
      %s248 = sshll.u32 [#allocation27], 4
      %s249 = int_to_ptr.vmem [resolvable:$true] %s248
      %254 = dma.hbm_to_vmem [thread:$0]  %s26, 1024, %s249, [#allocation26], 128, 128, 8
    $region109: #{mhead_attn_forward.1} parent=1 // pred_fallthru
      _
    // Predicated region
    $region110: #{mhead_attn_forward.1} parent=1 // pred_check
      _
    $region111: #{mhead_attn_forward.1} parent=1 // pred_check_branch
      %256 = sbr.rel (0) target = $region113
    $region112: #{mhead_attn_forward.1} parent=1 // pred_region
      %s258 = ssub.s32 16, 16
      %259 = vsyncadd [#allocation29], %s258
      %s261 = sshll.u32 [#allocation28], 4
      %s262 = int_to_ptr.vmem [resolvable:$true] %s261
      %264 = dma.hbm_to_vmem [thread:$0]  %s27, 16, %s262, [#allocation29]
    $region113: #{mhead_attn_forward.1} parent=1 // pred_fallthru
      _
    // Predicated region
    $region114: #{mhead_attn_forward.1} parent=1 // pred_check
      _
    $region115: #{mhead_attn_forward.1} parent=1 // pred_check_branch
      %266 = sbr.rel (0) target = $region117
    $region116: #{mhead_attn_forward.1} parent=1 // pred_region
      %267 = dma.done [#allocation3], 896
    $region117: #{mhead_attn_forward.1} parent=1 // pred_fallthru
      _
    // Predicated region
    $region118: #{mhead_attn_forward.1} parent=1 // pred_check
      _
    $region119: #{mhead_attn_forward.1} parent=1 // pred_check_branch
      %269 = sbr.rel (0) target = $region121
    $region120: #{mhead_attn_forward.1} parent=1 // pred_region
      %270 = dma.done [#allocation5], 24576
    $region121: #{mhead_attn_forward.1} parent=1 // pred_fallthru
      _
    // Predicated region
    $region122: #{mhead_attn_forward.1} parent=1 // pred_check
      _
    $region123: #{mhead_attn_forward.1} parent=1 // pred_check_branch
      %272 = sbr.rel (0) target = $region125
    $region124: #{mhead_attn_forward.1} parent=1 // pred_region
      %273 = dma.done [#allocation5], 8192
    $region125: #{mhead_attn_forward.1} parent=1 // pred_fallthru
      _
    // Predicated region
    $region126: #{mhead_attn_forward.1} parent=1 // pred_check
      _
    $region127: #{mhead_attn_forward.1} parent=1 // pred_check_branch
      %275 = sbr.rel (0) target = $region129
    $region128: #{mhead_attn_forward.1} parent=1 // pred_region
      %276 = dma.done [#allocation8], 8192
    $region129: #{mhead_attn_forward.1} parent=1 // pred_fallthru
      _
    // Predicated region
    $region130: #{mhead_attn_forward.1} parent=1 // pred_check
      _
    $region131: #{mhead_attn_forward.1} parent=1 // pred_check_branch
      %278 = sbr.rel (0) target = $region133
    $region132: #{mhead_attn_forward.1} parent=1 // pred_region
      %279 = dma.done [#allocation8], 8192
    $region133: #{mhead_attn_forward.1} parent=1 // pred_fallthru
      _
    // Predicated region
    $region134: #{mhead_attn_forward.1} parent=1 // pred_check
      _
    $region135: #{mhead_attn_forward.1} parent=1 // pred_check_branch
      %281 = sbr.rel (0) target = $region137
    $region136: #{mhead_attn_forward.1} parent=1 // pred_region
      %282 = dma.done [#allocation11], 16
    $region137: #{mhead_attn_forward.1} parent=1 // pred_fallthru
      _
    // Predicated region
    $region138: #{mhead_attn_forward.1} parent=1 // pred_check
      _
    $region139: #{mhead_attn_forward.1} parent=1 // pred_check_branch
      %284 = sbr.rel (0) target = $region141
    $region140: #{mhead_attn_forward.1} parent=1 // pred_region
      %285 = dma.done [#allocation11], 32
    $region141: #{mhead_attn_forward.1} parent=1 // pred_fallthru
      _
    // Predicated region
    $region142: #{mhead_attn_forward.1} parent=1 // pred_check
      _
    $region143: #{mhead_attn_forward.1} parent=1 // pred_check_branch
      %287 = sbr.rel (0) target = $region145
    $region144: #{mhead_attn_forward.1} parent=1 // pred_region
      %288 = dma.done [#allocation14], 8192
    $region145: #{mhead_attn_forward.1} parent=1 // pred_fallthru
      _
    // Predicated region
    $region146: #{mhead_attn_forward.1} parent=1 // pred_check
      _
    $region147: #{mhead_attn_forward.1} parent=1 // pred_check_branch
      %290 = sbr.rel (0) target = $region149
    $region148: #{mhead_attn_forward.1} parent=1 // pred_region
      %291 = dma.done [#allocation14], 64
    $region149: #{mhead_attn_forward.1} parent=1 // pred_fallthru
      _
    // Predicated region
    $region150: #{mhead_attn_forward.1} parent=1 // pred_check
      _
    $region151: #{mhead_attn_forward.1} parent=1 // pred_check_branch
      %293 = sbr.rel (0) target = $region153
    $region152: #{mhead_attn_forward.1} parent=1 // pred_region
      %294 = dma.done [#allocation17], 4096
    $region153: #{mhead_attn_forward.1} parent=1 // pred_fallthru
      _
    // Predicated region
    $region154: #{mhead_attn_forward.1} parent=1 // pred_check
      _
    $region155: #{mhead_attn_forward.1} parent=1 // pred_check_branch
      %296 = sbr.rel (0) target = $region157
    $region156: #{mhead_attn_forward.1} parent=1 // pred_region
      %297 = dma.done [#allocation17], 4096
    $region157: #{mhead_attn_forward.1} parent=1 // pred_fallthru
      _
    // Predicated region
    $region158: #{mhead_attn_forward.1} parent=1 // pred_check
      _
    $region159: #{mhead_attn_forward.1} parent=1 // pred_check_branch
      %299 = sbr.rel (0) target = $region161
    $region160: #{mhead_attn_forward.1} parent=1 // pred_region
      %300 = dma.done [#allocation20], 64
    $region161: #{mhead_attn_forward.1} parent=1 // pred_fallthru
      _
    // Predicated region
    $region162: #{mhead_attn_forward.1} parent=1 // pred_check
      _
    $region163: #{mhead_attn_forward.1} parent=1 // pred_check_branch
      %302 = sbr.rel (0) target = $region165
    $region164: #{mhead_attn_forward.1} parent=1 // pred_region
      %303 = dma.done [#allocation20], 4096
    $region165: #{mhead_attn_forward.1} parent=1 // pred_fallthru
      _
    // Predicated region
    $region166: #{mhead_attn_forward.1} parent=1 // pred_check
      _
    $region167: #{mhead_attn_forward.1} parent=1 // pred_check_branch
      %305 = sbr.rel (0) target = $region169
    $region168: #{mhead_attn_forward.1} parent=1 // pred_region
      %306 = dma.done [#allocation23], 16
    $region169: #{mhead_attn_forward.1} parent=1 // pred_fallthru
      _
    // Predicated region
    $region170: #{mhead_attn_forward.1} parent=1 // pred_check
      _
    $region171: #{mhead_attn_forward.1} parent=1 // pred_check_branch
      %308 = sbr.rel (0) target = $region173
    $region172: #{mhead_attn_forward.1} parent=1 // pred_region
      %309 = dma.done [#allocation23], 1024
    $region173: #{mhead_attn_forward.1} parent=1 // pred_fallthru
      _
    // Predicated region
    $region174: #{mhead_attn_forward.1} parent=1 // pred_check
      _
    $region175: #{mhead_attn_forward.1} parent=1 // pred_check_branch
      %311 = sbr.rel (0) target = $region177
    $region176: #{mhead_attn_forward.1} parent=1 // pred_region
      %312 = dma.done [#allocation26], 16
    $region177: #{mhead_attn_forward.1} parent=1 // pred_fallthru
      _
    // Predicated region
    $region178: #{mhead_attn_forward.1} parent=1 // pred_check
      _
    $region179: #{mhead_attn_forward.1} parent=1 // pred_check_branch
      %314 = sbr.rel (0) target = $region181
    $region180: #{mhead_attn_forward.1} parent=1 // pred_region
      %315 = dma.done [#allocation26], 1024
    $region181: #{mhead_attn_forward.1} parent=1 // pred_fallthru
      _
    // Predicated region
    $region182: #{mhead_attn_forward.1} parent=1 // pred_check
      _
    $region183: #{mhead_attn_forward.1} parent=1 // pred_check_branch
      %317 = sbr.rel (0) target = $region185
    $region184: #{mhead_attn_forward.1} parent=1 // pred_region
      %318 = dma.done [#allocation29], 16
    $region185: #{mhead_attn_forward.1} parent=1 // pred_fallthru
      _
    %v319 = vld [vmem:[%s0] sm:$0xff]
    %v320 = vld [vmem:[#allocation2] sm:$0xff]
    %v321 = vld [vmem:[#allocation2 + $0x8] sm:$0xff]
    %v322 = vld [vmem:[#allocation2 + $0x10] sm:$0xff]
    %v323 = vld [vmem:[#allocation2 + $0x18] sm:$0xff]
    %v324 = vld [vmem:[#allocation2 + $0x20] sm:$0xff]
    %v325 = vld [vmem:[#allocation2 + $0x28] sm:$0xff]
    %v326 = vld [vmem:[#allocation2 + $0x30] sm:$0xf]
    %v327 = vld [vmem:[%s4] sm:$0x1]
    %v329 = vlaneseq
    %v330 = vshrl.u32 %v329, 7
    %v331 = vsub.s32 0, %v330
    %v332 = vrot.slane %v327, %v331
    %vm334 = vcmask 424960
    %v336 = vsel %vm334, %v319, 0
    %vm338 = vcmask 1043456
    %v340 = vsel %vm338, %v326, 0
    %342 = vmatprep.subr.mxu0 0.0
    %343 = vmatpush1.msra.mxu0 0.0
    %344 = vmatprep.subr.mxu0 0.0
    %345 = vmatpush1.msra.mxu0 0.0
    %346 = vmatprep.subr.mxu0 0.0
    %347 = vmatpush1.msra.mxu0 0.0
    %348 = vmatprep.subr.mxu0 0.0
    %349 = vmatpush1.msra.mxu0 0.0
    %350 = vmatprep.subr.mxu0 0.0
    %351 = vmatpush1.msra.mxu0 0.0
    %352 = vmatprep.subr.mxu0 0.0
    %353 = vmatpush1.msra.mxu0 0.0
    %354 = vmatprep.subr.mxu0 0.0
    %355 = vmatpush1.msra.mxu0 0.0
    %356 = vmatprep.subr.mxu0 0.0
    %357 = vmatpush1.msra.mxu0 0.0
    %358 = vmatprep.subr.mxu0 0.0
    %359 = vmatpush1.msra.mxu0 0.0
    %360 = vmatprep.subr.mxu0 0.0
    %361 = vmatpush1.msra.mxu0 %v340
    %362 = vmatprep.subr.mxu0 0.0
    %363 = vmatpush1.msra.mxu0 %v325
    %364 = vmatprep.subr.mxu0 0.0
    %365 = vmatpush1.msra.mxu0 %v324
    %366 = vmatprep.subr.mxu0 0.0
    %367 = vmatpush1.msra.mxu0 %v323
    %368 = vmatprep.subr.mxu0 0.0
    %369 = vmatpush1.msra.mxu0 %v322
    %370 = vmatprep.subr.mxu0 0.0
    %371 = vmatpush1.msra.mxu0 %v321
    %372 = vmatprep.subr.mxu0 0.0
    %373 = vmatpush1.msra.mxu0 %v320
    %374 = vmatprep.subr.mxu0 0.0
    %375 = vmatpush2.msra.mxu0 0.0
    %376 = vmatprep.subr.mxu0 0.0
    %377 = vmatpush2.msra.mxu0 0.0
    %378 = vmatprep.subr.mxu0 0.0
    %379 = vmatpush2.msra.mxu0 0.0
    %380 = vmatprep.subr.mxu0 0.0
    %381 = vmatpush2.msra.mxu0 0.0
    %382 = vmatprep.subr.mxu0 0.0
    %383 = vmatpush2.msra.mxu0 0.0
    %384 = vmatprep.subr.mxu0 0.0
    %385 = vmatpush2.msra.mxu0 0.0
    %386 = vmatprep.subr.mxu0 0.0
    %387 = vmatpush2.msra.mxu0 0.0
    %388 = vmatprep.subr.mxu0 0.0
    %389 = vmatpush2.msra.mxu0 0.0
    %390 = vmatprep.subr.mxu0 0.0
    %391 = vmatpush2.msra.mxu0 0.0
    %392 = vmatprep.subr.mxu0 0.0
    %393 = vmatpush2.msra.mxu0 0.0
    %394 = vmatprep.subr.mxu0 0.0
    %395 = vmatpush2.msra.mxu0 0.0
    %396 = vmatprep.subr.mxu0 0.0
    %397 = vmatpush2.msra.mxu0 0.0
    %398 = vmatprep.subr.mxu0 0.0
    %399 = vmatpush2.msra.mxu0 0.0
    %400 = vmatprep.subr.mxu0 0.0
    %401 = vmatpush2.msra.mxu0 0.0
    %402 = vmatprep.subr.mxu0 0.0
    %403 = vmatpush2.msra.mxu0 0.0
    %404 = vmatprep.subr.mxu0 0.0
    %405 = vmatpush2.msra.mxu0 0.0
    %406 = vmatprep.mubr.f32.mxu0 0.0
    %407 = vmatmul.mubr.f32.gmra.mxu0 %v336
    %v408 = vpop.f32.mrf.mxu0
    %v409 = vadd.f32 %v332, %v408
    %v410 = vpop.f32.mrf.mxu0
    %411 = vdwg.mxu0
    %v412 = vtanh.pop %v409
    %v413 = vld [vmem:[%s5] sm:$0xff]
    %v414 = vld [vmem:[%s5 + $0x8] sm:$0xff]
    %v415 = vld [vmem:[%s5 + $0x10] sm:$0xff]
    %v416 = vld [vmem:[%s5 + $0x18] sm:$0xff]
    %v417 = vld [vmem:[%s5 + $0x20] sm:$0xff]
    %v418 = vld [vmem:[%s5 + $0x28] sm:$0xff]
    %v419 = vld [vmem:[%s5 + $0x30] sm:$0xff]
    %v420 = vld [vmem:[%s5 + $0x38] sm:$0xff]
    %v421 = vld [vmem:[%s5 + $0x40] sm:$0xff]
    %v422 = vld [vmem:[%s5 + $0x48] sm:$0xff]
    %v423 = vld [vmem:[%s5 + $0x50] sm:$0xff]
    %v424 = vld [vmem:[%s5 + $0x58] sm:$0xff]
    %v425 = vld [vmem:[%s5 + $0x60] sm:$0xff]
    %v426 = vld [vmem:[%s5 + $0x68] sm:$0xff]
    %v427 = vld [vmem:[%s5 + $0x70] sm:$0xff]
    %v428 = vld [vmem:[%s5 + $0x78] sm:$0xff]
    %v429 = vld [vmem:[%s6] sm:$0x1]
    %v431 = vlaneseq
    %v432 = vshrl.u32 %v431, 7
    %v433 = vsub.s32 0, %v432
    %v434 = vrot.slane %v429, %v433
    %436 = vmatprep.subr.mxu0 0.0
    %437 = vmatpush1.msra.mxu0 %v428
    %438 = vmatprep.subr.mxu0 0.0
    %439 = vmatpush1.msra.mxu0 %v427
    %440 = vmatprep.subr.mxu0 0.0
    %441 = vmatpush1.msra.mxu0 %v426
    %442 = vmatprep.subr.mxu0 0.0
    %443 = vmatpush1.msra.mxu0 %v425
    %444 = vmatprep.subr.mxu0 0.0
    %445 = vmatpush1.msra.mxu0 %v424
    %446 = vmatprep.subr.mxu0 0.0
    %447 = vmatpush1.msra.mxu0 %v423
    %448 = vmatprep.subr.mxu0 0.0
    %449 = vmatpush1.msra.mxu0 %v422
    %450 = vmatprep.subr.mxu0 0.0
    %451 = vmatpush1.msra.mxu0 %v421
    %452 = vmatprep.subr.mxu0 0.0
    %453 = vmatpush1.msra.mxu0 %v420
    %454 = vmatprep.subr.mxu0 0.0
    %455 = vmatpush1.msra.mxu0 %v419
    %456 = vmatprep.subr.mxu0 0.0
    %457 = vmatpush1.msra.mxu0 %v418
    %458 = vmatprep.subr.mxu0 0.0
    %459 = vmatpush1.msra.mxu0 %v417
    %460 = vmatprep.subr.mxu0 0.0
    %461 = vmatpush1.msra.mxu0 %v416
    %462 = vmatprep.subr.mxu0 0.0
    %463 = vmatpush1.msra.mxu0 %v415
    %464 = vmatprep.subr.mxu0 0.0
    %465 = vmatpush1.msra.mxu0 %v414
    %466 = vmatprep.subr.mxu0 0.0
    %467 = vmatpush1.msra.mxu0 %v413
    %468 = vmatprep.subr.mxu0 0.0
    %469 = vmatpush2.msra.mxu0 0.0
    %470 = vmatprep.subr.mxu0 0.0
    %471 = vmatpush2.msra.mxu0 0.0
    %472 = vmatprep.subr.mxu0 0.0
    %473 = vmatpush2.msra.mxu0 0.0
    %474 = vmatprep.subr.mxu0 0.0
    %475 = vmatpush2.msra.mxu0 0.0
    %476 = vmatprep.subr.mxu0 0.0
    %477 = vmatpush2.msra.mxu0 0.0
    %478 = vmatprep.subr.mxu0 0.0
    %479 = vmatpush2.msra.mxu0 0.0
    %480 = vmatprep.subr.mxu0 0.0
    %481 = vmatpush2.msra.mxu0 0.0
    %482 = vmatprep.subr.mxu0 0.0
    %483 = vmatpush2.msra.mxu0 0.0
    %484 = vmatprep.subr.mxu0 0.0
    %485 = vmatpush2.msra.mxu0 0.0
    %486 = vmatprep.subr.mxu0 0.0
    %487 = vmatpush2.msra.mxu0 0.0
    %488 = vmatprep.subr.mxu0 0.0
    %489 = vmatpush2.msra.mxu0 0.0
    %490 = vmatprep.subr.mxu0 0.0
    %491 = vmatpush2.msra.mxu0 0.0
    %492 = vmatprep.subr.mxu0 0.0
    %493 = vmatpush2.msra.mxu0 0.0
    %494 = vmatprep.subr.mxu0 0.0
    %495 = vmatpush2.msra.mxu0 0.0
    %496 = vmatprep.subr.mxu0 0.0
    %497 = vmatpush2.msra.mxu0 0.0
    %498 = vmatprep.subr.mxu0 0.0
    %499 = vmatpush2.msra.mxu0 0.0
    %500 = vmatprep.mubr.f32.mxu0 0.0
    %501 = vmatmul.mubr.f32.gmra.mxu0 %v412
    %v502 = vpop.f32.mrf.mxu0
    %v503 = vadd.f32 %v434, %v502
    %v504 = vpop.f32.mrf.mxu0
    %505 = vdwg.mxu0
    %v506 = vtanh.pop %v503
    %v507 = vld [vmem:[%s2] sm:$0xff]
    %v508 = vld [vmem:[%s13] sm:$0xf]
    %vm509 = vcmask 31744
    %v511 = vsel %vm509, %v507, 0
    %v514 = vsel %vm338, %v508, 0
    %516 = vmatprep.subr.mxu0 0.0
    %517 = vmatpush1.msra.mxu0 0.0
    %518 = vmatprep.subr.mxu0 0.0
    %519 = vmatpush1.msra.mxu0 0.0
    %520 = vmatprep.subr.mxu0 0.0
    %521 = vmatpush1.msra.mxu0 0.0
    %522 = vmatprep.subr.mxu0 0.0
    %523 = vmatpush1.msra.mxu0 0.0
    %524 = vmatprep.subr.mxu0 0.0
    %525 = vmatpush1.msra.mxu0 0.0
    %526 = vmatprep.subr.mxu0 0.0
    %527 = vmatpush1.msra.mxu0 0.0
    %528 = vmatprep.subr.mxu0 0.0
    %529 = vmatpush1.msra.mxu0 0.0
    %530 = vmatprep.subr.mxu0 0.0
    %531 = vmatpush1.msra.mxu0 0.0
    %532 = vmatprep.subr.mxu0 0.0
    %533 = vmatpush1.msra.mxu0 0.0
    %534 = vmatprep.subr.mxu0 0.0
    %535 = vmatpush1.msra.mxu0 0.0
    %536 = vmatprep.subr.mxu0 0.0
    %537 = vmatpush1.msra.mxu0 0.0
    %538 = vmatprep.subr.mxu0 0.0
    %539 = vmatpush1.msra.mxu0 0.0
    %540 = vmatprep.subr.mxu0 0.0
    %541 = vmatpush1.msra.mxu0 0.0
    %542 = vmatprep.subr.mxu0 0.0
    %543 = vmatpush1.msra.mxu0 0.0
    %544 = vmatprep.subr.mxu0 0.0
    %545 = vmatpush1.msra.mxu0 0.0
    %546 = vmatprep.subr.mxu0 0.0
    %547 = vmatpush1.msra.mxu0 %v514
    %548 = vmatprep.subr.mxu0 0.0
    %549 = vmatpush2.msra.mxu0 0.0
    %550 = vmatprep.subr.mxu0 0.0
    %551 = vmatpush2.msra.mxu0 0.0
    %552 = vmatprep.subr.mxu0 0.0
    %553 = vmatpush2.msra.mxu0 0.0
    %554 = vmatprep.subr.mxu0 0.0
    %555 = vmatpush2.msra.mxu0 0.0
    %556 = vmatprep.subr.mxu0 0.0
    %557 = vmatpush2.msra.mxu0 0.0
    %558 = vmatprep.subr.mxu0 0.0
    %559 = vmatpush2.msra.mxu0 0.0
    %560 = vmatprep.subr.mxu0 0.0
    %561 = vmatpush2.msra.mxu0 0.0
    %562 = vmatprep.subr.mxu0 0.0
    %563 = vmatpush2.msra.mxu0 0.0
    %564 = vmatprep.subr.mxu0 0.0
    %565 = vmatpush2.msra.mxu0 0.0
    %566 = vmatprep.subr.mxu0 0.0
    %567 = vmatpush2.msra.mxu0 0.0
    %568 = vmatprep.subr.mxu0 0.0
    %569 = vmatpush2.msra.mxu0 0.0
    %570 = vmatprep.subr.mxu0 0.0
    %571 = vmatpush2.msra.mxu0 0.0
    %572 = vmatprep.subr.mxu0 0.0
    %573 = vmatpush2.msra.mxu0 0.0
    %574 = vmatprep.subr.mxu0 0.0
    %575 = vmatpush2.msra.mxu0 0.0
    %576 = vmatprep.subr.mxu0 0.0
    %577 = vmatpush2.msra.mxu0 0.0
    %578 = vmatprep.subr.mxu0 0.0
    %579 = vmatpush2.msra.mxu0 0.0
    %580 = vmatprep.mubr.f32.mxu0 0.0
    %581 = vmatmul.mubr.f32.gmra.mxu0 %v511
    %v582 = vpop.f32.mrf.mxu0
    %v583 = vadd.f32 0.0, %v582
    %v584 = vpop.f32.mrf.mxu0
    %585 = vdwg.mxu0
    %v586 = vld [vmem:[#allocation19] sm:$0xf]
    %v588 = vsel %vm338, %v586, 0
    %590 = vmatprep.subr.mxu0 0.0
    %591 = vmatpush1.msra.mxu0 0.0
    %592 = vmatprep.subr.mxu0 0.0
    %593 = vmatpush1.msra.mxu0 0.0
    %594 = vmatprep.subr.mxu0 0.0
    %595 = vmatpush1.msra.mxu0 0.0
    %596 = vmatprep.subr.mxu0 0.0
    %597 = vmatpush1.msra.mxu0 0.0
    %598 = vmatprep.subr.mxu0 0.0
    %599 = vmatpush1.msra.mxu0 0.0
    %600 = vmatprep.subr.mxu0 0.0
    %601 = vmatpush1.msra.mxu0 0.0
    %602 = vmatprep.subr.mxu0 0.0
    %603 = vmatpush1.msra.mxu0 0.0
    %604 = vmatprep.subr.mxu0 0.0
    %605 = vmatpush1.msra.mxu0 0.0
    %606 = vmatprep.subr.mxu0 0.0
    %607 = vmatpush1.msra.mxu0 0.0
    %608 = vmatprep.subr.mxu0 0.0
    %609 = vmatpush1.msra.mxu0 0.0
    %610 = vmatprep.subr.mxu0 0.0
    %611 = vmatpush1.msra.mxu0 0.0
    %612 = vmatprep.subr.mxu0 0.0
    %613 = vmatpush1.msra.mxu0 0.0
    %614 = vmatprep.subr.mxu0 0.0
    %615 = vmatpush1.msra.mxu0 0.0
    %616 = vmatprep.subr.mxu0 0.0
    %617 = vmatpush1.msra.mxu0 0.0
    %618 = vmatprep.subr.mxu0 0.0
    %619 = vmatpush1.msra.mxu0 0.0
    %620 = vmatprep.subr.mxu0 0.0
    %621 = vmatpush1.msra.mxu0 %v588
    %622 = vmatprep.subr.mxu0 0.0
    %623 = vmatpush2.msra.mxu0 0.0
    %624 = vmatprep.subr.mxu0 0.0
    %625 = vmatpush2.msra.mxu0 0.0
    %626 = vmatprep.subr.mxu0 0.0
    %627 = vmatpush2.msra.mxu0 0.0
    %628 = vmatprep.subr.mxu0 0.0
    %629 = vmatpush2.msra.mxu0 0.0
    %630 = vmatprep.subr.mxu0 0.0
    %631 = vmatpush2.msra.mxu0 0.0
    %632 = vmatprep.subr.mxu0 0.0
    %633 = vmatpush2.msra.mxu0 0.0
    %634 = vmatprep.subr.mxu0 0.0
    %635 = vmatpush2.msra.mxu0 0.0
    %636 = vmatprep.subr.mxu0 0.0
    %637 = vmatpush2.msra.mxu0 0.0
    %638 = vmatprep.subr.mxu0 0.0
    %639 = vmatpush2.msra.mxu0 0.0
    %640 = vmatprep.subr.mxu0 0.0
    %641 = vmatpush2.msra.mxu0 0.0
    %642 = vmatprep.subr.mxu0 0.0
    %643 = vmatpush2.msra.mxu0 0.0
    %644 = vmatprep.subr.mxu0 0.0
    %645 = vmatpush2.msra.mxu0 0.0
    %646 = vmatprep.subr.mxu0 0.0
    %647 = vmatpush2.msra.mxu0 0.0
    %648 = vmatprep.subr.mxu0 0.0
    %649 = vmatpush2.msra.mxu0 0.0
    %650 = vmatprep.subr.mxu0 0.0
    %651 = vmatpush2.msra.mxu0 0.0
    %652 = vmatprep.subr.mxu0 0.0
    %653 = vmatpush2.msra.mxu0 0.0
    %654 = vmatprep.mubr.f32.mxu0 0.0
    %655 = vmatmul.mubr.f32.gmra.mxu0 %v511
    %v656 = vpop.f32.mrf.mxu0
    %v657 = vadd.f32 0.0, %v656
    %v658 = vpop.f32.mrf.mxu0
    %659 = vdwg.mxu0
    %v660 = vld [vmem:[#allocation4] sm:$0xff]
    %v661 = vld [vmem:[#allocation4 + $0x8] sm:$0xff]
    %v662 = vld [vmem:[#allocation4 + $0x10] sm:$0xff]
    %v663 = vld [vmem:[#allocation4 + $0x18] sm:$0xff]
    %v664 = vld [vmem:[#allocation4 + $0x20] sm:$0xff]
    %v665 = vld [vmem:[#allocation4 + $0x28] sm:$0xff]
    %v666 = vld [vmem:[#allocation4 + $0x30] sm:$0xff]
    %v667 = vld [vmem:[#allocation4 + $0x38] sm:$0xff]
    %v668 = vld [vmem:[#allocation4 + $0x40] sm:$0xff]
    %v669 = vld [vmem:[#allocation4 + $0x48] sm:$0xff]
    %v670 = vld [vmem:[#allocation4 + $0x50] sm:$0xff]
    %v671 = vld [vmem:[#allocation4 + $0x58] sm:$0xff]
    %v672 = vld [vmem:[#allocation4 + $0x60] sm:$0xff]
    %v673 = vld [vmem:[#allocation4 + $0x68] sm:$0xff]
    %v674 = vld [vmem:[#allocation4 + $0x70] sm:$0xff]
    %v675 = vld [vmem:[#allocation4 + $0x78] sm:$0xff]
    %v676 = vld [vmem:[#allocation4 + $0x80] sm:$0xff]
    %v677 = vld [vmem:[#allocation4 + $0x88] sm:$0xff]
    %v678 = vld [vmem:[#allocation4 + $0x90] sm:$0xff]
    %v679 = vld [vmem:[#allocation4 + $0x98] sm:$0xff]
    %v680 = vld [vmem:[#allocation4 + $0xa0] sm:$0xff]
    %v681 = vld [vmem:[#allocation4 + $0xa8] sm:$0xff]
    %v682 = vld [vmem:[#allocation4 + $0xb0] sm:$0xff]
    %v683 = vld [vmem:[#allocation4 + $0xb8] sm:$0xff]
    %v684 = vld [vmem:[#allocation4 + $0xc0] sm:$0xff]
    %v685 = vld [vmem:[#allocation4 + $0xc8] sm:$0xff]
    %v686 = vld [vmem:[#allocation4 + $0xd0] sm:$0xff]
    %v687 = vld [vmem:[#allocation4 + $0xd8] sm:$0xff]
    %v688 = vld [vmem:[#allocation4 + $0xe0] sm:$0xff]
    %v689 = vld [vmem:[#allocation4 + $0xe8] sm:$0xff]
    %v690 = vld [vmem:[#allocation4 + $0xf0] sm:$0xff]
    %v691 = vld [vmem:[#allocation4 + $0xf8] sm:$0xff]
    %v692 = vld [vmem:[#allocation4 + $0x100] sm:$0xff]
    %v693 = vld [vmem:[#allocation4 + $0x108] sm:$0xff]
    %v694 = vld [vmem:[#allocation4 + $0x110] sm:$0xff]
    %v695 = vld [vmem:[#allocation4 + $0x118] sm:$0xff]
    %v696 = vld [vmem:[#allocation4 + $0x120] sm:$0xff]
    %v697 = vld [vmem:[#allocation4 + $0x128] sm:$0xff]
    %v698 = vld [vmem:[#allocation4 + $0x130] sm:$0xff]
    %v699 = vld [vmem:[#allocation4 + $0x138] sm:$0xff]
    %v700 = vld [vmem:[#allocation4 + $0x140] sm:$0xff]
    %v701 = vld [vmem:[#allocation4 + $0x148] sm:$0xff]
    %v702 = vld [vmem:[#allocation4 + $0x150] sm:$0xff]
    %v703 = vld [vmem:[#allocation4 + $0x158] sm:$0xff]
    %v704 = vld [vmem:[#allocation4 + $0x160] sm:$0xff]
    %v705 = vld [vmem:[#allocation4 + $0x168] sm:$0xff]
    %v706 = vld [vmem:[#allocation4 + $0x170] sm:$0xff]
    %v707 = vld [vmem:[#allocation4 + $0x178] sm:$0xff]
    %v708 = vld [vmem:[#allocation4 + $0x180] sm:$0xff]
    %v709 = vld [vmem:[#allocation4 + $0x188] sm:$0xff]
    %v710 = vld [vmem:[#allocation4 + $0x190] sm:$0xff]
    %v711 = vld [vmem:[#allocation4 + $0x198] sm:$0xff]
    %v712 = vld [vmem:[#allocation4 + $0x1a0] sm:$0xff]
    %v713 = vld [vmem:[#allocation4 + $0x1a8] sm:$0xff]
    %v714 = vld [vmem:[#allocation4 + $0x1b0] sm:$0xff]
    %v715 = vld [vmem:[#allocation4 + $0x1b8] sm:$0xff]
    %v716 = vld [vmem:[#allocation4 + $0x1c0] sm:$0xff]
    %v717 = vld [vmem:[#allocation4 + $0x1c8] sm:$0xff]
    %v718 = vld [vmem:[#allocation4 + $0x1d0] sm:$0xff]
    %v719 = vld [vmem:[#allocation4 + $0x1d8] sm:$0xff]
    %v720 = vld [vmem:[#allocation4 + $0x1e0] sm:$0xff]
    %v721 = vld [vmem:[#allocation4 + $0x1e8] sm:$0xff]
    %v722 = vld [vmem:[#allocation4 + $0x1f0] sm:$0xff]
    %v723 = vld [vmem:[#allocation4 + $0x1f8] sm:$0xff]
    %v724 = vld [vmem:[#allocation4 + $0x200] sm:$0xff]
    %v725 = vld [vmem:[#allocation4 + $0x208] sm:$0xff]
    %v726 = vld [vmem:[#allocation4 + $0x210] sm:$0xff]
    %v727 = vld [vmem:[#allocation4 + $0x218] sm:$0xff]
    %v728 = vld [vmem:[#allocation4 + $0x220] sm:$0xff]
    %v729 = vld [vmem:[#allocation4 + $0x228] sm:$0xff]
    %v730 = vld [vmem:[#allocation4 + $0x230] sm:$0xff]
    %v731 = vld [vmem:[#allocation4 + $0x238] sm:$0xff]
    %v732 = vld [vmem:[#allocation4 + $0x240] sm:$0xff]
    %v733 = vld [vmem:[#allocation4 + $0x248] sm:$0xff]
    %v734 = vld [vmem:[#allocation4 + $0x250] sm:$0xff]
    %v735 = vld [vmem:[#allocation4 + $0x258] sm:$0xff]
    %v736 = vld [vmem:[#allocation4 + $0x260] sm:$0xff]
    %v737 = vld [vmem:[#allocation4 + $0x268] sm:$0xff]
    %v738 = vld [vmem:[#allocation4 + $0x270] sm:$0xff]
    %v739 = vld [vmem:[#allocation4 + $0x278] sm:$0xff]
    %v740 = vld [vmem:[#allocation4 + $0x280] sm:$0xff]
    %v741 = vld [vmem:[#allocation4 + $0x288] sm:$0xff]
    %v742 = vld [vmem:[#allocation4 + $0x290] sm:$0xff]
    %v743 = vld [vmem:[#allocation4 + $0x298] sm:$0xff]
    %v744 = vld [vmem:[#allocation4 + $0x2a0] sm:$0xff]
    %v745 = vld [vmem:[#allocation4 + $0x2a8] sm:$0xff]
    %v746 = vld [vmem:[#allocation4 + $0x2b0] sm:$0xff]
    %v747 = vld [vmem:[#allocation4 + $0x2b8] sm:$0xff]
    %v748 = vld [vmem:[#allocation4 + $0x2c0] sm:$0xff]
    %v749 = vld [vmem:[#allocation4 + $0x2c8] sm:$0xff]
    %v750 = vld [vmem:[#allocation4 + $0x2d0] sm:$0xff]
    %v751 = vld [vmem:[#allocation4 + $0x2d8] sm:$0xff]
    %v752 = vld [vmem:[#allocation4 + $0x2e0] sm:$0xff]
    %v753 = vld [vmem:[#allocation4 + $0x2e8] sm:$0xff]
    %v754 = vld [vmem:[#allocation4 + $0x2f0] sm:$0xff]
    %v755 = vld [vmem:[#allocation4 + $0x2f8] sm:$0xff]
    %v756 = vld [vmem:[#allocation4 + $0x300] sm:$0xff]
    %v757 = vld [vmem:[#allocation4 + $0x308] sm:$0xff]
    %v758 = vld [vmem:[#allocation4 + $0x310] sm:$0xff]
    %v759 = vld [vmem:[#allocation4 + $0x318] sm:$0xff]
    %v760 = vld [vmem:[#allocation4 + $0x320] sm:$0xff]
    %v761 = vld [vmem:[#allocation4 + $0x328] sm:$0xff]
    %v762 = vld [vmem:[#allocation4 + $0x330] sm:$0xff]
    %v763 = vld [vmem:[#allocation4 + $0x338] sm:$0xff]
    %v764 = vld [vmem:[#allocation4 + $0x340] sm:$0xff]
    %v765 = vld [vmem:[#allocation4 + $0x348] sm:$0xff]
    %v766 = vld [vmem:[#allocation4 + $0x350] sm:$0xff]
    %v767 = vld [vmem:[#allocation4 + $0x358] sm:$0xff]
    %v768 = vld [vmem:[#allocation4 + $0x360] sm:$0xff]
    %v769 = vld [vmem:[#allocation4 + $0x368] sm:$0xff]
    %v770 = vld [vmem:[#allocation4 + $0x370] sm:$0xff]
    %v771 = vld [vmem:[#allocation4 + $0x378] sm:$0xff]
    %v772 = vld [vmem:[#allocation4 + $0x380] sm:$0xff]
    %v773 = vld [vmem:[#allocation4 + $0x388] sm:$0xff]
    %v774 = vld [vmem:[#allocation4 + $0x390] sm:$0xff]
    %v775 = vld [vmem:[#allocation4 + $0x398] sm:$0xff]
    %v776 = vld [vmem:[#allocation4 + $0x3a0] sm:$0xff]
    %v777 = vld [vmem:[#allocation4 + $0x3a8] sm:$0xff]
    %v778 = vld [vmem:[#allocation4 + $0x3b0] sm:$0xff]
    %v779 = vld [vmem:[#allocation4 + $0x3b8] sm:$0xff]
    %v780 = vld [vmem:[#allocation4 + $0x3c0] sm:$0xff]
    %v781 = vld [vmem:[#allocation4 + $0x3c8] sm:$0xff]
    %v782 = vld [vmem:[#allocation4 + $0x3d0] sm:$0xff]
    %v783 = vld [vmem:[#allocation4 + $0x3d8] sm:$0xff]
    %v784 = vld [vmem:[#allocation4 + $0x3e0] sm:$0xff]
    %v785 = vld [vmem:[#allocation4 + $0x3e8] sm:$0xff]
    %v786 = vld [vmem:[#allocation4 + $0x3f0] sm:$0xff]
    %v787 = vld [vmem:[#allocation4 + $0x3f8] sm:$0xff]
    %v788 = vld [vmem:[#allocation4 + $0x400] sm:$0xff]
    %v789 = vld [vmem:[#allocation4 + $0x408] sm:$0xff]
    %v790 = vld [vmem:[#allocation4 + $0x410] sm:$0xff]
    %v791 = vld [vmem:[#allocation4 + $0x418] sm:$0xff]
    %v792 = vld [vmem:[#allocation4 + $0x420] sm:$0xff]
    %v793 = vld [vmem:[#allocation4 + $0x428] sm:$0xff]
    %v794 = vld [vmem:[#allocation4 + $0x430] sm:$0xff]
    %v795 = vld [vmem:[#allocation4 + $0x438] sm:$0xff]
    %v796 = vld [vmem:[#allocation4 + $0x440] sm:$0xff]
    %v797 = vld [vmem:[#allocation4 + $0x448] sm:$0xff]
    %v798 = vld [vmem:[#allocation4 + $0x450] sm:$0xff]
    %v799 = vld [vmem:[#allocation4 + $0x458] sm:$0xff]
    %v800 = vld [vmem:[#allocation4 + $0x460] sm:$0xff]
    %v801 = vld [vmem:[#allocation4 + $0x468] sm:$0xff]
    %v802 = vld [vmem:[#allocation4 + $0x470] sm:$0xff]
    %v803 = vld [vmem:[#allocation4 + $0x478] sm:$0xff]
    %v804 = vld [vmem:[#allocation4 + $0x480] sm:$0xff]
    %v805 = vld [vmem:[#allocation4 + $0x488] sm:$0xff]
    %v806 = vld [vmem:[#allocation4 + $0x490] sm:$0xff]
    %v807 = vld [vmem:[#allocation4 + $0x498] sm:$0xff]
    %v808 = vld [vmem:[#allocation4 + $0x4a0] sm:$0xff]
    %v809 = vld [vmem:[#allocation4 + $0x4a8] sm:$0xff]
    %v810 = vld [vmem:[#allocation4 + $0x4b0] sm:$0xff]
    %v811 = vld [vmem:[#allocation4 + $0x4b8] sm:$0xff]
    %v812 = vld [vmem:[#allocation4 + $0x4c0] sm:$0xff]
    %v813 = vld [vmem:[#allocation4 + $0x4c8] sm:$0xff]
    %v814 = vld [vmem:[#allocation4 + $0x4d0] sm:$0xff]
    %v815 = vld [vmem:[#allocation4 + $0x4d8] sm:$0xff]
    %v816 = vld [vmem:[#allocation4 + $0x4e0] sm:$0xff]
    %v817 = vld [vmem:[#allocation4 + $0x4e8] sm:$0xff]
    %v818 = vld [vmem:[#allocation4 + $0x4f0] sm:$0xff]
    %v819 = vld [vmem:[#allocation4 + $0x4f8] sm:$0xff]
    %v820 = vld [vmem:[#allocation4 + $0x500] sm:$0xff]
    %v821 = vld [vmem:[#allocation4 + $0x508] sm:$0xff]
    %v822 = vld [vmem:[#allocation4 + $0x510] sm:$0xff]
    %v823 = vld [vmem:[#allocation4 + $0x518] sm:$0xff]
    %v824 = vld [vmem:[#allocation4 + $0x520] sm:$0xff]
    %v825 = vld [vmem:[#allocation4 + $0x528] sm:$0xff]
    %v826 = vld [vmem:[#allocation4 + $0x530] sm:$0xff]
    %v827 = vld [vmem:[#allocation4 + $0x538] sm:$0xff]
    %v828 = vld [vmem:[#allocation4 + $0x540] sm:$0xff]
    %v829 = vld [vmem:[#allocation4 + $0x548] sm:$0xff]
    %v830 = vld [vmem:[#allocation4 + $0x550] sm:$0xff]
    %v831 = vld [vmem:[#allocation4 + $0x558] sm:$0xff]
    %v832 = vld [vmem:[#allocation4 + $0x560] sm:$0xff]
    %v833 = vld [vmem:[#allocation4 + $0x568] sm:$0xff]
    %v834 = vld [vmem:[#allocation4 + $0x570] sm:$0xff]
    %v835 = vld [vmem:[#allocation4 + $0x578] sm:$0xff]
    %v836 = vld [vmem:[#allocation4 + $0x580] sm:$0xff]
    %v837 = vld [vmem:[#allocation4 + $0x588] sm:$0xff]
    %v838 = vld [vmem:[#allocation4 + $0x590] sm:$0xff]
    %v839 = vld [vmem:[#allocation4 + $0x598] sm:$0xff]
    %v840 = vld [vmem:[#allocation4 + $0x5a0] sm:$0xff]
    %v841 = vld [vmem:[#allocation4 + $0x5a8] sm:$0xff]
    %v842 = vld [vmem:[#allocation4 + $0x5b0] sm:$0xff]
    %v843 = vld [vmem:[#allocation4 + $0x5b8] sm:$0xff]
    %v844 = vld [vmem:[#allocation4 + $0x5c0] sm:$0xff]
    %v845 = vld [vmem:[#allocation4 + $0x5c8] sm:$0xff]
    %v846 = vld [vmem:[#allocation4 + $0x5d0] sm:$0xff]
    %v847 = vld [vmem:[#allocation4 + $0x5d8] sm:$0xff]
    %v848 = vld [vmem:[#allocation4 + $0x5e0] sm:$0xff]
    %v849 = vld [vmem:[#allocation4 + $0x5e8] sm:$0xff]
    %v850 = vld [vmem:[#allocation4 + $0x5f0] sm:$0xff]
    %v851 = vld [vmem:[#allocation4 + $0x5f8] sm:$0xff]
    %v852 = vld [vmem:[%s8] sm:$0xff]
    %v853 = vld [vmem:[%s8 + $0x8] sm:$0xf]
    %v856 = vlaneseq
    %v857 = vshrl.u32 %v856, 7
    %v858 = vsub.s32 0, %v857
    %v859 = vrot.slane %v852, %v858
    %v860 = vlaneseq
    %v861 = vshrl.u32 %v860, 7
    %v862 = vsub.s32 1, %v861
    %v863 = vrot.slane %v852, %v862
    %v864 = vlaneseq
    %v865 = vshrl.u32 %v864, 7
    %v866 = vsub.s32 2, %v865
    %v867 = vrot.slane %v852, %v866
    %v868 = vlaneseq
    %v869 = vshrl.u32 %v868, 7
    %v870 = vsub.s32 3, %v869
    %v871 = vrot.slane %v852, %v870
    %v872 = vlaneseq
    %v873 = vshrl.u32 %v872, 7
    %v874 = vsub.s32 4, %v873
    %v875 = vrot.slane %v852, %v874
    %v876 = vlaneseq
    %v877 = vshrl.u32 %v876, 7
    %v878 = vsub.s32 5, %v877
    %v879 = vrot.slane %v852, %v878
    %v880 = vlaneseq
    %v881 = vshrl.u32 %v880, 7
    %v882 = vsub.s32 6, %v881
    %v883 = vrot.slane %v852, %v882
    %v884 = vlaneseq
    %v885 = vshrl.u32 %v884, 7
    %v886 = vsub.s32 7, %v885
    %v887 = vrot.slane %v852, %v886
    %v888 = vlaneseq
    %v889 = vshrl.u32 %v888, 7
    %v890 = vsub.s32 0, %v889
    %v891 = vrot.slane %v853, %v890
    %v892 = vlaneseq
    %v893 = vshrl.u32 %v892, 7
    %v894 = vsub.s32 1, %v893
    %v895 = vrot.slane %v853, %v894
    %v896 = vlaneseq
    %v897 = vshrl.u32 %v896, 7
    %v898 = vsub.s32 2, %v897
    %v899 = vrot.slane %v853, %v898
    %v900 = vlaneseq
    %v901 = vshrl.u32 %v900, 7
    %v902 = vsub.s32 3, %v901
    %v903 = vrot.slane %v853, %v902
    %916 = vmatprep.subr.mxu0 %v841
    %917 = vmatpush1.msra.mxu0 %v840
    %918 = vmatprep.subr.mxu0 %v829
    %919 = vmatpush1.msra.mxu0 %v828
    %920 = vmatprep.subr.mxu0 %v817
    %921 = vmatpush1.msra.mxu0 %v816
    %922 = vmatprep.subr.mxu0 %v805
    %923 = vmatpush1.msra.mxu0 %v804
    %924 = vmatprep.subr.mxu0 %v793
    %925 = vmatpush1.msra.mxu0 %v792
    %926 = vmatprep.subr.mxu0 %v781
    %927 = vmatpush1.msra.mxu0 %v780
    %928 = vmatprep.subr.mxu0 %v769
    %929 = vmatpush1.msra.mxu0 %v768
    %930 = vmatprep.subr.mxu0 %v757
    %931 = vmatpush1.msra.mxu0 %v756
    %932 = vmatprep.subr.mxu0 %v745
    %933 = vmatpush1.msra.mxu0 %v744
    %934 = vmatprep.subr.mxu0 %v733
    %935 = vmatpush1.msra.mxu0 %v732
    %936 = vmatprep.subr.mxu0 %v721
    %937 = vmatpush1.msra.mxu0 %v720
    %938 = vmatprep.subr.mxu0 %v709
    %939 = vmatpush1.msra.mxu0 %v708
    %940 = vmatprep.subr.mxu0 %v697
    %941 = vmatpush1.msra.mxu0 %v696
    %942 = vmatprep.subr.mxu0 %v685
    %943 = vmatpush1.msra.mxu0 %v684
    %944 = vmatprep.subr.mxu0 %v673
    %945 = vmatpush1.msra.mxu0 %v672
    %946 = vmatprep.subr.mxu0 %v661
    %947 = vmatpush1.msra.mxu0 %v660
    %948 = vmatprep.subr.mxu0 0.0
    %949 = vmatpush2.msra.mxu0 0.0
    %950 = vmatprep.subr.mxu0 0.0
    %951 = vmatpush2.msra.mxu0 0.0
    %952 = vmatprep.subr.mxu0 0.0
    %953 = vmatpush2.msra.mxu0 0.0
    %954 = vmatprep.subr.mxu0 0.0
    %955 = vmatpush2.msra.mxu0 0.0
    %956 = vmatprep.subr.mxu0 0.0
    %957 = vmatpush2.msra.mxu0 0.0
    %958 = vmatprep.subr.mxu0 0.0
    %959 = vmatpush2.msra.mxu0 0.0
    %960 = vmatprep.subr.mxu0 0.0
    %961 = vmatpush2.msra.mxu0 0.0
    %962 = vmatprep.subr.mxu0 0.0
    %963 = vmatpush2.msra.mxu0 0.0
    %964 = vmatprep.subr.mxu0 0.0
    %965 = vmatpush2.msra.mxu0 0.0
    %966 = vmatprep.subr.mxu0 0.0
    %967 = vmatpush2.msra.mxu0 0.0
    %968 = vmatprep.subr.mxu0 0.0
    %969 = vmatpush2.msra.mxu0 0.0
    %970 = vmatprep.subr.mxu0 0.0
    %971 = vmatpush2.msra.mxu0 0.0
    %972 = vmatprep.subr.mxu0 0.0
    %973 = vmatpush2.msra.mxu0 0.0
    %974 = vmatprep.subr.mxu0 0.0
    %975 = vmatpush2.msra.mxu0 0.0
    %976 = vmatprep.subr.mxu0 0.0
    %977 = vmatpush2.msra.mxu0 0.0
    %978 = vmatprep.subr.mxu0 0.0
    %979 = vmatpush2.msra.mxu0 0.0
    %980 = vmatprep.mubr.f32.mxu0 0.0
    %981 = vmatmul.mubr.f32.gmra.mxu0 %v506
    %v982 = vpop.f32.mrf.mxu0
    %v983 = vadd.f32 %v859, %v982
    %v984 = vpop.f32.mrf.mxu0
    %v985 = vadd.f32 %v863, %v984
    %986 = vdwg.mxu0
    %987 = vmatprep.subr.mxu0 %v843
    %988 = vmatpush1.msra.mxu0 %v842
    %989 = vmatprep.subr.mxu0 %v831
    %990 = vmatpush1.msra.mxu0 %v830
    %991 = vmatprep.subr.mxu0 %v819
    %992 = vmatpush1.msra.mxu0 %v818
    %993 = vmatprep.subr.mxu0 %v807
    %994 = vmatpush1.msra.mxu0 %v806
    %995 = vmatprep.subr.mxu0 %v795
    %996 = vmatpush1.msra.mxu0 %v794
    %997 = vmatprep.subr.mxu0 %v783
    %998 = vmatpush1.msra.mxu0 %v782
    %999 = vmatprep.subr.mxu0 %v771
    %1000 = vmatpush1.msra.mxu0 %v770
    %1001 = vmatprep.subr.mxu0 %v759
    %1002 = vmatpush1.msra.mxu0 %v758
    %1003 = vmatprep.subr.mxu0 %v747
    %1004 = vmatpush1.msra.mxu0 %v746
    %1005 = vmatprep.subr.mxu0 %v735
    %1006 = vmatpush1.msra.mxu0 %v734
    %1007 = vmatprep.subr.mxu0 %v723
    %1008 = vmatpush1.msra.mxu0 %v722
    %1009 = vmatprep.subr.mxu0 %v711
    %1010 = vmatpush1.msra.mxu0 %v710
    %1011 = vmatprep.subr.mxu0 %v699
    %1012 = vmatpush1.msra.mxu0 %v698
    %1013 = vmatprep.subr.mxu0 %v687
    %1014 = vmatpush1.msra.mxu0 %v686
    %1015 = vmatprep.subr.mxu0 %v675
    %1016 = vmatpush1.msra.mxu0 %v674
    %1017 = vmatprep.subr.mxu0 %v663
    %1018 = vmatpush1.msra.mxu0 %v662
    %1019 = vmatprep.subr.mxu0 0.0
    %1020 = vmatpush2.msra.mxu0 0.0
    %1021 = vmatprep.subr.mxu0 0.0
    %1022 = vmatpush2.msra.mxu0 0.0
    %1023 = vmatprep.subr.mxu0 0.0
    %1024 = vmatpush2.msra.mxu0 0.0
    %1025 = vmatprep.subr.mxu0 0.0
    %1026 = vmatpush2.msra.mxu0 0.0
    %1027 = vmatprep.subr.mxu0 0.0
    %1028 = vmatpush2.msra.mxu0 0.0
    %1029 = vmatprep.subr.mxu0 0.0
    %1030 = vmatpush2.msra.mxu0 0.0
    %1031 = vmatprep.subr.mxu0 0.0
    %1032 = vmatpush2.msra.mxu0 0.0
    %1033 = vmatprep.subr.mxu0 0.0
    %1034 = vmatpush2.msra.mxu0 0.0
    %1035 = vmatprep.subr.mxu0 0.0
    %1036 = vmatpush2.msra.mxu0 0.0
    %1037 = vmatprep.subr.mxu0 0.0
    %1038 = vmatpush2.msra.mxu0 0.0
    %1039 = vmatprep.subr.mxu0 0.0
    %1040 = vmatpush2.msra.mxu0 0.0
    %1041 = vmatprep.subr.mxu0 0.0
    %1042 = vmatpush2.msra.mxu0 0.0
    %1043 = vmatprep.subr.mxu0 0.0
    %1044 = vmatpush2.msra.mxu0 0.0
    %1045 = vmatprep.subr.mxu0 0.0
    %1046 = vmatpush2.msra.mxu0 0.0
    %1047 = vmatprep.subr.mxu0 0.0
    %1048 = vmatpush2.msra.mxu0 0.0
    %1049 = vmatprep.subr.mxu0 0.0
    %1050 = vmatpush2.msra.mxu0 0.0
    %1051 = vmatprep.mubr.f32.mxu0 0.0
    %1052 = vmatmul.mubr.f32.gmra.mxu0 %v506
    %v1053 = vpop.f32.mrf.mxu0
    %v1054 = vadd.f32 %v867, %v1053
    %v1055 = vpop.f32.mrf.mxu0
    %v1056 = vadd.f32 %v871, %v1055
    %1057 = vdwg.mxu0
    %1058 = vmatprep.subr.mxu0 %v845
    %1059 = vmatpush1.msra.mxu0 %v844
    %1060 = vmatprep.subr.mxu0 %v833
    %1061 = vmatpush1.msra.mxu0 %v832
    %1062 = vmatprep.subr.mxu0 %v821
    %1063 = vmatpush1.msra.mxu0 %v820
    %1064 = vmatprep.subr.mxu0 %v809
    %1065 = vmatpush1.msra.mxu0 %v808
    %1066 = vmatprep.subr.mxu0 %v797
    %1067 = vmatpush1.msra.mxu0 %v796
    %1068 = vmatprep.subr.mxu0 %v785
    %1069 = vmatpush1.msra.mxu0 %v784
    %1070 = vmatprep.subr.mxu0 %v773
    %1071 = vmatpush1.msra.mxu0 %v772
    %1072 = vmatprep.subr.mxu0 %v761
    %1073 = vmatpush1.msra.mxu0 %v760
    %1074 = vmatprep.subr.mxu0 %v749
    %1075 = vmatpush1.msra.mxu0 %v748
    %1076 = vmatprep.subr.mxu0 %v737
    %1077 = vmatpush1.msra.mxu0 %v736
    %1078 = vmatprep.subr.mxu0 %v725
    %1079 = vmatpush1.msra.mxu0 %v724
    %1080 = vmatprep.subr.mxu0 %v713
    %1081 = vmatpush1.msra.mxu0 %v712
    %1082 = vmatprep.subr.mxu0 %v701
    %1083 = vmatpush1.msra.mxu0 %v700
    %1084 = vmatprep.subr.mxu0 %v689
    %1085 = vmatpush1.msra.mxu0 %v688
    %1086 = vmatprep.subr.mxu0 %v677
    %1087 = vmatpush1.msra.mxu0 %v676
    %1088 = vmatprep.subr.mxu0 %v665
    %1089 = vmatpush1.msra.mxu0 %v664
    %1090 = vmatprep.subr.mxu0 0.0
    %1091 = vmatpush2.msra.mxu0 0.0
    %1092 = vmatprep.subr.mxu0 0.0
    %1093 = vmatpush2.msra.mxu0 0.0
    %1094 = vmatprep.subr.mxu0 0.0
    %1095 = vmatpush2.msra.mxu0 0.0
    %1096 = vmatprep.subr.mxu0 0.0
    %1097 = vmatpush2.msra.mxu0 0.0
    %1098 = vmatprep.subr.mxu0 0.0
    %1099 = vmatpush2.msra.mxu0 0.0
    %1100 = vmatprep.subr.mxu0 0.0
    %1101 = vmatpush2.msra.mxu0 0.0
    %1102 = vmatprep.subr.mxu0 0.0
    %1103 = vmatpush2.msra.mxu0 0.0
    %1104 = vmatprep.subr.mxu0 0.0
    %1105 = vmatpush2.msra.mxu0 0.0
    %1106 = vmatprep.subr.mxu0 0.0
    %1107 = vmatpush2.msra.mxu0 0.0
    %1108 = vmatprep.subr.mxu0 0.0
    %1109 = vmatpush2.msra.mxu0 0.0
    %1110 = vmatprep.subr.mxu0 0.0
    %1111 = vmatpush2.msra.mxu0 0.0
    %1112 = vmatprep.subr.mxu0 0.0
    %1113 = vmatpush2.msra.mxu0 0.0
    %1114 = vmatprep.subr.mxu0 0.0
    %1115 = vmatpush2.msra.mxu0 0.0
    %1116 = vmatprep.subr.mxu0 0.0
    %1117 = vmatpush2.msra.mxu0 0.0
    %1118 = vmatprep.subr.mxu0 0.0
    %1119 = vmatpush2.msra.mxu0 0.0
    %1120 = vmatprep.subr.mxu0 0.0
    %1121 = vmatpush2.msra.mxu0 0.0
    %1122 = vmatprep.mubr.f32.mxu0 0.0
    %1123 = vmatmul.mubr.f32.gmra.mxu0 %v506
    %v1124 = vpop.f32.mrf.mxu0
    %v1125 = vadd.f32 %v875, %v1124
    %v1126 = vpop.f32.mrf.mxu0
    %v1127 = vadd.f32 %v879, %v1126
    %1128 = vdwg.mxu0
    %1129 = vmatprep.subr.mxu0 %v847
    %1130 = vmatpush1.msra.mxu0 %v846
    %1131 = vmatprep.subr.mxu0 %v835
    %1132 = vmatpush1.msra.mxu0 %v834
    %1133 = vmatprep.subr.mxu0 %v823
    %1134 = vmatpush1.msra.mxu0 %v822
    %1135 = vmatprep.subr.mxu0 %v811
    %1136 = vmatpush1.msra.mxu0 %v810
    %1137 = vmatprep.subr.mxu0 %v799
    %1138 = vmatpush1.msra.mxu0 %v798
    %1139 = vmatprep.subr.mxu0 %v787
    %1140 = vmatpush1.msra.mxu0 %v786
    %1141 = vmatprep.subr.mxu0 %v775
    %1142 = vmatpush1.msra.mxu0 %v774
    %1143 = vmatprep.subr.mxu0 %v763
    %1144 = vmatpush1.msra.mxu0 %v762
    %1145 = vmatprep.subr.mxu0 %v751
    %1146 = vmatpush1.msra.mxu0 %v750
    %1147 = vmatprep.subr.mxu0 %v739
    %1148 = vmatpush1.msra.mxu0 %v738
    %1149 = vmatprep.subr.mxu0 %v727
    %1150 = vmatpush1.msra.mxu0 %v726
    %1151 = vmatprep.subr.mxu0 %v715
    %1152 = vmatpush1.msra.mxu0 %v714
    %1153 = vmatprep.subr.mxu0 %v703
    %1154 = vmatpush1.msra.mxu0 %v702
    %1155 = vmatprep.subr.mxu0 %v691
    %1156 = vmatpush1.msra.mxu0 %v690
    %1157 = vmatprep.subr.mxu0 %v679
    %1158 = vmatpush1.msra.mxu0 %v678
    %1159 = vmatprep.subr.mxu0 %v667
    %1160 = vmatpush1.msra.mxu0 %v666
    %1161 = vmatprep.subr.mxu0 0.0
    %1162 = vmatpush2.msra.mxu0 0.0
    %1163 = vmatprep.subr.mxu0 0.0
    %1164 = vmatpush2.msra.mxu0 0.0
    %1165 = vmatprep.subr.mxu0 0.0
    %1166 = vmatpush2.msra.mxu0 0.0
    %1167 = vmatprep.subr.mxu0 0.0
    %1168 = vmatpush2.msra.mxu0 0.0
    %1169 = vmatprep.subr.mxu0 0.0
    %1170 = vmatpush2.msra.mxu0 0.0
    %1171 = vmatprep.subr.mxu0 0.0
    %1172 = vmatpush2.msra.mxu0 0.0
    %1173 = vmatprep.subr.mxu0 0.0
    %1174 = vmatpush2.msra.mxu0 0.0
    %1175 = vmatprep.subr.mxu0 0.0
    %1176 = vmatpush2.msra.mxu0 0.0
    %1177 = vmatprep.subr.mxu0 0.0
    %1178 = vmatpush2.msra.mxu0 0.0
    %1179 = vmatprep.subr.mxu0 0.0
    %1180 = vmatpush2.msra.mxu0 0.0
    %1181 = vmatprep.subr.mxu0 0.0
    %1182 = vmatpush2.msra.mxu0 0.0
    %1183 = vmatprep.subr.mxu0 0.0
    %1184 = vmatpush2.msra.mxu0 0.0
    %1185 = vmatprep.subr.mxu0 0.0
    %1186 = vmatpush2.msra.mxu0 0.0
    %1187 = vmatprep.subr.mxu0 0.0
    %1188 = vmatpush2.msra.mxu0 0.0
    %1189 = vmatprep.subr.mxu0 0.0
    %1190 = vmatpush2.msra.mxu0 0.0
    %1191 = vmatprep.subr.mxu0 0.0
    %1192 = vmatpush2.msra.mxu0 0.0
    %1193 = vmatprep.mubr.f32.mxu0 0.0
    %1194 = vmatmul.mubr.f32.gmra.mxu0 %v506
    %v1195 = vpop.f32.mrf.mxu0
    %v1196 = vadd.f32 %v883, %v1195
    %v1197 = vpop.f32.mrf.mxu0
    %v1198 = vadd.f32 %v887, %v1197
    %1199 = vdwg.mxu0
    %1200 = vmatprep.subr.mxu0 %v849
    %1201 = vmatpush1.msra.mxu0 %v848
    %1202 = vmatprep.subr.mxu0 %v837
    %1203 = vmatpush1.msra.mxu0 %v836
    %1204 = vmatprep.subr.mxu0 %v825
    %1205 = vmatpush1.msra.mxu0 %v824
    %1206 = vmatprep.subr.mxu0 %v813
    %1207 = vmatpush1.msra.mxu0 %v812
    %1208 = vmatprep.subr.mxu0 %v801
    %1209 = vmatpush1.msra.mxu0 %v800
    %1210 = vmatprep.subr.mxu0 %v789
    %1211 = vmatpush1.msra.mxu0 %v788
    %1212 = vmatprep.subr.mxu0 %v777
    %1213 = vmatpush1.msra.mxu0 %v776
    %1214 = vmatprep.subr.mxu0 %v765
    %1215 = vmatpush1.msra.mxu0 %v764
    %1216 = vmatprep.subr.mxu0 %v753
    %1217 = vmatpush1.msra.mxu0 %v752
    %1218 = vmatprep.subr.mxu0 %v741
    %1219 = vmatpush1.msra.mxu0 %v740
    %1220 = vmatprep.subr.mxu0 %v729
    %1221 = vmatpush1.msra.mxu0 %v728
    %1222 = vmatprep.subr.mxu0 %v717
    %1223 = vmatpush1.msra.mxu0 %v716
    %1224 = vmatprep.subr.mxu0 %v705
    %1225 = vmatpush1.msra.mxu0 %v704
    %1226 = vmatprep.subr.mxu0 %v693
    %1227 = vmatpush1.msra.mxu0 %v692
    %1228 = vmatprep.subr.mxu0 %v681
    %1229 = vmatpush1.msra.mxu0 %v680
    %1230 = vmatprep.subr.mxu0 %v669
    %1231 = vmatpush1.msra.mxu0 %v668
    %1232 = vmatprep.subr.mxu0 0.0
    %1233 = vmatpush2.msra.mxu0 0.0
    %1234 = vmatprep.subr.mxu0 0.0
    %1235 = vmatpush2.msra.mxu0 0.0
    %1236 = vmatprep.subr.mxu0 0.0
    %1237 = vmatpush2.msra.mxu0 0.0
    %1238 = vmatprep.subr.mxu0 0.0
    %1239 = vmatpush2.msra.mxu0 0.0
    %1240 = vmatprep.subr.mxu0 0.0
    %1241 = vmatpush2.msra.mxu0 0.0
    %1242 = vmatprep.subr.mxu0 0.0
    %1243 = vmatpush2.msra.mxu0 0.0
    %1244 = vmatprep.subr.mxu0 0.0
    %1245 = vmatpush2.msra.mxu0 0.0
    %1246 = vmatprep.subr.mxu0 0.0
    %1247 = vmatpush2.msra.mxu0 0.0
    %1248 = vmatprep.subr.mxu0 0.0
    %1249 = vmatpush2.msra.mxu0 0.0
    %1250 = vmatprep.subr.mxu0 0.0
    %1251 = vmatpush2.msra.mxu0 0.0
    %1252 = vmatprep.subr.mxu0 0.0
    %1253 = vmatpush2.msra.mxu0 0.0
    %1254 = vmatprep.subr.mxu0 0.0
    %1255 = vmatpush2.msra.mxu0 0.0
    %1256 = vmatprep.subr.mxu0 0.0
    %1257 = vmatpush2.msra.mxu0 0.0
    %1258 = vmatprep.subr.mxu0 0.0
    %1259 = vmatpush2.msra.mxu0 0.0
    %1260 = vmatprep.subr.mxu0 0.0
    %1261 = vmatpush2.msra.mxu0 0.0
    %1262 = vmatprep.subr.mxu0 0.0
    %1263 = vmatpush2.msra.mxu0 0.0
    %1264 = vmatprep.mubr.f32.mxu0 0.0
    %1265 = vmatmul.mubr.f32.gmra.mxu0 %v506
    %v1266 = vpop.f32.mrf.mxu0
    %v1267 = vadd.f32 %v891, %v1266
    %v1268 = vpop.f32.mrf.mxu0
    %v1269 = vadd.f32 %v895, %v1268
    %1270 = vdwg.mxu0
    %1271 = vmatprep.subr.mxu0 %v851
    %1272 = vmatpush1.msra.mxu0 %v850
    %1273 = vmatprep.subr.mxu0 %v839
    %1274 = vmatpush1.msra.mxu0 %v838
    %1275 = vmatprep.subr.mxu0 %v827
    %1276 = vmatpush1.msra.mxu0 %v826
    %1277 = vmatprep.subr.mxu0 %v815
    %1278 = vmatpush1.msra.mxu0 %v814
    %1279 = vmatprep.subr.mxu0 %v803
    %1280 = vmatpush1.msra.mxu0 %v802
    %1281 = vmatprep.subr.mxu0 %v791
    %1282 = vmatpush1.msra.mxu0 %v790
    %1283 = vmatprep.subr.mxu0 %v779
    %1284 = vmatpush1.msra.mxu0 %v778
    %1285 = vmatprep.subr.mxu0 %v767
    %1286 = vmatpush1.msra.mxu0 %v766
    %1287 = vmatprep.subr.mxu0 %v755
    %1288 = vmatpush1.msra.mxu0 %v754
    %1289 = vmatprep.subr.mxu0 %v743
    %1290 = vmatpush1.msra.mxu0 %v742
    %1291 = vmatprep.subr.mxu0 %v731
    %1292 = vmatpush1.msra.mxu0 %v730
    %1293 = vmatprep.subr.mxu0 %v719
    %1294 = vmatpush1.msra.mxu0 %v718
    %1295 = vmatprep.subr.mxu0 %v707
    %1296 = vmatpush1.msra.mxu0 %v706
    %1297 = vmatprep.subr.mxu0 %v695
    %1298 = vmatpush1.msra.mxu0 %v694
    %1299 = vmatprep.subr.mxu0 %v683
    %1300 = vmatpush1.msra.mxu0 %v682
    %1301 = vmatprep.subr.mxu0 %v671
    %1302 = vmatpush1.msra.mxu0 %v670
    %1303 = vmatprep.subr.mxu0 0.0
    %1304 = vmatpush2.msra.mxu0 0.0
    %1305 = vmatprep.subr.mxu0 0.0
    %1306 = vmatpush2.msra.mxu0 0.0
    %1307 = vmatprep.subr.mxu0 0.0
    %1308 = vmatpush2.msra.mxu0 0.0
    %1309 = vmatprep.subr.mxu0 0.0
    %1310 = vmatpush2.msra.mxu0 0.0
    %1311 = vmatprep.subr.mxu0 0.0
    %1312 = vmatpush2.msra.mxu0 0.0
    %1313 = vmatprep.subr.mxu0 0.0
    %1314 = vmatpush2.msra.mxu0 0.0
    %1315 = vmatprep.subr.mxu0 0.0
    %1316 = vmatpush2.msra.mxu0 0.0
    %1317 = vmatprep.subr.mxu0 0.0
    %1318 = vmatpush2.msra.mxu0 0.0
    %1319 = vmatprep.subr.mxu0 0.0
    %1320 = vmatpush2.msra.mxu0 0.0
    %1321 = vmatprep.subr.mxu0 0.0
    %1322 = vmatpush2.msra.mxu0 0.0
    %1323 = vmatprep.subr.mxu0 0.0
    %1324 = vmatpush2.msra.mxu0 0.0
    %1325 = vmatprep.subr.mxu0 0.0
    %1326 = vmatpush2.msra.mxu0 0.0
    %1327 = vmatprep.subr.mxu0 0.0
    %1328 = vmatpush2.msra.mxu0 0.0
    %1329 = vmatprep.subr.mxu0 0.0
    %1330 = vmatpush2.msra.mxu0 0.0
    %1331 = vmatprep.subr.mxu0 0.0
    %1332 = vmatpush2.msra.mxu0 0.0
    %1333 = vmatprep.subr.mxu0 0.0
    %1334 = vmatpush2.msra.mxu0 0.0
    %1335 = vmatprep.mubr.f32.mxu0 0.0
    %1336 = vmatmul.mubr.f32.gmra.mxu0 %v506
    %v1337 = vpop.f32.mrf.mxu0
    %v1338 = vadd.f32 %v899, %v1337
    %v1339 = vpop.f32.mrf.mxu0
    %v1340 = vadd.f32 %v903, %v1339
    %1341 = vdwg.mxu0
    %v1342 = vmul.f32 %v983, %v1125
    %v1343 = vmul.f32 %v985, %v1127
    %v1344 = vmul.f32 %v1054, %v1196
    %v1345 = vmul.f32 %v1056, %v1198
    %v1346 = vld [vmem:[#allocation6] sm:$0xff]
    %v1347 = vld [vmem:[#allocation6 + $0x8] sm:$0xff]
    %v1348 = vld [vmem:[#allocation6 + $0x10] sm:$0xff]
    %v1349 = vld [vmem:[#allocation6 + $0x18] sm:$0xff]
    %v1350 = vld [vmem:[#allocation6 + $0x20] sm:$0xff]
    %v1351 = vld [vmem:[#allocation6 + $0x28] sm:$0xff]
    %v1352 = vld [vmem:[#allocation6 + $0x30] sm:$0xff]
    %v1353 = vld [vmem:[#allocation6 + $0x38] sm:$0xff]
    %v1354 = vld [vmem:[#allocation6 + $0x40] sm:$0xff]
    %v1355 = vld [vmem:[#allocation6 + $0x48] sm:$0xff]
    %v1356 = vld [vmem:[#allocation6 + $0x50] sm:$0xff]
    %v1357 = vld [vmem:[#allocation6 + $0x58] sm:$0xff]
    %v1358 = vld [vmem:[#allocation6 + $0x60] sm:$0xff]
    %v1359 = vld [vmem:[#allocation6 + $0x68] sm:$0xff]
    %v1360 = vld [vmem:[#allocation6 + $0x70] sm:$0xff]
    %v1361 = vld [vmem:[#allocation6 + $0x78] sm:$0xff]
    %v1362 = vld [vmem:[#allocation6 + $0x80] sm:$0xff]
    %v1363 = vld [vmem:[#allocation6 + $0x88] sm:$0xff]
    %v1364 = vld [vmem:[#allocation6 + $0x90] sm:$0xff]
    %v1365 = vld [vmem:[#allocation6 + $0x98] sm:$0xff]
    %v1366 = vld [vmem:[#allocation6 + $0xa0] sm:$0xff]
    %v1367 = vld [vmem:[#allocation6 + $0xa8] sm:$0xff]
    %v1368 = vld [vmem:[#allocation6 + $0xb0] sm:$0xff]
    %v1369 = vld [vmem:[#allocation6 + $0xb8] sm:$0xff]
    %v1370 = vld [vmem:[#allocation6 + $0xc0] sm:$0xff]
    %v1371 = vld [vmem:[#allocation6 + $0xc8] sm:$0xff]
    %v1372 = vld [vmem:[#allocation6 + $0xd0] sm:$0xff]
    %v1373 = vld [vmem:[#allocation6 + $0xd8] sm:$0xff]
    %v1374 = vld [vmem:[#allocation6 + $0xe0] sm:$0xff]
    %v1375 = vld [vmem:[#allocation6 + $0xe8] sm:$0xff]
    %v1376 = vld [vmem:[#allocation6 + $0xf0] sm:$0xff]
    %v1377 = vld [vmem:[#allocation6 + $0xf8] sm:$0xff]
    %v1378 = vld [vmem:[#allocation6 + $0x100] sm:$0xff]
    %v1379 = vld [vmem:[#allocation6 + $0x108] sm:$0xff]
    %v1380 = vld [vmem:[#allocation6 + $0x110] sm:$0xff]
    %v1381 = vld [vmem:[#allocation6 + $0x118] sm:$0xff]
    %v1382 = vld [vmem:[#allocation6 + $0x120] sm:$0xff]
    %v1383 = vld [vmem:[#allocation6 + $0x128] sm:$0xff]
    %v1384 = vld [vmem:[#allocation6 + $0x130] sm:$0xff]
    %v1385 = vld [vmem:[#allocation6 + $0x138] sm:$0xff]
    %v1386 = vld [vmem:[#allocation6 + $0x140] sm:$0xff]
    %v1387 = vld [vmem:[#allocation6 + $0x148] sm:$0xff]
    %v1388 = vld [vmem:[#allocation6 + $0x150] sm:$0xff]
    %v1389 = vld [vmem:[#allocation6 + $0x158] sm:$0xff]
    %v1390 = vld [vmem:[#allocation6 + $0x160] sm:$0xff]
    %v1391 = vld [vmem:[#allocation6 + $0x168] sm:$0xff]
    %v1392 = vld [vmem:[#allocation6 + $0x170] sm:$0xff]
    %v1393 = vld [vmem:[#allocation6 + $0x178] sm:$0xff]
    %v1394 = vld [vmem:[#allocation6 + $0x180] sm:$0xff]
    %v1395 = vld [vmem:[#allocation6 + $0x188] sm:$0xff]
    %v1396 = vld [vmem:[#allocation6 + $0x190] sm:$0xff]
    %v1397 = vld [vmem:[#allocation6 + $0x198] sm:$0xff]
    %v1398 = vld [vmem:[#allocation6 + $0x1a0] sm:$0xff]
    %v1399 = vld [vmem:[#allocation6 + $0x1a8] sm:$0xff]
    %v1400 = vld [vmem:[#allocation6 + $0x1b0] sm:$0xff]
    %v1401 = vld [vmem:[#allocation6 + $0x1b8] sm:$0xff]
    %v1402 = vld [vmem:[#allocation6 + $0x1c0] sm:$0xff]
    %v1403 = vld [vmem:[#allocation6 + $0x1c8] sm:$0xff]
    %v1404 = vld [vmem:[#allocation6 + $0x1d0] sm:$0xff]
    %v1405 = vld [vmem:[#allocation6 + $0x1d8] sm:$0xff]
    %v1406 = vld [vmem:[#allocation6 + $0x1e0] sm:$0xff]
    %v1407 = vld [vmem:[#allocation6 + $0x1e8] sm:$0xff]
    %v1408 = vld [vmem:[#allocation6 + $0x1f0] sm:$0xff]
    %v1409 = vld [vmem:[#allocation6 + $0x1f8] sm:$0xff]
    %1410 = vmatprep.subr.mxu0 0.0
    %1411 = vmatpush1.msra.mxu0 %v1361
    %1412 = vmatprep.subr.mxu0 0.0
    %1413 = vmatpush1.msra.mxu0 %v1360
    %1414 = vmatprep.subr.mxu0 0.0
    %1415 = vmatpush1.msra.mxu0 %v1359
    %1416 = vmatprep.subr.mxu0 0.0
    %1417 = vmatpush1.msra.mxu0 %v1358
    %1418 = vmatprep.subr.mxu0 0.0
    %1419 = vmatpush1.msra.mxu0 %v1357
    %1420 = vmatprep.subr.mxu0 0.0
    %1421 = vmatpush1.msra.mxu0 %v1356
    %1422 = vmatprep.subr.mxu0 0.0
    %1423 = vmatpush1.msra.mxu0 %v1355
    %1424 = vmatprep.subr.mxu0 0.0
    %1425 = vmatpush1.msra.mxu0 %v1354
    %1426 = vmatprep.subr.mxu0 0.0
    %1427 = vmatpush1.msra.mxu0 %v1353
    %1428 = vmatprep.subr.mxu0 0.0
    %1429 = vmatpush1.msra.mxu0 %v1352
    %1430 = vmatprep.subr.mxu0 0.0
    %1431 = vmatpush1.msra.mxu0 %v1351
    %1432 = vmatprep.subr.mxu0 0.0
    %1433 = vmatpush1.msra.mxu0 %v1350
    %1434 = vmatprep.subr.mxu0 0.0
    %1435 = vmatpush1.msra.mxu0 %v1349
    %1436 = vmatprep.subr.mxu0 0.0
    %1437 = vmatpush1.msra.mxu0 %v1348
    %1438 = vmatprep.subr.mxu0 0.0
    %1439 = vmatpush1.msra.mxu0 %v1347
    %1440 = vmatprep.subr.mxu0 0.0
    %1441 = vmatpush1.msra.mxu0 %v1346
    %1442 = vmatprep.subr.mxu0 0.0
    %1443 = vmatpush2.msra.mxu0 %v1377
    %1444 = vmatprep.subr.mxu0 0.0
    %1445 = vmatpush2.msra.mxu0 %v1376
    %1446 = vmatprep.subr.mxu0 0.0
    %1447 = vmatpush2.msra.mxu0 %v1375
    %1448 = vmatprep.subr.mxu0 0.0
    %1449 = vmatpush2.msra.mxu0 %v1374
    %1450 = vmatprep.subr.mxu0 0.0
    %1451 = vmatpush2.msra.mxu0 %v1373
    %1452 = vmatprep.subr.mxu0 0.0
    %1453 = vmatpush2.msra.mxu0 %v1372
    %1454 = vmatprep.subr.mxu0 0.0
    %1455 = vmatpush2.msra.mxu0 %v1371
    %1456 = vmatprep.subr.mxu0 0.0
    %1457 = vmatpush2.msra.mxu0 %v1370
    %1458 = vmatprep.subr.mxu0 0.0
    %1459 = vmatpush2.msra.mxu0 %v1369
    %1460 = vmatprep.subr.mxu0 0.0
    %1461 = vmatpush2.msra.mxu0 %v1368
    %1462 = vmatprep.subr.mxu0 0.0
    %1463 = vmatpush2.msra.mxu0 %v1367
    %1464 = vmatprep.subr.mxu0 0.0
    %1465 = vmatpush2.msra.mxu0 %v1366
    %1466 = vmatprep.subr.mxu0 0.0
    %1467 = vmatpush2.msra.mxu0 %v1365
    %1468 = vmatprep.subr.mxu0 0.0
    %1469 = vmatpush2.msra.mxu0 %v1364
    %1470 = vmatprep.subr.mxu0 0.0
    %1471 = vmatpush2.msra.mxu0 %v1363
    %1472 = vmatprep.subr.mxu0 0.0
    %1473 = vmatpush2.msra.mxu0 %v1362
    %1474 = vmatprep.mubr.f32.mxu0 %v1343
    %1475 = vmatmul.mubr.f32.gmra.mxu0 %v1342
    %v1476 = vpop.f32.mrf.mxu0
    %v1477 = vadd.f32 %v583, %v1476
    %v1478 = vpop.f32.mrf.mxu0
    %1479 = vdwg.mxu0
    %1480 = vmatprep.subr.mxu0 0.0
    %1481 = vmatpush1.msra.mxu0 %v1393
    %1482 = vmatprep.subr.mxu0 0.0
    %1483 = vmatpush1.msra.mxu0 %v1392
    %1484 = vmatprep.subr.mxu0 0.0
    %1485 = vmatpush1.msra.mxu0 %v1391
    %1486 = vmatprep.subr.mxu0 0.0
    %1487 = vmatpush1.msra.mxu0 %v1390
    %1488 = vmatprep.subr.mxu0 0.0
    %1489 = vmatpush1.msra.mxu0 %v1389
    %1490 = vmatprep.subr.mxu0 0.0
    %1491 = vmatpush1.msra.mxu0 %v1388
    %1492 = vmatprep.subr.mxu0 0.0
    %1493 = vmatpush1.msra.mxu0 %v1387
    %1494 = vmatprep.subr.mxu0 0.0
    %1495 = vmatpush1.msra.mxu0 %v1386
    %1496 = vmatprep.subr.mxu0 0.0
    %1497 = vmatpush1.msra.mxu0 %v1385
    %1498 = vmatprep.subr.mxu0 0.0
    %1499 = vmatpush1.msra.mxu0 %v1384
    %1500 = vmatprep.subr.mxu0 0.0
    %1501 = vmatpush1.msra.mxu0 %v1383
    %1502 = vmatprep.subr.mxu0 0.0
    %1503 = vmatpush1.msra.mxu0 %v1382
    %1504 = vmatprep.subr.mxu0 0.0
    %1505 = vmatpush1.msra.mxu0 %v1381
    %1506 = vmatprep.subr.mxu0 0.0
    %1507 = vmatpush1.msra.mxu0 %v1380
    %1508 = vmatprep.subr.mxu0 0.0
    %1509 = vmatpush1.msra.mxu0 %v1379
    %1510 = vmatprep.subr.mxu0 0.0
    %1511 = vmatpush1.msra.mxu0 %v1378
    %1512 = vmatprep.subr.mxu0 0.0
    %1513 = vmatpush2.msra.mxu0 %v1409
    %1514 = vmatprep.subr.mxu0 0.0
    %1515 = vmatpush2.msra.mxu0 %v1408
    %1516 = vmatprep.subr.mxu0 0.0
    %1517 = vmatpush2.msra.mxu0 %v1407
    %1518 = vmatprep.subr.mxu0 0.0
    %1519 = vmatpush2.msra.mxu0 %v1406
    %1520 = vmatprep.subr.mxu0 0.0
    %1521 = vmatpush2.msra.mxu0 %v1405
    %1522 = vmatprep.subr.mxu0 0.0
    %1523 = vmatpush2.msra.mxu0 %v1404
    %1524 = vmatprep.subr.mxu0 0.0
    %1525 = vmatpush2.msra.mxu0 %v1403
    %1526 = vmatprep.subr.mxu0 0.0
    %1527 = vmatpush2.msra.mxu0 %v1402
    %1528 = vmatprep.subr.mxu0 0.0
    %1529 = vmatpush2.msra.mxu0 %v1401
    %1530 = vmatprep.subr.mxu0 0.0
    %1531 = vmatpush2.msra.mxu0 %v1400
    %1532 = vmatprep.subr.mxu0 0.0
    %1533 = vmatpush2.msra.mxu0 %v1399
    %1534 = vmatprep.subr.mxu0 0.0
    %1535 = vmatpush2.msra.mxu0 %v1398
    %1536 = vmatprep.subr.mxu0 0.0
    %1537 = vmatpush2.msra.mxu0 %v1397
    %1538 = vmatprep.subr.mxu0 0.0
    %1539 = vmatpush2.msra.mxu0 %v1396
    %1540 = vmatprep.subr.mxu0 0.0
    %1541 = vmatpush2.msra.mxu0 %v1395
    %1542 = vmatprep.subr.mxu0 0.0
    %1543 = vmatpush2.msra.mxu0 %v1394
    %1544 = vmatprep.mubr.f32.mxu0 %v1345
    %1545 = vmatmul.mubr.f32.gmra.mxu0 %v1344
    %v1546 = vpop.f32.mrf.mxu0
    %v1547 = vadd.f32 %v1477, %v1546
    %v1548 = vpop.f32.mrf.mxu0
    %1549 = vdwg.mxu0
    %1550 = vrot.lane.b32.xlu0 %v1547, 32
    %v1551 = vpop.permute.xlu0 %1550
    %v1552 = vmax.f32 %v1547, %v1551
    %1553 = vrot.lane.b32.xlu0 %v1547, 64
    %v1554 = vpop.permute.xlu0 %1553
    %v1555 = vmax.f32 %v1552, %v1554
    %1556 = vrot.lane.b32.xlu0 %v1547, 96
    %v1557 = vpop.permute.xlu0 %1556
    %v1558 = vmax.f32 %v1555, %v1557
    %v1559 = vsub.f32 %v1547, %v1558
    %v1560 = vmul.f32 %v1559, 1.442695
    %v1561 = vpow.pop %v1560
    %1562 = vrot.lane.b32.xlu0 %v1561, 32
    %v1563 = vpop.permute.xlu0 %1562
    %v1564 = vadd.f32 %v1561, %v1563
    %1565 = vrot.lane.b32.xlu0 %v1561, 64
    %v1566 = vpop.permute.xlu0 %1565
    %v1567 = vadd.f32 %v1564, %v1566
    %1568 = vrot.lane.b32.xlu0 %v1561, 96
    %v1569 = vpop.permute.xlu0 %1568
    %v1570 = vadd.f32 %v1567, %v1569
    %v1571 = vrcp.pop %v1570
    %v1572 = vmul.f32 %v1561, %v1571
    %v1573 = vld [vmem:[#allocation7] sm:$0xff]
    %v1574 = vld [vmem:[#allocation7 + $0x8] sm:$0xff]
    %v1575 = vld [vmem:[#allocation7 + $0x10] sm:$0xff]
    %v1576 = vld [vmem:[#allocation7 + $0x18] sm:$0xff]
    %v1577 = vld [vmem:[#allocation7 + $0x20] sm:$0xff]
    %v1578 = vld [vmem:[#allocation7 + $0x28] sm:$0xff]
    %v1579 = vld [vmem:[#allocation7 + $0x30] sm:$0xff]
    %v1580 = vld [vmem:[#allocation7 + $0x38] sm:$0xff]
    %v1581 = vld [vmem:[#allocation7 + $0x40] sm:$0xff]
    %v1582 = vld [vmem:[#allocation7 + $0x48] sm:$0xff]
    %v1583 = vld [vmem:[#allocation7 + $0x50] sm:$0xff]
    %v1584 = vld [vmem:[#allocation7 + $0x58] sm:$0xff]
    %v1585 = vld [vmem:[#allocation7 + $0x60] sm:$0xff]
    %v1586 = vld [vmem:[#allocation7 + $0x68] sm:$0xff]
    %v1587 = vld [vmem:[#allocation7 + $0x70] sm:$0xff]
    %v1588 = vld [vmem:[#allocation7 + $0x78] sm:$0xff]
    %v1589 = vld [vmem:[#allocation7 + $0x80] sm:$0xff]
    %v1590 = vld [vmem:[#allocation7 + $0x88] sm:$0xff]
    %v1591 = vld [vmem:[#allocation7 + $0x90] sm:$0xff]
    %v1592 = vld [vmem:[#allocation7 + $0x98] sm:$0xff]
    %v1593 = vld [vmem:[#allocation7 + $0xa0] sm:$0xff]
    %v1594 = vld [vmem:[#allocation7 + $0xa8] sm:$0xff]
    %v1595 = vld [vmem:[#allocation7 + $0xb0] sm:$0xff]
    %v1596 = vld [vmem:[#allocation7 + $0xb8] sm:$0xff]
    %v1597 = vld [vmem:[#allocation7 + $0xc0] sm:$0xff]
    %v1598 = vld [vmem:[#allocation7 + $0xc8] sm:$0xff]
    %v1599 = vld [vmem:[#allocation7 + $0xd0] sm:$0xff]
    %v1600 = vld [vmem:[#allocation7 + $0xd8] sm:$0xff]
    %v1601 = vld [vmem:[#allocation7 + $0xe0] sm:$0xff]
    %v1602 = vld [vmem:[#allocation7 + $0xe8] sm:$0xff]
    %v1603 = vld [vmem:[#allocation7 + $0xf0] sm:$0xff]
    %v1604 = vld [vmem:[#allocation7 + $0xf8] sm:$0xff]
    %v1605 = vld [vmem:[#allocation7 + $0x100] sm:$0xff]
    %v1606 = vld [vmem:[#allocation7 + $0x108] sm:$0xff]
    %v1607 = vld [vmem:[#allocation7 + $0x110] sm:$0xff]
    %v1608 = vld [vmem:[#allocation7 + $0x118] sm:$0xff]
    %v1609 = vld [vmem:[#allocation7 + $0x120] sm:$0xff]
    %v1610 = vld [vmem:[#allocation7 + $0x128] sm:$0xff]
    %v1611 = vld [vmem:[#allocation7 + $0x130] sm:$0xff]
    %v1612 = vld [vmem:[#allocation7 + $0x138] sm:$0xff]
    %v1613 = vld [vmem:[#allocation7 + $0x140] sm:$0xff]
    %v1614 = vld [vmem:[#allocation7 + $0x148] sm:$0xff]
    %v1615 = vld [vmem:[#allocation7 + $0x150] sm:$0xff]
    %v1616 = vld [vmem:[#allocation7 + $0x158] sm:$0xff]
    %v1617 = vld [vmem:[#allocation7 + $0x160] sm:$0xff]
    %v1618 = vld [vmem:[#allocation7 + $0x168] sm:$0xff]
    %v1619 = vld [vmem:[#allocation7 + $0x170] sm:$0xff]
    %v1620 = vld [vmem:[#allocation7 + $0x178] sm:$0xff]
    %v1621 = vld [vmem:[#allocation7 + $0x180] sm:$0xff]
    %v1622 = vld [vmem:[#allocation7 + $0x188] sm:$0xff]
    %v1623 = vld [vmem:[#allocation7 + $0x190] sm:$0xff]
    %v1624 = vld [vmem:[#allocation7 + $0x198] sm:$0xff]
    %v1625 = vld [vmem:[#allocation7 + $0x1a0] sm:$0xff]
    %v1626 = vld [vmem:[#allocation7 + $0x1a8] sm:$0xff]
    %v1627 = vld [vmem:[#allocation7 + $0x1b0] sm:$0xff]
    %v1628 = vld [vmem:[#allocation7 + $0x1b8] sm:$0xff]
    %v1629 = vld [vmem:[#allocation7 + $0x1c0] sm:$0xff]
    %v1630 = vld [vmem:[#allocation7 + $0x1c8] sm:$0xff]
    %v1631 = vld [vmem:[#allocation7 + $0x1d0] sm:$0xff]
    %v1632 = vld [vmem:[#allocation7 + $0x1d8] sm:$0xff]
    %v1633 = vld [vmem:[#allocation7 + $0x1e0] sm:$0xff]
    %v1634 = vld [vmem:[#allocation7 + $0x1e8] sm:$0xff]
    %v1635 = vld [vmem:[#allocation7 + $0x1f0] sm:$0xff]
    %v1636 = vld [vmem:[#allocation7 + $0x1f8] sm:$0xff]
    %1637 = vmatprep.subr.mxu0 %v1634
    %1638 = vmatpush1.msra.mxu0 %v1633
    %1639 = vmatprep.subr.mxu0 %v1630
    %1640 = vmatpush1.msra.mxu0 %v1629
    %1641 = vmatprep.subr.mxu0 %v1626
    %1642 = vmatpush1.msra.mxu0 %v1625
    %1643 = vmatprep.subr.mxu0 %v1622
    %1644 = vmatpush1.msra.mxu0 %v1621
    %1645 = vmatprep.subr.mxu0 %v1618
    %1646 = vmatpush1.msra.mxu0 %v1617
    %1647 = vmatprep.subr.mxu0 %v1614
    %1648 = vmatpush1.msra.mxu0 %v1613
    %1649 = vmatprep.subr.mxu0 %v1610
    %1650 = vmatpush1.msra.mxu0 %v1609
    %1651 = vmatprep.subr.mxu0 %v1606
    %1652 = vmatpush1.msra.mxu0 %v1605
    %1653 = vmatprep.subr.mxu0 %v1602
    %1654 = vmatpush1.msra.mxu0 %v1601
    %1655 = vmatprep.subr.mxu0 %v1598
    %1656 = vmatpush1.msra.mxu0 %v1597
    %1657 = vmatprep.subr.mxu0 %v1594
    %1658 = vmatpush1.msra.mxu0 %v1593
    %1659 = vmatprep.subr.mxu0 %v1590
    %1660 = vmatpush1.msra.mxu0 %v1589
    %1661 = vmatprep.subr.mxu0 %v1586
    %1662 = vmatpush1.msra.mxu0 %v1585
    %1663 = vmatprep.subr.mxu0 %v1582
    %1664 = vmatpush1.msra.mxu0 %v1581
    %1665 = vmatprep.subr.mxu0 %v1578
    %1666 = vmatpush1.msra.mxu0 %v1577
    %1667 = vmatprep.subr.mxu0 %v1574
    %1668 = vmatpush1.msra.mxu0 %v1573
    %1669 = vmatprep.subr.mxu0 0.0
    %1670 = vmatpush2.msra.mxu0 0.0
    %1671 = vmatprep.subr.mxu0 0.0
    %1672 = vmatpush2.msra.mxu0 0.0
    %1673 = vmatprep.subr.mxu0 0.0
    %1674 = vmatpush2.msra.mxu0 0.0
    %1675 = vmatprep.subr.mxu0 0.0
    %1676 = vmatpush2.msra.mxu0 0.0
    %1677 = vmatprep.subr.mxu0 0.0
    %1678 = vmatpush2.msra.mxu0 0.0
    %1679 = vmatprep.subr.mxu0 0.0
    %1680 = vmatpush2.msra.mxu0 0.0
    %1681 = vmatprep.subr.mxu0 0.0
    %1682 = vmatpush2.msra.mxu0 0.0
    %1683 = vmatprep.subr.mxu0 0.0
    %1684 = vmatpush2.msra.mxu0 0.0
    %1685 = vmatprep.subr.mxu0 0.0
    %1686 = vmatpush2.msra.mxu0 0.0
    %1687 = vmatprep.subr.mxu0 0.0
    %1688 = vmatpush2.msra.mxu0 0.0
    %1689 = vmatprep.subr.mxu0 0.0
    %1690 = vmatpush2.msra.mxu0 0.0
    %1691 = vmatprep.subr.mxu0 0.0
    %1692 = vmatpush2.msra.mxu0 0.0
    %1693 = vmatprep.subr.mxu0 0.0
    %1694 = vmatpush2.msra.mxu0 0.0
    %1695 = vmatprep.subr.mxu0 0.0
    %1696 = vmatpush2.msra.mxu0 0.0
    %1697 = vmatprep.subr.mxu0 0.0
    %1698 = vmatpush2.msra.mxu0 0.0
    %1699 = vmatprep.subr.mxu0 0.0
    %1700 = vmatpush2.msra.mxu0 0.0
    %1701 = vmatprep.mubr.f32.mxu0 0.0
    %1702 = vmatmul.mubr.f32.gmra.mxu0 %v1572
    %v1703 = vpop.f32.mrf.mxu0
    %v1704 = vadd.f32 0.0, %v1703
    %v1705 = vpop.f32.mrf.mxu0
    %v1706 = vadd.f32 0.0, %v1705
    %1707 = vdwg.mxu0
    %1708 = vmatprep.subr.mxu0 %v1636
    %1709 = vmatpush1.msra.mxu0 %v1635
    %1710 = vmatprep.subr.mxu0 %v1632
    %1711 = vmatpush1.msra.mxu0 %v1631
    %1712 = vmatprep.subr.mxu0 %v1628
    %1713 = vmatpush1.msra.mxu0 %v1627
    %1714 = vmatprep.subr.mxu0 %v1624
    %1715 = vmatpush1.msra.mxu0 %v1623
    %1716 = vmatprep.subr.mxu0 %v1620
    %1717 = vmatpush1.msra.mxu0 %v1619
    %1718 = vmatprep.subr.mxu0 %v1616
    %1719 = vmatpush1.msra.mxu0 %v1615
    %1720 = vmatprep.subr.mxu0 %v1612
    %1721 = vmatpush1.msra.mxu0 %v1611
    %1722 = vmatprep.subr.mxu0 %v1608
    %1723 = vmatpush1.msra.mxu0 %v1607
    %1724 = vmatprep.subr.mxu0 %v1604
    %1725 = vmatpush1.msra.mxu0 %v1603
    %1726 = vmatprep.subr.mxu0 %v1600
    %1727 = vmatpush1.msra.mxu0 %v1599
    %1728 = vmatprep.subr.mxu0 %v1596
    %1729 = vmatpush1.msra.mxu0 %v1595
    %1730 = vmatprep.subr.mxu0 %v1592
    %1731 = vmatpush1.msra.mxu0 %v1591
    %1732 = vmatprep.subr.mxu0 %v1588
    %1733 = vmatpush1.msra.mxu0 %v1587
    %1734 = vmatprep.subr.mxu0 %v1584
    %1735 = vmatpush1.msra.mxu0 %v1583
    %1736 = vmatprep.subr.mxu0 %v1580
    %1737 = vmatpush1.msra.mxu0 %v1579
    %1738 = vmatprep.subr.mxu0 %v1576
    %1739 = vmatpush1.msra.mxu0 %v1575
    %1740 = vmatprep.subr.mxu0 0.0
    %1741 = vmatpush2.msra.mxu0 0.0
    %1742 = vmatprep.subr.mxu0 0.0
    %1743 = vmatpush2.msra.mxu0 0.0
    %1744 = vmatprep.subr.mxu0 0.0
    %1745 = vmatpush2.msra.mxu0 0.0
    %1746 = vmatprep.subr.mxu0 0.0
    %1747 = vmatpush2.msra.mxu0 0.0
    %1748 = vmatprep.subr.mxu0 0.0
    %1749 = vmatpush2.msra.mxu0 0.0
    %1750 = vmatprep.subr.mxu0 0.0
    %1751 = vmatpush2.msra.mxu0 0.0
    %1752 = vmatprep.subr.mxu0 0.0
    %1753 = vmatpush2.msra.mxu0 0.0
    %1754 = vmatprep.subr.mxu0 0.0
    %1755 = vmatpush2.msra.mxu0 0.0
    %1756 = vmatprep.subr.mxu0 0.0
    %1757 = vmatpush2.msra.mxu0 0.0
    %1758 = vmatprep.subr.mxu0 0.0
    %1759 = vmatpush2.msra.mxu0 0.0
    %1760 = vmatprep.subr.mxu0 0.0
    %1761 = vmatpush2.msra.mxu0 0.0
    %1762 = vmatprep.subr.mxu0 0.0
    %1763 = vmatpush2.msra.mxu0 0.0
    %1764 = vmatprep.subr.mxu0 0.0
    %1765 = vmatpush2.msra.mxu0 0.0
    %1766 = vmatprep.subr.mxu0 0.0
    %1767 = vmatpush2.msra.mxu0 0.0
    %1768 = vmatprep.subr.mxu0 0.0
    %1769 = vmatpush2.msra.mxu0 0.0
    %1770 = vmatprep.subr.mxu0 0.0
    %1771 = vmatpush2.msra.mxu0 0.0
    %1772 = vmatprep.mubr.f32.mxu0 0.0
    %1773 = vmatmul.mubr.f32.gmra.mxu0 %v1572
    %v1774 = vpop.f32.mrf.mxu0
    %v1775 = vadd.f32 0.0, %v1774
    %v1776 = vpop.f32.mrf.mxu0
    %v1777 = vadd.f32 0.0, %v1776
    %1778 = vdwg.mxu0
    %v1779 = vmul.f32 %v1704, %v1267
    %v1780 = vmul.f32 %v1706, %v1269
    %v1781 = vmul.f32 %v1775, %v1338
    %v1782 = vmul.f32 %v1777, %v1340
    %v1783 = vld [vmem:[#allocation9] sm:$0xff]
    %v1784 = vld [vmem:[#allocation9 + $0x8] sm:$0xff]
    %v1785 = vld [vmem:[#allocation9 + $0x10] sm:$0xff]
    %v1786 = vld [vmem:[#allocation9 + $0x18] sm:$0xff]
    %v1787 = vld [vmem:[#allocation9 + $0x20] sm:$0xff]
    %v1788 = vld [vmem:[#allocation9 + $0x28] sm:$0xff]
    %v1789 = vld [vmem:[#allocation9 + $0x30] sm:$0xff]
    %v1790 = vld [vmem:[#allocation9 + $0x38] sm:$0xff]
    %v1791 = vld [vmem:[#allocation9 + $0x40] sm:$0xff]
    %v1792 = vld [vmem:[#allocation9 + $0x48] sm:$0xff]
    %v1793 = vld [vmem:[#allocation9 + $0x50] sm:$0xff]
    %v1794 = vld [vmem:[#allocation9 + $0x58] sm:$0xff]
    %v1795 = vld [vmem:[#allocation9 + $0x60] sm:$0xff]
    %v1796 = vld [vmem:[#allocation9 + $0x68] sm:$0xff]
    %v1797 = vld [vmem:[#allocation9 + $0x70] sm:$0xff]
    %v1798 = vld [vmem:[#allocation9 + $0x78] sm:$0xff]
    %v1799 = vld [vmem:[#allocation9 + $0x80] sm:$0xff]
    %v1800 = vld [vmem:[#allocation9 + $0x88] sm:$0xff]
    %v1801 = vld [vmem:[#allocation9 + $0x90] sm:$0xff]
    %v1802 = vld [vmem:[#allocation9 + $0x98] sm:$0xff]
    %v1803 = vld [vmem:[#allocation9 + $0xa0] sm:$0xff]
    %v1804 = vld [vmem:[#allocation9 + $0xa8] sm:$0xff]
    %v1805 = vld [vmem:[#allocation9 + $0xb0] sm:$0xff]
    %v1806 = vld [vmem:[#allocation9 + $0xb8] sm:$0xff]
    %v1807 = vld [vmem:[#allocation9 + $0xc0] sm:$0xff]
    %v1808 = vld [vmem:[#allocation9 + $0xc8] sm:$0xff]
    %v1809 = vld [vmem:[#allocation9 + $0xd0] sm:$0xff]
    %v1810 = vld [vmem:[#allocation9 + $0xd8] sm:$0xff]
    %v1811 = vld [vmem:[#allocation9 + $0xe0] sm:$0xff]
    %v1812 = vld [vmem:[#allocation9 + $0xe8] sm:$0xff]
    %v1813 = vld [vmem:[#allocation9 + $0xf0] sm:$0xff]
    %v1814 = vld [vmem:[#allocation9 + $0xf8] sm:$0xff]
    %v1815 = vld [vmem:[#allocation9 + $0x100] sm:$0xff]
    %v1816 = vld [vmem:[#allocation9 + $0x108] sm:$0xff]
    %v1817 = vld [vmem:[#allocation9 + $0x110] sm:$0xff]
    %v1818 = vld [vmem:[#allocation9 + $0x118] sm:$0xff]
    %v1819 = vld [vmem:[#allocation9 + $0x120] sm:$0xff]
    %v1820 = vld [vmem:[#allocation9 + $0x128] sm:$0xff]
    %v1821 = vld [vmem:[#allocation9 + $0x130] sm:$0xff]
    %v1822 = vld [vmem:[#allocation9 + $0x138] sm:$0xff]
    %v1823 = vld [vmem:[#allocation9 + $0x140] sm:$0xff]
    %v1824 = vld [vmem:[#allocation9 + $0x148] sm:$0xff]
    %v1825 = vld [vmem:[#allocation9 + $0x150] sm:$0xff]
    %v1826 = vld [vmem:[#allocation9 + $0x158] sm:$0xff]
    %v1827 = vld [vmem:[#allocation9 + $0x160] sm:$0xff]
    %v1828 = vld [vmem:[#allocation9 + $0x168] sm:$0xff]
    %v1829 = vld [vmem:[#allocation9 + $0x170] sm:$0xff]
    %v1830 = vld [vmem:[#allocation9 + $0x178] sm:$0xff]
    %v1831 = vld [vmem:[#allocation9 + $0x180] sm:$0xff]
    %v1832 = vld [vmem:[#allocation9 + $0x188] sm:$0xff]
    %v1833 = vld [vmem:[#allocation9 + $0x190] sm:$0xff]
    %v1834 = vld [vmem:[#allocation9 + $0x198] sm:$0xff]
    %v1835 = vld [vmem:[#allocation9 + $0x1a0] sm:$0xff]
    %v1836 = vld [vmem:[#allocation9 + $0x1a8] sm:$0xff]
    %v1837 = vld [vmem:[#allocation9 + $0x1b0] sm:$0xff]
    %v1838 = vld [vmem:[#allocation9 + $0x1b8] sm:$0xff]
    %v1839 = vld [vmem:[#allocation9 + $0x1c0] sm:$0xff]
    %v1840 = vld [vmem:[#allocation9 + $0x1c8] sm:$0xff]
    %v1841 = vld [vmem:[#allocation9 + $0x1d0] sm:$0xff]
    %v1842 = vld [vmem:[#allocation9 + $0x1d8] sm:$0xff]
    %v1843 = vld [vmem:[#allocation9 + $0x1e0] sm:$0xff]
    %v1844 = vld [vmem:[#allocation9 + $0x1e8] sm:$0xff]
    %v1845 = vld [vmem:[#allocation9 + $0x1f0] sm:$0xff]
    %v1846 = vld [vmem:[#allocation9 + $0x1f8] sm:$0xff]
    %v1847 = vld [vmem:[#allocation10] sm:$0x1]
    %v1849 = vlaneseq
    %v1850 = vshrl.u32 %v1849, 7
    %v1851 = vsub.s32 0, %v1850
    %v1852 = vrot.slane %v1847, %v1851
    %1854 = vmatprep.subr.mxu0 0.0
    %1855 = vmatpush1.msra.mxu0 %v1798
    %1856 = vmatprep.subr.mxu0 0.0
    %1857 = vmatpush1.msra.mxu0 %v1797
    %1858 = vmatprep.subr.mxu0 0.0
    %1859 = vmatpush1.msra.mxu0 %v1796
    %1860 = vmatprep.subr.mxu0 0.0
    %1861 = vmatpush1.msra.mxu0 %v1795
    %1862 = vmatprep.subr.mxu0 0.0
    %1863 = vmatpush1.msra.mxu0 %v1794
    %1864 = vmatprep.subr.mxu0 0.0
    %1865 = vmatpush1.msra.mxu0 %v1793
    %1866 = vmatprep.subr.mxu0 0.0
    %1867 = vmatpush1.msra.mxu0 %v1792
    %1868 = vmatprep.subr.mxu0 0.0
    %1869 = vmatpush1.msra.mxu0 %v1791
    %1870 = vmatprep.subr.mxu0 0.0
    %1871 = vmatpush1.msra.mxu0 %v1790
    %1872 = vmatprep.subr.mxu0 0.0
    %1873 = vmatpush1.msra.mxu0 %v1789
    %1874 = vmatprep.subr.mxu0 0.0
    %1875 = vmatpush1.msra.mxu0 %v1788
    %1876 = vmatprep.subr.mxu0 0.0
    %1877 = vmatpush1.msra.mxu0 %v1787
    %1878 = vmatprep.subr.mxu0 0.0
    %1879 = vmatpush1.msra.mxu0 %v1786
    %1880 = vmatprep.subr.mxu0 0.0
    %1881 = vmatpush1.msra.mxu0 %v1785
    %1882 = vmatprep.subr.mxu0 0.0
    %1883 = vmatpush1.msra.mxu0 %v1784
    %1884 = vmatprep.subr.mxu0 0.0
    %1885 = vmatpush1.msra.mxu0 %v1783
    %1886 = vmatprep.subr.mxu0 0.0
    %1887 = vmatpush2.msra.mxu0 %v1814
    %1888 = vmatprep.subr.mxu0 0.0
    %1889 = vmatpush2.msra.mxu0 %v1813
    %1890 = vmatprep.subr.mxu0 0.0
    %1891 = vmatpush2.msra.mxu0 %v1812
    %1892 = vmatprep.subr.mxu0 0.0
    %1893 = vmatpush2.msra.mxu0 %v1811
    %1894 = vmatprep.subr.mxu0 0.0
    %1895 = vmatpush2.msra.mxu0 %v1810
    %1896 = vmatprep.subr.mxu0 0.0
    %1897 = vmatpush2.msra.mxu0 %v1809
    %1898 = vmatprep.subr.mxu0 0.0
    %1899 = vmatpush2.msra.mxu0 %v1808
    %1900 = vmatprep.subr.mxu0 0.0
    %1901 = vmatpush2.msra.mxu0 %v1807
    %1902 = vmatprep.subr.mxu0 0.0
    %1903 = vmatpush2.msra.mxu0 %v1806
    %1904 = vmatprep.subr.mxu0 0.0
    %1905 = vmatpush2.msra.mxu0 %v1805
    %1906 = vmatprep.subr.mxu0 0.0
    %1907 = vmatpush2.msra.mxu0 %v1804
    %1908 = vmatprep.subr.mxu0 0.0
    %1909 = vmatpush2.msra.mxu0 %v1803
    %1910 = vmatprep.subr.mxu0 0.0
    %1911 = vmatpush2.msra.mxu0 %v1802
    %1912 = vmatprep.subr.mxu0 0.0
    %1913 = vmatpush2.msra.mxu0 %v1801
    %1914 = vmatprep.subr.mxu0 0.0
    %1915 = vmatpush2.msra.mxu0 %v1800
    %1916 = vmatprep.subr.mxu0 0.0
    %1917 = vmatpush2.msra.mxu0 %v1799
    %1918 = vmatprep.mubr.f32.mxu0 %v1780
    %1919 = vmatmul.mubr.f32.gmra.mxu0 %v1779
    %v1920 = vpop.f32.mrf.mxu0
    %v1921 = vadd.f32 %v1852, %v1920
    %v1922 = vpop.f32.mrf.mxu0
    %1923 = vdwg.mxu0
    %1924 = vmatprep.subr.mxu0 0.0
    %1925 = vmatpush1.msra.mxu0 %v1830
    %1926 = vmatprep.subr.mxu0 0.0
    %1927 = vmatpush1.msra.mxu0 %v1829
    %1928 = vmatprep.subr.mxu0 0.0
    %1929 = vmatpush1.msra.mxu0 %v1828
    %1930 = vmatprep.subr.mxu0 0.0
    %1931 = vmatpush1.msra.mxu0 %v1827
    %1932 = vmatprep.subr.mxu0 0.0
    %1933 = vmatpush1.msra.mxu0 %v1826
    %1934 = vmatprep.subr.mxu0 0.0
    %1935 = vmatpush1.msra.mxu0 %v1825
    %1936 = vmatprep.subr.mxu0 0.0
    %1937 = vmatpush1.msra.mxu0 %v1824
    %1938 = vmatprep.subr.mxu0 0.0
    %1939 = vmatpush1.msra.mxu0 %v1823
    %1940 = vmatprep.subr.mxu0 0.0
    %1941 = vmatpush1.msra.mxu0 %v1822
    %1942 = vmatprep.subr.mxu0 0.0
    %1943 = vmatpush1.msra.mxu0 %v1821
    %1944 = vmatprep.subr.mxu0 0.0
    %1945 = vmatpush1.msra.mxu0 %v1820
    %1946 = vmatprep.subr.mxu0 0.0
    %1947 = vmatpush1.msra.mxu0 %v1819
    %1948 = vmatprep.subr.mxu0 0.0
    %1949 = vmatpush1.msra.mxu0 %v1818
    %1950 = vmatprep.subr.mxu0 0.0
    %1951 = vmatpush1.msra.mxu0 %v1817
    %1952 = vmatprep.subr.mxu0 0.0
    %1953 = vmatpush1.msra.mxu0 %v1816
    %1954 = vmatprep.subr.mxu0 0.0
    %1955 = vmatpush1.msra.mxu0 %v1815
    %1956 = vmatprep.subr.mxu0 0.0
    %1957 = vmatpush2.msra.mxu0 %v1846
    %1958 = vmatprep.subr.mxu0 0.0
    %1959 = vmatpush2.msra.mxu0 %v1845
    %1960 = vmatprep.subr.mxu0 0.0
    %1961 = vmatpush2.msra.mxu0 %v1844
    %1962 = vmatprep.subr.mxu0 0.0
    %1963 = vmatpush2.msra.mxu0 %v1843
    %1964 = vmatprep.subr.mxu0 0.0
    %1965 = vmatpush2.msra.mxu0 %v1842
    %1966 = vmatprep.subr.mxu0 0.0
    %1967 = vmatpush2.msra.mxu0 %v1841
    %1968 = vmatprep.subr.mxu0 0.0
    %1969 = vmatpush2.msra.mxu0 %v1840
    %1970 = vmatprep.subr.mxu0 0.0
    %1971 = vmatpush2.msra.mxu0 %v1839
    %1972 = vmatprep.subr.mxu0 0.0
    %1973 = vmatpush2.msra.mxu0 %v1838
    %1974 = vmatprep.subr.mxu0 0.0
    %1975 = vmatpush2.msra.mxu0 %v1837
    %1976 = vmatprep.subr.mxu0 0.0
    %1977 = vmatpush2.msra.mxu0 %v1836
    %1978 = vmatprep.subr.mxu0 0.0
    %1979 = vmatpush2.msra.mxu0 %v1835
    %1980 = vmatprep.subr.mxu0 0.0
    %1981 = vmatpush2.msra.mxu0 %v1834
    %1982 = vmatprep.subr.mxu0 0.0
    %1983 = vmatpush2.msra.mxu0 %v1833
    %1984 = vmatprep.subr.mxu0 0.0
    %1985 = vmatpush2.msra.mxu0 %v1832
    %1986 = vmatprep.subr.mxu0 0.0
    %1987 = vmatpush2.msra.mxu0 %v1831
    %1988 = vmatprep.mubr.f32.mxu0 %v1782
    %1989 = vmatmul.mubr.f32.gmra.mxu0 %v1781
    %v1990 = vpop.f32.mrf.mxu0
    %v1991 = vadd.f32 %v1921, %v1990
    %v1992 = vpop.f32.mrf.mxu0
    %1993 = vdwg.mxu0
    %v1994 = vadd.f32 %v1991, %v506
    %v1995 = vld [vmem:[%s14] sm:$0xff]
    %v1996 = vld [vmem:[%s14 + $0x8] sm:$0xff]
    %v1997 = vld [vmem:[%s14 + $0x10] sm:$0xff]
    %v1998 = vld [vmem:[%s14 + $0x18] sm:$0xff]
    %v1999 = vld [vmem:[%s14 + $0x20] sm:$0xff]
    %v2000 = vld [vmem:[%s14 + $0x28] sm:$0xff]
    %v2001 = vld [vmem:[%s14 + $0x30] sm:$0xff]
    %v2002 = vld [vmem:[%s14 + $0x38] sm:$0xff]
    %v2003 = vld [vmem:[%s14 + $0x40] sm:$0xff]
    %v2004 = vld [vmem:[%s14 + $0x48] sm:$0xff]
    %v2005 = vld [vmem:[%s14 + $0x50] sm:$0xff]
    %v2006 = vld [vmem:[%s14 + $0x58] sm:$0xff]
    %v2007 = vld [vmem:[%s14 + $0x60] sm:$0xff]
    %v2008 = vld [vmem:[%s14 + $0x68] sm:$0xff]
    %v2009 = vld [vmem:[%s14 + $0x70] sm:$0xff]
    %v2010 = vld [vmem:[%s14 + $0x78] sm:$0xff]
    %v2011 = vld [vmem:[%s14 + $0x80] sm:$0xff]
    %v2012 = vld [vmem:[%s14 + $0x88] sm:$0xff]
    %v2013 = vld [vmem:[%s14 + $0x90] sm:$0xff]
    %v2014 = vld [vmem:[%s14 + $0x98] sm:$0xff]
    %v2015 = vld [vmem:[%s14 + $0xa0] sm:$0xff]
    %v2016 = vld [vmem:[%s14 + $0xa8] sm:$0xff]
    %v2017 = vld [vmem:[%s14 + $0xb0] sm:$0xff]
    %v2018 = vld [vmem:[%s14 + $0xb8] sm:$0xff]
    %v2019 = vld [vmem:[%s14 + $0xc0] sm:$0xff]
    %v2020 = vld [vmem:[%s14 + $0xc8] sm:$0xff]
    %v2021 = vld [vmem:[%s14 + $0xd0] sm:$0xff]
    %v2022 = vld [vmem:[%s14 + $0xd8] sm:$0xff]
    %v2023 = vld [vmem:[%s14 + $0xe0] sm:$0xff]
    %v2024 = vld [vmem:[%s14 + $0xe8] sm:$0xff]
    %v2025 = vld [vmem:[%s14 + $0xf0] sm:$0xff]
    %v2026 = vld [vmem:[%s14 + $0xf8] sm:$0xff]
    %v2027 = vld [vmem:[#allocation12] sm:$0x3]
    %v2029 = vlaneseq
    %v2030 = vshrl.u32 %v2029, 7
    %v2031 = vsub.s32 0, %v2030
    %v2032 = vrot.slane %v2027, %v2031
    %v2033 = vlaneseq
    %v2034 = vshrl.u32 %v2033, 7
    %v2035 = vsub.s32 1, %v2034
    %v2036 = vrot.slane %v2027, %v2035
    %2039 = vmatprep.subr.mxu0 %v2026
    %2040 = vmatpush1.msra.mxu0 %v2025
    %2041 = vmatprep.subr.mxu0 %v2024
    %2042 = vmatpush1.msra.mxu0 %v2023
    %2043 = vmatprep.subr.mxu0 %v2022
    %2044 = vmatpush1.msra.mxu0 %v2021
    %2045 = vmatprep.subr.mxu0 %v2020
    %2046 = vmatpush1.msra.mxu0 %v2019
    %2047 = vmatprep.subr.mxu0 %v2018
    %2048 = vmatpush1.msra.mxu0 %v2017
    %2049 = vmatprep.subr.mxu0 %v2016
    %2050 = vmatpush1.msra.mxu0 %v2015
    %2051 = vmatprep.subr.mxu0 %v2014
    %2052 = vmatpush1.msra.mxu0 %v2013
    %2053 = vmatprep.subr.mxu0 %v2012
    %2054 = vmatpush1.msra.mxu0 %v2011
    %2055 = vmatprep.subr.mxu0 %v2010
    %2056 = vmatpush1.msra.mxu0 %v2009
    %2057 = vmatprep.subr.mxu0 %v2008
    %2058 = vmatpush1.msra.mxu0 %v2007
    %2059 = vmatprep.subr.mxu0 %v2006
    %2060 = vmatpush1.msra.mxu0 %v2005
    %2061 = vmatprep.subr.mxu0 %v2004
    %2062 = vmatpush1.msra.mxu0 %v2003
    %2063 = vmatprep.subr.mxu0 %v2002
    %2064 = vmatpush1.msra.mxu0 %v2001
    %2065 = vmatprep.subr.mxu0 %v2000
    %2066 = vmatpush1.msra.mxu0 %v1999
    %2067 = vmatprep.subr.mxu0 %v1998
    %2068 = vmatpush1.msra.mxu0 %v1997
    %2069 = vmatprep.subr.mxu0 %v1996
    %2070 = vmatpush1.msra.mxu0 %v1995
    %2071 = vmatprep.subr.mxu0 0.0
    %2072 = vmatpush2.msra.mxu0 0.0
    %2073 = vmatprep.subr.mxu0 0.0
    %2074 = vmatpush2.msra.mxu0 0.0
    %2075 = vmatprep.subr.mxu0 0.0
    %2076 = vmatpush2.msra.mxu0 0.0
    %2077 = vmatprep.subr.mxu0 0.0
    %2078 = vmatpush2.msra.mxu0 0.0
    %2079 = vmatprep.subr.mxu0 0.0
    %2080 = vmatpush2.msra.mxu0 0.0
    %2081 = vmatprep.subr.mxu0 0.0
    %2082 = vmatpush2.msra.mxu0 0.0
    %2083 = vmatprep.subr.mxu0 0.0
    %2084 = vmatpush2.msra.mxu0 0.0
    %2085 = vmatprep.subr.mxu0 0.0
    %2086 = vmatpush2.msra.mxu0 0.0
    %2087 = vmatprep.subr.mxu0 0.0
    %2088 = vmatpush2.msra.mxu0 0.0
    %2089 = vmatprep.subr.mxu0 0.0
    %2090 = vmatpush2.msra.mxu0 0.0
    %2091 = vmatprep.subr.mxu0 0.0
    %2092 = vmatpush2.msra.mxu0 0.0
    %2093 = vmatprep.subr.mxu0 0.0
    %2094 = vmatpush2.msra.mxu0 0.0
    %2095 = vmatprep.subr.mxu0 0.0
    %2096 = vmatpush2.msra.mxu0 0.0
    %2097 = vmatprep.subr.mxu0 0.0
    %2098 = vmatpush2.msra.mxu0 0.0
    %2099 = vmatprep.subr.mxu0 0.0
    %2100 = vmatpush2.msra.mxu0 0.0
    %2101 = vmatprep.subr.mxu0 0.0
    %2102 = vmatpush2.msra.mxu0 0.0
    %2103 = vmatprep.mubr.f32.mxu0 0.0
    %2104 = vmatmul.mubr.f32.gmra.mxu0 %v506
    %v2105 = vpop.f32.mrf.mxu0
    %v2106 = vadd.f32 %v2032, %v2105
    %v2107 = vpop.f32.mrf.mxu0
    %v2108 = vadd.f32 %v2036, %v2107
    %2109 = vdwg.mxu0
    %v2110 = vld [vmem:[#allocation13] sm:$0xff]
    %v2111 = vld [vmem:[#allocation13 + $0x8] sm:$0xff]
    %v2112 = vld [vmem:[#allocation13 + $0x10] sm:$0xff]
    %v2113 = vld [vmem:[#allocation13 + $0x18] sm:$0xff]
    %v2114 = vld [vmem:[#allocation13 + $0x20] sm:$0xff]
    %v2115 = vld [vmem:[#allocation13 + $0x28] sm:$0xff]
    %v2116 = vld [vmem:[#allocation13 + $0x30] sm:$0xff]
    %v2117 = vld [vmem:[#allocation13 + $0x38] sm:$0xff]
    %v2118 = vld [vmem:[#allocation13 + $0x40] sm:$0xff]
    %v2119 = vld [vmem:[#allocation13 + $0x48] sm:$0xff]
    %v2120 = vld [vmem:[#allocation13 + $0x50] sm:$0xff]
    %v2121 = vld [vmem:[#allocation13 + $0x58] sm:$0xff]
    %v2122 = vld [vmem:[#allocation13 + $0x60] sm:$0xff]
    %v2123 = vld [vmem:[#allocation13 + $0x68] sm:$0xff]
    %v2124 = vld [vmem:[#allocation13 + $0x70] sm:$0xff]
    %v2125 = vld [vmem:[#allocation13 + $0x78] sm:$0xff]
    %v2126 = vld [vmem:[#allocation13 + $0x80] sm:$0xff]
    %v2127 = vld [vmem:[#allocation13 + $0x88] sm:$0xff]
    %v2128 = vld [vmem:[#allocation13 + $0x90] sm:$0xff]
    %v2129 = vld [vmem:[#allocation13 + $0x98] sm:$0xff]
    %v2130 = vld [vmem:[#allocation13 + $0xa0] sm:$0xff]
    %v2131 = vld [vmem:[#allocation13 + $0xa8] sm:$0xff]
    %v2132 = vld [vmem:[#allocation13 + $0xb0] sm:$0xff]
    %v2133 = vld [vmem:[#allocation13 + $0xb8] sm:$0xff]
    %v2134 = vld [vmem:[#allocation13 + $0xc0] sm:$0xff]
    %v2135 = vld [vmem:[#allocation13 + $0xc8] sm:$0xff]
    %v2136 = vld [vmem:[#allocation13 + $0xd0] sm:$0xff]
    %v2137 = vld [vmem:[#allocation13 + $0xd8] sm:$0xff]
    %v2138 = vld [vmem:[#allocation13 + $0xe0] sm:$0xff]
    %v2139 = vld [vmem:[#allocation13 + $0xe8] sm:$0xff]
    %v2140 = vld [vmem:[#allocation13 + $0xf0] sm:$0xff]
    %v2141 = vld [vmem:[#allocation13 + $0xf8] sm:$0xff]
    %v2142 = vld [vmem:[#allocation13 + $0x100] sm:$0xff]
    %v2143 = vld [vmem:[#allocation13 + $0x108] sm:$0xff]
    %v2144 = vld [vmem:[#allocation13 + $0x110] sm:$0xff]
    %v2145 = vld [vmem:[#allocation13 + $0x118] sm:$0xff]
    %v2146 = vld [vmem:[#allocation13 + $0x120] sm:$0xff]
    %v2147 = vld [vmem:[#allocation13 + $0x128] sm:$0xff]
    %v2148 = vld [vmem:[#allocation13 + $0x130] sm:$0xff]
    %v2149 = vld [vmem:[#allocation13 + $0x138] sm:$0xff]
    %v2150 = vld [vmem:[#allocation13 + $0x140] sm:$0xff]
    %v2151 = vld [vmem:[#allocation13 + $0x148] sm:$0xff]
    %v2152 = vld [vmem:[#allocation13 + $0x150] sm:$0xff]
    %v2153 = vld [vmem:[#allocation13 + $0x158] sm:$0xff]
    %v2154 = vld [vmem:[#allocation13 + $0x160] sm:$0xff]
    %v2155 = vld [vmem:[#allocation13 + $0x168] sm:$0xff]
    %v2156 = vld [vmem:[#allocation13 + $0x170] sm:$0xff]
    %v2157 = vld [vmem:[#allocation13 + $0x178] sm:$0xff]
    %v2158 = vld [vmem:[#allocation13 + $0x180] sm:$0xff]
    %v2159 = vld [vmem:[#allocation13 + $0x188] sm:$0xff]
    %v2160 = vld [vmem:[#allocation13 + $0x190] sm:$0xff]
    %v2161 = vld [vmem:[#allocation13 + $0x198] sm:$0xff]
    %v2162 = vld [vmem:[#allocation13 + $0x1a0] sm:$0xff]
    %v2163 = vld [vmem:[#allocation13 + $0x1a8] sm:$0xff]
    %v2164 = vld [vmem:[#allocation13 + $0x1b0] sm:$0xff]
    %v2165 = vld [vmem:[#allocation13 + $0x1b8] sm:$0xff]
    %v2166 = vld [vmem:[#allocation13 + $0x1c0] sm:$0xff]
    %v2167 = vld [vmem:[#allocation13 + $0x1c8] sm:$0xff]
    %v2168 = vld [vmem:[#allocation13 + $0x1d0] sm:$0xff]
    %v2169 = vld [vmem:[#allocation13 + $0x1d8] sm:$0xff]
    %v2170 = vld [vmem:[#allocation13 + $0x1e0] sm:$0xff]
    %v2171 = vld [vmem:[#allocation13 + $0x1e8] sm:$0xff]
    %v2172 = vld [vmem:[#allocation13 + $0x1f0] sm:$0xff]
    %v2173 = vld [vmem:[#allocation13 + $0x1f8] sm:$0xff]
    %v2174 = vld [vmem:[%s1] sm:$0xff]
    %v2175 = vld [vmem:[%s17] sm:$0xff]
    %v2176 = vld [vmem:[%s17 + $0x8] sm:$0xff]
    %v2177 = vld [vmem:[%s17 + $0x10] sm:$0xff]
    %v2178 = vld [vmem:[%s17 + $0x18] sm:$0xff]
    %v2179 = vld [vmem:[%s17 + $0x20] sm:$0xff]
    %v2180 = vld [vmem:[%s17 + $0x28] sm:$0xff]
    %v2181 = vld [vmem:[%s17 + $0x30] sm:$0xff]
    %v2182 = vld [vmem:[%s17 + $0x38] sm:$0xff]
    %vm2183 = vcmask 130048
    %v2185 = vsel %vm2183, %v2174, 0
    %2187 = vmatprep.subr.mxu0 0.0
    %2188 = vmatpush1.msra.mxu0 0.0
    %2189 = vmatprep.subr.mxu0 0.0
    %2190 = vmatpush1.msra.mxu0 0.0
    %2191 = vmatprep.subr.mxu0 0.0
    %2192 = vmatpush1.msra.mxu0 0.0
    %2193 = vmatprep.subr.mxu0 0.0
    %2194 = vmatpush1.msra.mxu0 0.0
    %2195 = vmatprep.subr.mxu0 0.0
    %2196 = vmatpush1.msra.mxu0 0.0
    %2197 = vmatprep.subr.mxu0 0.0
    %2198 = vmatpush1.msra.mxu0 0.0
    %2199 = vmatprep.subr.mxu0 0.0
    %2200 = vmatpush1.msra.mxu0 0.0
    %2201 = vmatprep.subr.mxu0 0.0
    %2202 = vmatpush1.msra.mxu0 0.0
    %2203 = vmatprep.subr.mxu0 0.0
    %2204 = vmatpush1.msra.mxu0 0.0
    %2205 = vmatprep.subr.mxu0 0.0
    %2206 = vmatpush1.msra.mxu0 0.0
    %2207 = vmatprep.subr.mxu0 0.0
    %2208 = vmatpush1.msra.mxu0 0.0
    %2209 = vmatprep.subr.mxu0 0.0
    %2210 = vmatpush1.msra.mxu0 0.0
    %2211 = vmatprep.subr.mxu0 0.0
    %2212 = vmatpush1.msra.mxu0 0.0
    %2213 = vmatprep.subr.mxu0 0.0
    %2214 = vmatpush1.msra.mxu0 0.0
    %2215 = vmatprep.subr.mxu0 %v2180
    %2216 = vmatpush1.msra.mxu0 %v2179
    %2217 = vmatprep.subr.mxu0 %v2176
    %2218 = vmatpush1.msra.mxu0 %v2175
    %2219 = vmatprep.subr.mxu0 0.0
    %2220 = vmatpush2.msra.mxu0 0.0
    %2221 = vmatprep.subr.mxu0 0.0
    %2222 = vmatpush2.msra.mxu0 0.0
    %2223 = vmatprep.subr.mxu0 0.0
    %2224 = vmatpush2.msra.mxu0 0.0
    %2225 = vmatprep.subr.mxu0 0.0
    %2226 = vmatpush2.msra.mxu0 0.0
    %2227 = vmatprep.subr.mxu0 0.0
    %2228 = vmatpush2.msra.mxu0 0.0
    %2229 = vmatprep.subr.mxu0 0.0
    %2230 = vmatpush2.msra.mxu0 0.0
    %2231 = vmatprep.subr.mxu0 0.0
    %2232 = vmatpush2.msra.mxu0 0.0
    %2233 = vmatprep.subr.mxu0 0.0
    %2234 = vmatpush2.msra.mxu0 0.0
    %2235 = vmatprep.subr.mxu0 0.0
    %2236 = vmatpush2.msra.mxu0 0.0
    %2237 = vmatprep.subr.mxu0 0.0
    %2238 = vmatpush2.msra.mxu0 0.0
    %2239 = vmatprep.subr.mxu0 0.0
    %2240 = vmatpush2.msra.mxu0 0.0
    %2241 = vmatprep.subr.mxu0 0.0
    %2242 = vmatpush2.msra.mxu0 0.0
    %2243 = vmatprep.subr.mxu0 0.0
    %2244 = vmatpush2.msra.mxu0 0.0
    %2245 = vmatprep.subr.mxu0 0.0
    %2246 = vmatpush2.msra.mxu0 0.0
    %2247 = vmatprep.subr.mxu0 0.0
    %2248 = vmatpush2.msra.mxu0 0.0
    %2249 = vmatprep.subr.mxu0 0.0
    %2250 = vmatpush2.msra.mxu0 0.0
    %2251 = vmatprep.mubr.f32.mxu0 0.0
    %2252 = vmatmul.mubr.f32.gmra.mxu0 %v2185
    %v2253 = vpop.f32.mrf.mxu0
    %v2254 = vadd.f32 0.0, %v2253
    %v2255 = vpop.f32.mrf.mxu0
    %v2256 = vadd.f32 0.0, %v2255
    %2257 = vdwg.mxu0
    %2258 = vmatprep.subr.mxu0 0.0
    %2259 = vmatpush1.msra.mxu0 0.0
    %2260 = vmatprep.subr.mxu0 0.0
    %2261 = vmatpush1.msra.mxu0 0.0
    %2262 = vmatprep.subr.mxu0 0.0
    %2263 = vmatpush1.msra.mxu0 0.0
    %2264 = vmatprep.subr.mxu0 0.0
    %2265 = vmatpush1.msra.mxu0 0.0
    %2266 = vmatprep.subr.mxu0 0.0
    %2267 = vmatpush1.msra.mxu0 0.0
    %2268 = vmatprep.subr.mxu0 0.0
    %2269 = vmatpush1.msra.mxu0 0.0
    %2270 = vmatprep.subr.mxu0 0.0
    %2271 = vmatpush1.msra.mxu0 0.0
    %2272 = vmatprep.subr.mxu0 0.0
    %2273 = vmatpush1.msra.mxu0 0.0
    %2274 = vmatprep.subr.mxu0 0.0
    %2275 = vmatpush1.msra.mxu0 0.0
    %2276 = vmatprep.subr.mxu0 0.0
    %2277 = vmatpush1.msra.mxu0 0.0
    %2278 = vmatprep.subr.mxu0 0.0
    %2279 = vmatpush1.msra.mxu0 0.0
    %2280 = vmatprep.subr.mxu0 0.0
    %2281 = vmatpush1.msra.mxu0 0.0
    %2282 = vmatprep.subr.mxu0 0.0
    %2283 = vmatpush1.msra.mxu0 0.0
    %2284 = vmatprep.subr.mxu0 0.0
    %2285 = vmatpush1.msra.mxu0 0.0
    %2286 = vmatprep.subr.mxu0 %v2182
    %2287 = vmatpush1.msra.mxu0 %v2181
    %2288 = vmatprep.subr.mxu0 %v2178
    %2289 = vmatpush1.msra.mxu0 %v2177
    %2290 = vmatprep.subr.mxu0 0.0
    %2291 = vmatpush2.msra.mxu0 0.0
    %2292 = vmatprep.subr.mxu0 0.0
    %2293 = vmatpush2.msra.mxu0 0.0
    %2294 = vmatprep.subr.mxu0 0.0
    %2295 = vmatpush2.msra.mxu0 0.0
    %2296 = vmatprep.subr.mxu0 0.0
    %2297 = vmatpush2.msra.mxu0 0.0
    %2298 = vmatprep.subr.mxu0 0.0
    %2299 = vmatpush2.msra.mxu0 0.0
    %2300 = vmatprep.subr.mxu0 0.0
    %2301 = vmatpush2.msra.mxu0 0.0
    %2302 = vmatprep.subr.mxu0 0.0
    %2303 = vmatpush2.msra.mxu0 0.0
    %2304 = vmatprep.subr.mxu0 0.0
    %2305 = vmatpush2.msra.mxu0 0.0
    %2306 = vmatprep.subr.mxu0 0.0
    %2307 = vmatpush2.msra.mxu0 0.0
    %2308 = vmatprep.subr.mxu0 0.0
    %2309 = vmatpush2.msra.mxu0 0.0
    %2310 = vmatprep.subr.mxu0 0.0
    %2311 = vmatpush2.msra.mxu0 0.0
    %2312 = vmatprep.subr.mxu0 0.0
    %2313 = vmatpush2.msra.mxu0 0.0
    %2314 = vmatprep.subr.mxu0 0.0
    %2315 = vmatpush2.msra.mxu0 0.0
    %2316 = vmatprep.subr.mxu0 0.0
    %2317 = vmatpush2.msra.mxu0 0.0
    %2318 = vmatprep.subr.mxu0 0.0
    %2319 = vmatpush2.msra.mxu0 0.0
    %2320 = vmatprep.subr.mxu0 0.0
    %2321 = vmatpush2.msra.mxu0 0.0
    %2322 = vmatprep.mubr.f32.mxu0 0.0
    %2323 = vmatmul.mubr.f32.gmra.mxu0 %v2185
    %v2324 = vpop.f32.mrf.mxu0
    %v2325 = vadd.f32 0.0, %v2324
    %v2326 = vpop.f32.mrf.mxu0
    %v2327 = vadd.f32 0.0, %v2326
    %2328 = vdwg.mxu0
    %2329 = vmatprep.subr.mxu0 %v2171
    %2330 = vmatpush1.msra.mxu0 %v2170
    %2331 = vmatprep.subr.mxu0 %v2167
    %2332 = vmatpush1.msra.mxu0 %v2166
    %2333 = vmatprep.subr.mxu0 %v2163
    %2334 = vmatpush1.msra.mxu0 %v2162
    %2335 = vmatprep.subr.mxu0 %v2159
    %2336 = vmatpush1.msra.mxu0 %v2158
    %2337 = vmatprep.subr.mxu0 %v2155
    %2338 = vmatpush1.msra.mxu0 %v2154
    %2339 = vmatprep.subr.mxu0 %v2151
    %2340 = vmatpush1.msra.mxu0 %v2150
    %2341 = vmatprep.subr.mxu0 %v2147
    %2342 = vmatpush1.msra.mxu0 %v2146
    %2343 = vmatprep.subr.mxu0 %v2143
    %2344 = vmatpush1.msra.mxu0 %v2142
    %2345 = vmatprep.subr.mxu0 %v2139
    %2346 = vmatpush1.msra.mxu0 %v2138
    %2347 = vmatprep.subr.mxu0 %v2135
    %2348 = vmatpush1.msra.mxu0 %v2134
    %2349 = vmatprep.subr.mxu0 %v2131
    %2350 = vmatpush1.msra.mxu0 %v2130
    %2351 = vmatprep.subr.mxu0 %v2127
    %2352 = vmatpush1.msra.mxu0 %v2126
    %2353 = vmatprep.subr.mxu0 %v2123
    %2354 = vmatpush1.msra.mxu0 %v2122
    %2355 = vmatprep.subr.mxu0 %v2119
    %2356 = vmatpush1.msra.mxu0 %v2118
    %2357 = vmatprep.subr.mxu0 %v2115
    %2358 = vmatpush1.msra.mxu0 %v2114
    %2359 = vmatprep.subr.mxu0 %v2111
    %2360 = vmatpush1.msra.mxu0 %v2110
    %2361 = vmatprep.subr.mxu0 0.0
    %2362 = vmatpush2.msra.mxu0 0.0
    %2363 = vmatprep.subr.mxu0 0.0
    %2364 = vmatpush2.msra.mxu0 0.0
    %2365 = vmatprep.subr.mxu0 0.0
    %2366 = vmatpush2.msra.mxu0 0.0
    %2367 = vmatprep.subr.mxu0 0.0
    %2368 = vmatpush2.msra.mxu0 0.0
    %2369 = vmatprep.subr.mxu0 0.0
    %2370 = vmatpush2.msra.mxu0 0.0
    %2371 = vmatprep.subr.mxu0 0.0
    %2372 = vmatpush2.msra.mxu0 0.0
    %2373 = vmatprep.subr.mxu0 0.0
    %2374 = vmatpush2.msra.mxu0 0.0
    %2375 = vmatprep.subr.mxu0 0.0
    %2376 = vmatpush2.msra.mxu0 0.0
    %2377 = vmatprep.subr.mxu0 0.0
    %2378 = vmatpush2.msra.mxu0 0.0
    %2379 = vmatprep.subr.mxu0 0.0
    %2380 = vmatpush2.msra.mxu0 0.0
    %2381 = vmatprep.subr.mxu0 0.0
    %2382 = vmatpush2.msra.mxu0 0.0
    %2383 = vmatprep.subr.mxu0 0.0
    %2384 = vmatpush2.msra.mxu0 0.0
    %2385 = vmatprep.subr.mxu0 0.0
    %2386 = vmatpush2.msra.mxu0 0.0
    %2387 = vmatprep.subr.mxu0 0.0
    %2388 = vmatpush2.msra.mxu0 0.0
    %2389 = vmatprep.subr.mxu0 0.0
    %2390 = vmatpush2.msra.mxu0 0.0
    %2391 = vmatprep.subr.mxu0 0.0
    %2392 = vmatpush2.msra.mxu0 0.0
    %2393 = vmatprep.mubr.f32.mxu0 0.0
    %2394 = vmatmul.mubr.f32.gmra.mxu0 %v1994
    %v2395 = vpop.f32.mrf.mxu0
    %v2396 = vadd.f32 %v2254, %v2395
    %v2397 = vpop.f32.mrf.mxu0
    %v2398 = vadd.f32 %v2256, %v2397
    %2399 = vdwg.mxu0
    %2400 = vmatprep.subr.mxu0 %v2173
    %2401 = vmatpush1.msra.mxu0 %v2172
    %2402 = vmatprep.subr.mxu0 %v2169
    %2403 = vmatpush1.msra.mxu0 %v2168
    %2404 = vmatprep.subr.mxu0 %v2165
    %2405 = vmatpush1.msra.mxu0 %v2164
    %2406 = vmatprep.subr.mxu0 %v2161
    %2407 = vmatpush1.msra.mxu0 %v2160
    %2408 = vmatprep.subr.mxu0 %v2157
    %2409 = vmatpush1.msra.mxu0 %v2156
    %2410 = vmatprep.subr.mxu0 %v2153
    %2411 = vmatpush1.msra.mxu0 %v2152
    %2412 = vmatprep.subr.mxu0 %v2149
    %2413 = vmatpush1.msra.mxu0 %v2148
    %2414 = vmatprep.subr.mxu0 %v2145
    %2415 = vmatpush1.msra.mxu0 %v2144
    %2416 = vmatprep.subr.mxu0 %v2141
    %2417 = vmatpush1.msra.mxu0 %v2140
    %2418 = vmatprep.subr.mxu0 %v2137
    %2419 = vmatpush1.msra.mxu0 %v2136
    %2420 = vmatprep.subr.mxu0 %v2133
    %2421 = vmatpush1.msra.mxu0 %v2132
    %2422 = vmatprep.subr.mxu0 %v2129
    %2423 = vmatpush1.msra.mxu0 %v2128
    %2424 = vmatprep.subr.mxu0 %v2125
    %2425 = vmatpush1.msra.mxu0 %v2124
    %2426 = vmatprep.subr.mxu0 %v2121
    %2427 = vmatpush1.msra.mxu0 %v2120
    %2428 = vmatprep.subr.mxu0 %v2117
    %2429 = vmatpush1.msra.mxu0 %v2116
    %2430 = vmatprep.subr.mxu0 %v2113
    %2431 = vmatpush1.msra.mxu0 %v2112
    %2432 = vmatprep.subr.mxu0 0.0
    %2433 = vmatpush2.msra.mxu0 0.0
    %2434 = vmatprep.subr.mxu0 0.0
    %2435 = vmatpush2.msra.mxu0 0.0
    %2436 = vmatprep.subr.mxu0 0.0
    %2437 = vmatpush2.msra.mxu0 0.0
    %2438 = vmatprep.subr.mxu0 0.0
    %2439 = vmatpush2.msra.mxu0 0.0
    %2440 = vmatprep.subr.mxu0 0.0
    %2441 = vmatpush2.msra.mxu0 0.0
    %2442 = vmatprep.subr.mxu0 0.0
    %2443 = vmatpush2.msra.mxu0 0.0
    %2444 = vmatprep.subr.mxu0 0.0
    %2445 = vmatpush2.msra.mxu0 0.0
    %2446 = vmatprep.subr.mxu0 0.0
    %2447 = vmatpush2.msra.mxu0 0.0
    %2448 = vmatprep.subr.mxu0 0.0
    %2449 = vmatpush2.msra.mxu0 0.0
    %2450 = vmatprep.subr.mxu0 0.0
    %2451 = vmatpush2.msra.mxu0 0.0
    %2452 = vmatprep.subr.mxu0 0.0
    %2453 = vmatpush2.msra.mxu0 0.0
    %2454 = vmatprep.subr.mxu0 0.0
    %2455 = vmatpush2.msra.mxu0 0.0
    %2456 = vmatprep.subr.mxu0 0.0
    %2457 = vmatpush2.msra.mxu0 0.0
    %2458 = vmatprep.subr.mxu0 0.0
    %2459 = vmatpush2.msra.mxu0 0.0
    %2460 = vmatprep.subr.mxu0 0.0
    %2461 = vmatpush2.msra.mxu0 0.0
    %2462 = vmatprep.subr.mxu0 0.0
    %2463 = vmatpush2.msra.mxu0 0.0
    %2464 = vmatprep.mubr.f32.mxu0 0.0
    %2465 = vmatmul.mubr.f32.gmra.mxu0 %v1994
    %v2466 = vpop.f32.mrf.mxu0
    %v2467 = vadd.f32 %v2325, %v2466
    %v2468 = vpop.f32.mrf.mxu0
    %v2469 = vadd.f32 %v2327, %v2468
    %2470 = vdwg.mxu0
    %v2471 = vld [vmem:[#allocation15] sm:$0xf]
    %v2473 = vlaneseq
    %v2474 = vshrl.u32 %v2473, 7
    %v2475 = vsub.s32 0, %v2474
    %v2476 = vrot.slane %v2471, %v2475
    %v2477 = vlaneseq
    %v2478 = vshrl.u32 %v2477, 7
    %v2479 = vsub.s32 1, %v2478
    %v2480 = vrot.slane %v2471, %v2479
    %v2481 = vlaneseq
    %v2482 = vshrl.u32 %v2481, 7
    %v2483 = vsub.s32 2, %v2482
    %v2484 = vrot.slane %v2471, %v2483
    %v2485 = vlaneseq
    %v2486 = vshrl.u32 %v2485, 7
    %v2487 = vsub.s32 3, %v2486
    %v2488 = vrot.slane %v2471, %v2487
    %v2493 = vadd.f32 %v2396, %v2476
    %v2494 = vadd.f32 %v2398, %v2480
    %v2495 = vadd.f32 %v2467, %v2484
    %v2496 = vadd.f32 %v2469, %v2488
    %v2497 = vmul.f32 %v2106, %v2493
    %v2498 = vmul.f32 %v2108, %v2494
    %v2499 = vld [vmem:[#allocation16] sm:$0xff]
    %v2500 = vld [vmem:[#allocation16 + $0x8] sm:$0xff]
    %v2501 = vld [vmem:[#allocation16 + $0x10] sm:$0xff]
    %v2502 = vld [vmem:[#allocation16 + $0x18] sm:$0xff]
    %v2503 = vld [vmem:[#allocation16 + $0x20] sm:$0xff]
    %v2504 = vld [vmem:[#allocation16 + $0x28] sm:$0xff]
    %v2505 = vld [vmem:[#allocation16 + $0x30] sm:$0xff]
    %v2506 = vld [vmem:[#allocation16 + $0x38] sm:$0xff]
    %v2507 = vld [vmem:[#allocation16 + $0x40] sm:$0xff]
    %v2508 = vld [vmem:[#allocation16 + $0x48] sm:$0xff]
    %v2509 = vld [vmem:[#allocation16 + $0x50] sm:$0xff]
    %v2510 = vld [vmem:[#allocation16 + $0x58] sm:$0xff]
    %v2511 = vld [vmem:[#allocation16 + $0x60] sm:$0xff]
    %v2512 = vld [vmem:[#allocation16 + $0x68] sm:$0xff]
    %v2513 = vld [vmem:[#allocation16 + $0x70] sm:$0xff]
    %v2514 = vld [vmem:[#allocation16 + $0x78] sm:$0xff]
    %v2515 = vld [vmem:[#allocation16 + $0x80] sm:$0xff]
    %v2516 = vld [vmem:[#allocation16 + $0x88] sm:$0xff]
    %v2517 = vld [vmem:[#allocation16 + $0x90] sm:$0xff]
    %v2518 = vld [vmem:[#allocation16 + $0x98] sm:$0xff]
    %v2519 = vld [vmem:[#allocation16 + $0xa0] sm:$0xff]
    %v2520 = vld [vmem:[#allocation16 + $0xa8] sm:$0xff]
    %v2521 = vld [vmem:[#allocation16 + $0xb0] sm:$0xff]
    %v2522 = vld [vmem:[#allocation16 + $0xb8] sm:$0xff]
    %v2523 = vld [vmem:[#allocation16 + $0xc0] sm:$0xff]
    %v2524 = vld [vmem:[#allocation16 + $0xc8] sm:$0xff]
    %v2525 = vld [vmem:[#allocation16 + $0xd0] sm:$0xff]
    %v2526 = vld [vmem:[#allocation16 + $0xd8] sm:$0xff]
    %v2527 = vld [vmem:[#allocation16 + $0xe0] sm:$0xff]
    %v2528 = vld [vmem:[#allocation16 + $0xe8] sm:$0xff]
    %v2529 = vld [vmem:[#allocation16 + $0xf0] sm:$0xff]
    %v2530 = vld [vmem:[#allocation16 + $0xf8] sm:$0xff]
    %2531 = vmatprep.subr.mxu0 0.0
    %2532 = vmatpush1.msra.mxu0 %v2514
    %2533 = vmatprep.subr.mxu0 0.0
    %2534 = vmatpush1.msra.mxu0 %v2513
    %2535 = vmatprep.subr.mxu0 0.0
    %2536 = vmatpush1.msra.mxu0 %v2512
    %2537 = vmatprep.subr.mxu0 0.0
    %2538 = vmatpush1.msra.mxu0 %v2511
    %2539 = vmatprep.subr.mxu0 0.0
    %2540 = vmatpush1.msra.mxu0 %v2510
    %2541 = vmatprep.subr.mxu0 0.0
    %2542 = vmatpush1.msra.mxu0 %v2509
    %2543 = vmatprep.subr.mxu0 0.0
    %2544 = vmatpush1.msra.mxu0 %v2508
    %2545 = vmatprep.subr.mxu0 0.0
    %2546 = vmatpush1.msra.mxu0 %v2507
    %2547 = vmatprep.subr.mxu0 0.0
    %2548 = vmatpush1.msra.mxu0 %v2506
    %2549 = vmatprep.subr.mxu0 0.0
    %2550 = vmatpush1.msra.mxu0 %v2505
    %2551 = vmatprep.subr.mxu0 0.0
    %2552 = vmatpush1.msra.mxu0 %v2504
    %2553 = vmatprep.subr.mxu0 0.0
    %2554 = vmatpush1.msra.mxu0 %v2503
    %2555 = vmatprep.subr.mxu0 0.0
    %2556 = vmatpush1.msra.mxu0 %v2502
    %2557 = vmatprep.subr.mxu0 0.0
    %2558 = vmatpush1.msra.mxu0 %v2501
    %2559 = vmatprep.subr.mxu0 0.0
    %2560 = vmatpush1.msra.mxu0 %v2500
    %2561 = vmatprep.subr.mxu0 0.0
    %2562 = vmatpush1.msra.mxu0 %v2499
    %2563 = vmatprep.subr.mxu0 0.0
    %2564 = vmatpush2.msra.mxu0 %v2530
    %2565 = vmatprep.subr.mxu0 0.0
    %2566 = vmatpush2.msra.mxu0 %v2529
    %2567 = vmatprep.subr.mxu0 0.0
    %2568 = vmatpush2.msra.mxu0 %v2528
    %2569 = vmatprep.subr.mxu0 0.0
    %2570 = vmatpush2.msra.mxu0 %v2527
    %2571 = vmatprep.subr.mxu0 0.0
    %2572 = vmatpush2.msra.mxu0 %v2526
    %2573 = vmatprep.subr.mxu0 0.0
    %2574 = vmatpush2.msra.mxu0 %v2525
    %2575 = vmatprep.subr.mxu0 0.0
    %2576 = vmatpush2.msra.mxu0 %v2524
    %2577 = vmatprep.subr.mxu0 0.0
    %2578 = vmatpush2.msra.mxu0 %v2523
    %2579 = vmatprep.subr.mxu0 0.0
    %2580 = vmatpush2.msra.mxu0 %v2522
    %2581 = vmatprep.subr.mxu0 0.0
    %2582 = vmatpush2.msra.mxu0 %v2521
    %2583 = vmatprep.subr.mxu0 0.0
    %2584 = vmatpush2.msra.mxu0 %v2520
    %2585 = vmatprep.subr.mxu0 0.0
    %2586 = vmatpush2.msra.mxu0 %v2519
    %2587 = vmatprep.subr.mxu0 0.0
    %2588 = vmatpush2.msra.mxu0 %v2518
    %2589 = vmatprep.subr.mxu0 0.0
    %2590 = vmatpush2.msra.mxu0 %v2517
    %2591 = vmatprep.subr.mxu0 0.0
    %2592 = vmatpush2.msra.mxu0 %v2516
    %2593 = vmatprep.subr.mxu0 0.0
    %2594 = vmatpush2.msra.mxu0 %v2515
    %2595 = vmatprep.mubr.f32.mxu0 %v2498
    %2596 = vmatmul.mubr.f32.gmra.mxu0 %v2497
    %v2597 = vpop.f32.mrf.mxu0
    %v2598 = vadd.f32 %v657, %v2597
    %v2599 = vpop.f32.mrf.mxu0
    %2600 = vdwg.mxu0
    %2601 = vrot.lane.b32.xlu0 %v2598, 32
    %v2602 = vpop.permute.xlu0 %2601
    %v2603 = vmax.f32 %v2598, %v2602
    %2604 = vrot.lane.b32.xlu0 %v2598, 64
    %v2605 = vpop.permute.xlu0 %2604
    %v2606 = vmax.f32 %v2603, %v2605
    %2607 = vrot.lane.b32.xlu0 %v2598, 96
    %v2608 = vpop.permute.xlu0 %2607
    %v2609 = vmax.f32 %v2606, %v2608
    %v2610 = vsub.f32 %v2598, %v2609
    %v2611 = vmul.f32 %v2610, 1.442695
    %v2612 = vpow.pop %v2611
    %2613 = vrot.lane.b32.xlu0 %v2612, 32
    %v2614 = vpop.permute.xlu0 %2613
    %v2615 = vadd.f32 %v2612, %v2614
    %2616 = vrot.lane.b32.xlu0 %v2612, 64
    %v2617 = vpop.permute.xlu0 %2616
    %v2618 = vadd.f32 %v2615, %v2617
    %2619 = vrot.lane.b32.xlu0 %v2612, 96
    %v2620 = vpop.permute.xlu0 %2619
    %v2621 = vadd.f32 %v2618, %v2620
    %v2622 = vrcp.pop %v2621
    %v2623 = vmul.f32 %v2612, %v2622
    %v2624 = vld [vmem:[#allocation18] sm:$0xff]
    %v2625 = vld [vmem:[#allocation18 + $0x8] sm:$0xff]
    %v2626 = vld [vmem:[#allocation18 + $0x10] sm:$0xff]
    %v2627 = vld [vmem:[#allocation18 + $0x18] sm:$0xff]
    %v2628 = vld [vmem:[#allocation18 + $0x20] sm:$0xff]
    %v2629 = vld [vmem:[#allocation18 + $0x28] sm:$0xff]
    %v2630 = vld [vmem:[#allocation18 + $0x30] sm:$0xff]
    %v2631 = vld [vmem:[#allocation18 + $0x38] sm:$0xff]
    %v2632 = vld [vmem:[#allocation18 + $0x40] sm:$0xff]
    %v2633 = vld [vmem:[#allocation18 + $0x48] sm:$0xff]
    %v2634 = vld [vmem:[#allocation18 + $0x50] sm:$0xff]
    %v2635 = vld [vmem:[#allocation18 + $0x58] sm:$0xff]
    %v2636 = vld [vmem:[#allocation18 + $0x60] sm:$0xff]
    %v2637 = vld [vmem:[#allocation18 + $0x68] sm:$0xff]
    %v2638 = vld [vmem:[#allocation18 + $0x70] sm:$0xff]
    %v2639 = vld [vmem:[#allocation18 + $0x78] sm:$0xff]
    %v2640 = vld [vmem:[#allocation18 + $0x80] sm:$0xff]
    %v2641 = vld [vmem:[#allocation18 + $0x88] sm:$0xff]
    %v2642 = vld [vmem:[#allocation18 + $0x90] sm:$0xff]
    %v2643 = vld [vmem:[#allocation18 + $0x98] sm:$0xff]
    %v2644 = vld [vmem:[#allocation18 + $0xa0] sm:$0xff]
    %v2645 = vld [vmem:[#allocation18 + $0xa8] sm:$0xff]
    %v2646 = vld [vmem:[#allocation18 + $0xb0] sm:$0xff]
    %v2647 = vld [vmem:[#allocation18 + $0xb8] sm:$0xff]
    %v2648 = vld [vmem:[#allocation18 + $0xc0] sm:$0xff]
    %v2649 = vld [vmem:[#allocation18 + $0xc8] sm:$0xff]
    %v2650 = vld [vmem:[#allocation18 + $0xd0] sm:$0xff]
    %v2651 = vld [vmem:[#allocation18 + $0xd8] sm:$0xff]
    %v2652 = vld [vmem:[#allocation18 + $0xe0] sm:$0xff]
    %v2653 = vld [vmem:[#allocation18 + $0xe8] sm:$0xff]
    %v2654 = vld [vmem:[#allocation18 + $0xf0] sm:$0xff]
    %v2655 = vld [vmem:[#allocation18 + $0xf8] sm:$0xff]
    %2656 = vmatprep.subr.mxu0 %v2655
    %2657 = vmatpush1.msra.mxu0 %v2654
    %2658 = vmatprep.subr.mxu0 %v2653
    %2659 = vmatpush1.msra.mxu0 %v2652
    %2660 = vmatprep.subr.mxu0 %v2651
    %2661 = vmatpush1.msra.mxu0 %v2650
    %2662 = vmatprep.subr.mxu0 %v2649
    %2663 = vmatpush1.msra.mxu0 %v2648
    %2664 = vmatprep.subr.mxu0 %v2647
    %2665 = vmatpush1.msra.mxu0 %v2646
    %2666 = vmatprep.subr.mxu0 %v2645
    %2667 = vmatpush1.msra.mxu0 %v2644
    %2668 = vmatprep.subr.mxu0 %v2643
    %2669 = vmatpush1.msra.mxu0 %v2642
    %2670 = vmatprep.subr.mxu0 %v2641
    %2671 = vmatpush1.msra.mxu0 %v2640
    %2672 = vmatprep.subr.mxu0 %v2639
    %2673 = vmatpush1.msra.mxu0 %v2638
    %2674 = vmatprep.subr.mxu0 %v2637
    %2675 = vmatpush1.msra.mxu0 %v2636
    %2676 = vmatprep.subr.mxu0 %v2635
    %2677 = vmatpush1.msra.mxu0 %v2634
    %2678 = vmatprep.subr.mxu0 %v2633
    %2679 = vmatpush1.msra.mxu0 %v2632
    %2680 = vmatprep.subr.mxu0 %v2631
    %2681 = vmatpush1.msra.mxu0 %v2630
    %2682 = vmatprep.subr.mxu0 %v2629
    %2683 = vmatpush1.msra.mxu0 %v2628
    %2684 = vmatprep.subr.mxu0 %v2627
    %2685 = vmatpush1.msra.mxu0 %v2626
    %2686 = vmatprep.subr.mxu0 %v2625
    %2687 = vmatpush1.msra.mxu0 %v2624
    %2688 = vmatprep.subr.mxu0 0.0
    %2689 = vmatpush2.msra.mxu0 0.0
    %2690 = vmatprep.subr.mxu0 0.0
    %2691 = vmatpush2.msra.mxu0 0.0
    %2692 = vmatprep.subr.mxu0 0.0
    %2693 = vmatpush2.msra.mxu0 0.0
    %2694 = vmatprep.subr.mxu0 0.0
    %2695 = vmatpush2.msra.mxu0 0.0
    %2696 = vmatprep.subr.mxu0 0.0
    %2697 = vmatpush2.msra.mxu0 0.0
    %2698 = vmatprep.subr.mxu0 0.0
    %2699 = vmatpush2.msra.mxu0 0.0
    %2700 = vmatprep.subr.mxu0 0.0
    %2701 = vmatpush2.msra.mxu0 0.0
    %2702 = vmatprep.subr.mxu0 0.0
    %2703 = vmatpush2.msra.mxu0 0.0
    %2704 = vmatprep.subr.mxu0 0.0
    %2705 = vmatpush2.msra.mxu0 0.0
    %2706 = vmatprep.subr.mxu0 0.0
    %2707 = vmatpush2.msra.mxu0 0.0
    %2708 = vmatprep.subr.mxu0 0.0
    %2709 = vmatpush2.msra.mxu0 0.0
    %2710 = vmatprep.subr.mxu0 0.0
    %2711 = vmatpush2.msra.mxu0 0.0
    %2712 = vmatprep.subr.mxu0 0.0
    %2713 = vmatpush2.msra.mxu0 0.0
    %2714 = vmatprep.subr.mxu0 0.0
    %2715 = vmatpush2.msra.mxu0 0.0
    %2716 = vmatprep.subr.mxu0 0.0
    %2717 = vmatpush2.msra.mxu0 0.0
    %2718 = vmatprep.subr.mxu0 0.0
    %2719 = vmatpush2.msra.mxu0 0.0
    %2720 = vmatprep.mubr.f32.mxu0 0.0
    %2721 = vmatmul.mubr.f32.gmra.mxu0 %v2623
    %v2722 = vpop.f32.mrf.mxu0
    %v2723 = vadd.f32 0.0, %v2722
    %v2724 = vpop.f32.mrf.mxu0
    %v2725 = vadd.f32 0.0, %v2724
    %2726 = vdwg.mxu0
    %v2727 = vmul.f32 %v2723, %v2495
    %v2728 = vmul.f32 %v2725, %v2496
    %v2729 = vld [vmem:[#allocation21] sm:$0xff]
    %v2730 = vld [vmem:[#allocation21 + $0x8] sm:$0xff]
    %v2731 = vld [vmem:[#allocation21 + $0x10] sm:$0xff]
    %v2732 = vld [vmem:[#allocation21 + $0x18] sm:$0xff]
    %v2733 = vld [vmem:[#allocation21 + $0x20] sm:$0xff]
    %v2734 = vld [vmem:[#allocation21 + $0x28] sm:$0xff]
    %v2735 = vld [vmem:[#allocation21 + $0x30] sm:$0xff]
    %v2736 = vld [vmem:[#allocation21 + $0x38] sm:$0xff]
    %v2737 = vld [vmem:[#allocation21 + $0x40] sm:$0xff]
    %v2738 = vld [vmem:[#allocation21 + $0x48] sm:$0xff]
    %v2739 = vld [vmem:[#allocation21 + $0x50] sm:$0xff]
    %v2740 = vld [vmem:[#allocation21 + $0x58] sm:$0xff]
    %v2741 = vld [vmem:[#allocation21 + $0x60] sm:$0xff]
    %v2742 = vld [vmem:[#allocation21 + $0x68] sm:$0xff]
    %v2743 = vld [vmem:[#allocation21 + $0x70] sm:$0xff]
    %v2744 = vld [vmem:[#allocation21 + $0x78] sm:$0xff]
    %v2745 = vld [vmem:[#allocation21 + $0x80] sm:$0xff]
    %v2746 = vld [vmem:[#allocation21 + $0x88] sm:$0xff]
    %v2747 = vld [vmem:[#allocation21 + $0x90] sm:$0xff]
    %v2748 = vld [vmem:[#allocation21 + $0x98] sm:$0xff]
    %v2749 = vld [vmem:[#allocation21 + $0xa0] sm:$0xff]
    %v2750 = vld [vmem:[#allocation21 + $0xa8] sm:$0xff]
    %v2751 = vld [vmem:[#allocation21 + $0xb0] sm:$0xff]
    %v2752 = vld [vmem:[#allocation21 + $0xb8] sm:$0xff]
    %v2753 = vld [vmem:[#allocation21 + $0xc0] sm:$0xff]
    %v2754 = vld [vmem:[#allocation21 + $0xc8] sm:$0xff]
    %v2755 = vld [vmem:[#allocation21 + $0xd0] sm:$0xff]
    %v2756 = vld [vmem:[#allocation21 + $0xd8] sm:$0xff]
    %v2757 = vld [vmem:[#allocation21 + $0xe0] sm:$0xff]
    %v2758 = vld [vmem:[#allocation21 + $0xe8] sm:$0xff]
    %v2759 = vld [vmem:[#allocation21 + $0xf0] sm:$0xff]
    %v2760 = vld [vmem:[#allocation21 + $0xf8] sm:$0xff]
    %v2761 = vld [vmem:[#allocation22] sm:$0x1]
    %v2763 = vlaneseq
    %v2764 = vshrl.u32 %v2763, 7
    %v2765 = vsub.s32 0, %v2764
    %v2766 = vrot.slane %v2761, %v2765
    %2768 = vmatprep.subr.mxu0 0.0
    %2769 = vmatpush1.msra.mxu0 %v2744
    %2770 = vmatprep.subr.mxu0 0.0
    %2771 = vmatpush1.msra.mxu0 %v2743
    %2772 = vmatprep.subr.mxu0 0.0
    %2773 = vmatpush1.msra.mxu0 %v2742
    %2774 = vmatprep.subr.mxu0 0.0
    %2775 = vmatpush1.msra.mxu0 %v2741
    %2776 = vmatprep.subr.mxu0 0.0
    %2777 = vmatpush1.msra.mxu0 %v2740
    %2778 = vmatprep.subr.mxu0 0.0
    %2779 = vmatpush1.msra.mxu0 %v2739
    %2780 = vmatprep.subr.mxu0 0.0
    %2781 = vmatpush1.msra.mxu0 %v2738
    %2782 = vmatprep.subr.mxu0 0.0
    %2783 = vmatpush1.msra.mxu0 %v2737
    %2784 = vmatprep.subr.mxu0 0.0
    %2785 = vmatpush1.msra.mxu0 %v2736
    %2786 = vmatprep.subr.mxu0 0.0
    %2787 = vmatpush1.msra.mxu0 %v2735
    %2788 = vmatprep.subr.mxu0 0.0
    %2789 = vmatpush1.msra.mxu0 %v2734
    %2790 = vmatprep.subr.mxu0 0.0
    %2791 = vmatpush1.msra.mxu0 %v2733
    %2792 = vmatprep.subr.mxu0 0.0
    %2793 = vmatpush1.msra.mxu0 %v2732
    %2794 = vmatprep.subr.mxu0 0.0
    %2795 = vmatpush1.msra.mxu0 %v2731
    %2796 = vmatprep.subr.mxu0 0.0
    %2797 = vmatpush1.msra.mxu0 %v2730
    %2798 = vmatprep.subr.mxu0 0.0
    %2799 = vmatpush1.msra.mxu0 %v2729
    %2800 = vmatprep.subr.mxu0 0.0
    %2801 = vmatpush2.msra.mxu0 %v2760
    %2802 = vmatprep.subr.mxu0 0.0
    %2803 = vmatpush2.msra.mxu0 %v2759
    %2804 = vmatprep.subr.mxu0 0.0
    %2805 = vmatpush2.msra.mxu0 %v2758
    %2806 = vmatprep.subr.mxu0 0.0
    %2807 = vmatpush2.msra.mxu0 %v2757
    %2808 = vmatprep.subr.mxu0 0.0
    %2809 = vmatpush2.msra.mxu0 %v2756
    %2810 = vmatprep.subr.mxu0 0.0
    %2811 = vmatpush2.msra.mxu0 %v2755
    %2812 = vmatprep.subr.mxu0 0.0
    %2813 = vmatpush2.msra.mxu0 %v2754
    %2814 = vmatprep.subr.mxu0 0.0
    %2815 = vmatpush2.msra.mxu0 %v2753
    %2816 = vmatprep.subr.mxu0 0.0
    %2817 = vmatpush2.msra.mxu0 %v2752
    %2818 = vmatprep.subr.mxu0 0.0
    %2819 = vmatpush2.msra.mxu0 %v2751
    %2820 = vmatprep.subr.mxu0 0.0
    %2821 = vmatpush2.msra.mxu0 %v2750
    %2822 = vmatprep.subr.mxu0 0.0
    %2823 = vmatpush2.msra.mxu0 %v2749
    %2824 = vmatprep.subr.mxu0 0.0
    %2825 = vmatpush2.msra.mxu0 %v2748
    %2826 = vmatprep.subr.mxu0 0.0
    %2827 = vmatpush2.msra.mxu0 %v2747
    %2828 = vmatprep.subr.mxu0 0.0
    %2829 = vmatpush2.msra.mxu0 %v2746
    %2830 = vmatprep.subr.mxu0 0.0
    %2831 = vmatpush2.msra.mxu0 %v2745
    %2832 = vmatprep.mubr.f32.mxu0 %v2728
    %2833 = vmatmul.mubr.f32.gmra.mxu0 %v2727
    %v2834 = vpop.f32.mrf.mxu0
    %v2835 = vadd.f32 %v2766, %v2834
    %v2836 = vpop.f32.mrf.mxu0
    %2837 = vdwg.mxu0
    %v2838 = vtanh.pop %v2835
    %v2839 = vld [vmem:[#allocation24] sm:$0xff]
    %v2840 = vld [vmem:[#allocation24 + $0x8] sm:$0xff]
    %v2841 = vld [vmem:[#allocation24 + $0x10] sm:$0xff]
    %v2842 = vld [vmem:[#allocation24 + $0x18] sm:$0xff]
    %v2843 = vld [vmem:[#allocation24 + $0x20] sm:$0xff]
    %v2844 = vld [vmem:[#allocation24 + $0x28] sm:$0xff]
    %v2845 = vld [vmem:[#allocation24 + $0x30] sm:$0xff]
    %v2846 = vld [vmem:[#allocation24 + $0x38] sm:$0xff]
    %v2847 = vld [vmem:[#allocation25] sm:$0x1]
    %v2849 = vlaneseq
    %v2850 = vshrl.u32 %v2849, 7
    %v2851 = vsub.s32 0, %v2850
    %v2852 = vrot.slane %v2847, %v2851
    %vm2854 = vcmask 523264
    %v2856 = vsel %vm2854, %v2838, 0
    %2858 = vmatprep.subr.mxu0 0.0
    %2859 = vmatpush1.msra.mxu0 0.0
    %2860 = vmatprep.subr.mxu0 0.0
    %2861 = vmatpush1.msra.mxu0 0.0
    %2862 = vmatprep.subr.mxu0 0.0
    %2863 = vmatpush1.msra.mxu0 0.0
    %2864 = vmatprep.subr.mxu0 0.0
    %2865 = vmatpush1.msra.mxu0 0.0
    %2866 = vmatprep.subr.mxu0 0.0
    %2867 = vmatpush1.msra.mxu0 0.0
    %2868 = vmatprep.subr.mxu0 0.0
    %2869 = vmatpush1.msra.mxu0 0.0
    %2870 = vmatprep.subr.mxu0 0.0
    %2871 = vmatpush1.msra.mxu0 0.0
    %2872 = vmatprep.subr.mxu0 0.0
    %2873 = vmatpush1.msra.mxu0 0.0
    %2874 = vmatprep.subr.mxu0 0.0
    %2875 = vmatpush1.msra.mxu0 %v2846
    %2876 = vmatprep.subr.mxu0 0.0
    %2877 = vmatpush1.msra.mxu0 %v2845
    %2878 = vmatprep.subr.mxu0 0.0
    %2879 = vmatpush1.msra.mxu0 %v2844
    %2880 = vmatprep.subr.mxu0 0.0
    %2881 = vmatpush1.msra.mxu0 %v2843
    %2882 = vmatprep.subr.mxu0 0.0
    %2883 = vmatpush1.msra.mxu0 %v2842
    %2884 = vmatprep.subr.mxu0 0.0
    %2885 = vmatpush1.msra.mxu0 %v2841
    %2886 = vmatprep.subr.mxu0 0.0
    %2887 = vmatpush1.msra.mxu0 %v2840
    %2888 = vmatprep.subr.mxu0 0.0
    %2889 = vmatpush1.msra.mxu0 %v2839
    %2890 = vmatprep.subr.mxu0 0.0
    %2891 = vmatpush2.msra.mxu0 0.0
    %2892 = vmatprep.subr.mxu0 0.0
    %2893 = vmatpush2.msra.mxu0 0.0
    %2894 = vmatprep.subr.mxu0 0.0
    %2895 = vmatpush2.msra.mxu0 0.0
    %2896 = vmatprep.subr.mxu0 0.0
    %2897 = vmatpush2.msra.mxu0 0.0
    %2898 = vmatprep.subr.mxu0 0.0
    %2899 = vmatpush2.msra.mxu0 0.0
    %2900 = vmatprep.subr.mxu0 0.0
    %2901 = vmatpush2.msra.mxu0 0.0
    %2902 = vmatprep.subr.mxu0 0.0
    %2903 = vmatpush2.msra.mxu0 0.0
    %2904 = vmatprep.subr.mxu0 0.0
    %2905 = vmatpush2.msra.mxu0 0.0
    %2906 = vmatprep.subr.mxu0 0.0
    %2907 = vmatpush2.msra.mxu0 0.0
    %2908 = vmatprep.subr.mxu0 0.0
    %2909 = vmatpush2.msra.mxu0 0.0
    %2910 = vmatprep.subr.mxu0 0.0
    %2911 = vmatpush2.msra.mxu0 0.0
    %2912 = vmatprep.subr.mxu0 0.0
    %2913 = vmatpush2.msra.mxu0 0.0
    %2914 = vmatprep.subr.mxu0 0.0
    %2915 = vmatpush2.msra.mxu0 0.0
    %2916 = vmatprep.subr.mxu0 0.0
    %2917 = vmatpush2.msra.mxu0 0.0
    %2918 = vmatprep.subr.mxu0 0.0
    %2919 = vmatpush2.msra.mxu0 0.0
    %2920 = vmatprep.subr.mxu0 0.0
    %2921 = vmatpush2.msra.mxu0 0.0
    %2922 = vmatprep.mubr.f32.mxu0 0.0
    %2923 = vmatmul.mubr.f32.gmra.mxu0 %v2856
    %v2924 = vpop.f32.mrf.mxu0
    %v2925 = vadd.f32 %v2852, %v2924
    %v2926 = vpop.f32.mrf.mxu0
    %2927 = vdwg.mxu0
    %v2928 = vtanh.pop %v2925
    %v2929 = vld [vmem:[#allocation27] sm:$0xff]
    %v2930 = vld [vmem:[#allocation27 + $0x8] sm:$0xff]
    %v2931 = vld [vmem:[#allocation27 + $0x10] sm:$0xff]
    %v2932 = vld [vmem:[#allocation27 + $0x18] sm:$0xff]
    %v2933 = vld [vmem:[#allocation27 + $0x20] sm:$0xff]
    %v2934 = vld [vmem:[#allocation27 + $0x28] sm:$0xff]
    %v2935 = vld [vmem:[#allocation27 + $0x30] sm:$0xff]
    %v2936 = vld [vmem:[#allocation27 + $0x38] sm:$0xff]
    %v2937 = vld [vmem:[#allocation28] sm:$0x1]
    %v2939 = vlaneseq
    %v2940 = vshrl.u32 %v2939, 7
    %v2941 = vsub.s32 0, %v2940
    %v2942 = vrot.slane %v2937, %v2941
    %v2945 = vsel %vm2854, %v2928, 0
    %2947 = vmatprep.subr.mxu0 0.0
    %2948 = vmatpush1.msra.mxu0 0.0
    %2949 = vmatprep.subr.mxu0 0.0
    %2950 = vmatpush1.msra.mxu0 0.0
    %2951 = vmatprep.subr.mxu0 0.0
    %2952 = vmatpush1.msra.mxu0 0.0
    %2953 = vmatprep.subr.mxu0 0.0
    %2954 = vmatpush1.msra.mxu0 0.0
    %2955 = vmatprep.subr.mxu0 0.0
    %2956 = vmatpush1.msra.mxu0 0.0
    %2957 = vmatprep.subr.mxu0 0.0
    %2958 = vmatpush1.msra.mxu0 0.0
    %2959 = vmatprep.subr.mxu0 0.0
    %2960 = vmatpush1.msra.mxu0 0.0
    %2961 = vmatprep.subr.mxu0 0.0
    %2962 = vmatpush1.msra.mxu0 0.0
    %2963 = vmatprep.subr.mxu0 0.0
    %2964 = vmatpush1.msra.mxu0 %v2936
    %2965 = vmatprep.subr.mxu0 0.0
    %2966 = vmatpush1.msra.mxu0 %v2935
    %2967 = vmatprep.subr.mxu0 0.0
    %2968 = vmatpush1.msra.mxu0 %v2934
    %2969 = vmatprep.subr.mxu0 0.0
    %2970 = vmatpush1.msra.mxu0 %v2933
    %2971 = vmatprep.subr.mxu0 0.0
    %2972 = vmatpush1.msra.mxu0 %v2932
    %2973 = vmatprep.subr.mxu0 0.0
    %2974 = vmatpush1.msra.mxu0 %v2931
    %2975 = vmatprep.subr.mxu0 0.0
    %2976 = vmatpush1.msra.mxu0 %v2930
    %2977 = vmatprep.subr.mxu0 0.0
    %2978 = vmatpush1.msra.mxu0 %v2929
    %2979 = vmatprep.subr.mxu0 0.0
    %2980 = vmatpush2.msra.mxu0 0.0
    %2981 = vmatprep.subr.mxu0 0.0
    %2982 = vmatpush2.msra.mxu0 0.0
    %2983 = vmatprep.subr.mxu0 0.0
    %2984 = vmatpush2.msra.mxu0 0.0
    %2985 = vmatprep.subr.mxu0 0.0
    %2986 = vmatpush2.msra.mxu0 0.0
    %2987 = vmatprep.subr.mxu0 0.0
    %2988 = vmatpush2.msra.mxu0 0.0
    %2989 = vmatprep.subr.mxu0 0.0
    %2990 = vmatpush2.msra.mxu0 0.0
    %2991 = vmatprep.subr.mxu0 0.0
    %2992 = vmatpush2.msra.mxu0 0.0
    %2993 = vmatprep.subr.mxu0 0.0
    %2994 = vmatpush2.msra.mxu0 0.0
    %2995 = vmatprep.subr.mxu0 0.0
    %2996 = vmatpush2.msra.mxu0 0.0
    %2997 = vmatprep.subr.mxu0 0.0
    %2998 = vmatpush2.msra.mxu0 0.0
    %2999 = vmatprep.subr.mxu0 0.0
    %3000 = vmatpush2.msra.mxu0 0.0
    %3001 = vmatprep.subr.mxu0 0.0
    %3002 = vmatpush2.msra.mxu0 0.0
    %3003 = vmatprep.subr.mxu0 0.0
    %3004 = vmatpush2.msra.mxu0 0.0
    %3005 = vmatprep.subr.mxu0 0.0
    %3006 = vmatpush2.msra.mxu0 0.0
    %3007 = vmatprep.subr.mxu0 0.0
    %3008 = vmatpush2.msra.mxu0 0.0
    %3009 = vmatprep.subr.mxu0 0.0
    %3010 = vmatpush2.msra.mxu0 0.0
    %3011 = vmatprep.mubr.f32.mxu0 0.0
    %3012 = vmatmul.mubr.f32.gmra.mxu0 %v2945
    %v3013 = vpop.f32.mrf.mxu0
    %v3014 = vadd.f32 %v2942, %v3013
    %v3015 = vpop.f32.mrf.mxu0
    %3016 = vdwg.mxu0
    %3017 = vst [vmem:[%s28] sm:$0xff] %v3014
    // Predicated region
    $region186: #{mhead_attn_forward.1} parent=1 // pred_check
      _
    $region187: #{mhead_attn_forward.1} parent=1 // pred_check_branch
      %3019 = sbr.rel (0) target = $region189
    $region188: #{mhead_attn_forward.1} parent=1 // pred_region
      _
    $region189: #{mhead_attn_forward.1} parent=1 // pred_fallthru
      _
    // Predicated region
    $region190: #{mhead_attn_forward.1} parent=1 // pred_check
      _
    $region191: #{mhead_attn_forward.1} parent=1 // pred_check_branch
      %3021 = sbr.rel (0) target = $region193
    $region192: #{mhead_attn_forward.1} parent=1 // pred_region
      _
    $region193: #{mhead_attn_forward.1} parent=1 // pred_fallthru
      _
    %3022 = vsyncpa [#allocation3], 1
    %3023 = vsyncpa [#allocation5], 1
    %3024 = vsyncpa [#allocation8], 1
    %3025 = vsyncpa [#allocation11], 1
    %3026 = vsyncpa [#allocation14], 1
    %3027 = vsyncpa [#allocation17], 1
    %3028 = vsyncpa [#allocation20], 1
    %3029 = vsyncpa [#allocation23], 1
    %3030 = vsyncpa [#allocation26], 1
    %3031 = vsyncpa [#allocation29], 1

</llo_original>
